<compile_context>
chip_gen: v6e
topology: v6e:2x2x1
jax: 0.10.0
libtpu: 0.0.40
codegen_flags: <defaults>
</compile_context>

<pallas_src>
import functools

import jax
import jax.numpy as jnp
from jax import lax
from jax.experimental import pallas as pl
from jax.experimental.pallas import tpu as pltpu

NEG_SLOPE = 0.01   # nn.LeakyReLU() default negative_slope
_HALO_BLK = 8      # row-block size of the halo view of the input
_LANE = 128        # TPU lane width; Cout tile granularity


def _round_up(x, m):
  return (x + m - 1) // m * m


def _basic_conv_kernel(xa_ref, xb_ref, w_ref, scale_ref, bias_ref, o_ref,
                       rows_ref, acc_ref, *, TH, Wo, KH, KW, Cin, CO,
                       apply_relu):
  """One (batch, row-tile, Cout-tile) grid step.

  xa_ref:    (1, TH, Wp, Cin)         body rows of the padded input (bf16)
  xb_ref:    (1, _HALO_BLK, Wp, Cin)  rows immediately below (halo, bf16)
  w_ref:     (KH, KW, Cin, CO)        conv weights (bf16)
  scale_ref: (1, CO) f32              folded BN scale = gamma / sqrt(var + eps)
  bias_ref:  (1, CO) f32              folded BN bias  = beta - mean * scale
  o_ref:     (1, TH, Wo, CO) f32
  rows_ref:  (TH + _HALO_BLK, Wp, Cin)  VMEM staging of the tile's input rows
  acc_ref:   (TH * Wo, CO) f32          VMEM accumulator
  """
  # Stage input rows once per (n, h) tile; reused across Cout tiles.  Safe
  # because the Cout grid axis is innermost and marked "arbitrary" (never
  # split across cores / reordered).
  @pl.when(pl.program_id(2) == 0)
  def _stage():
    rows_ref[:TH] = xa_ref[0]
    rows_ref[TH:TH + _HALO_BLK] = xb_ref[0]

  acc_ref[...] = jnp.zeros_like(acc_ref)
  for i in range(KH):            # small static loops -> fully unrolled taps
    for j in range(KW):
      patch = rows_ref[i:i + TH, j:j + Wo, :]          # (TH, Wo, Cin) bf16
      patch = patch.reshape(TH * Wo, Cin)
      acc_ref[...] += jnp.dot(patch, w_ref[i, j],
                              preferred_element_type=jnp.float32)

  y = acc_ref[...] * scale_ref[...] + bias_ref[...]    # BN (eval mode), f32
  if apply_relu:
    y = jnp.where(y > 0, y, NEG_SLOPE * y)             # LeakyReLU, f32
  o_ref[...] = y.reshape(1, TH, Wo, CO).astype(o_ref.dtype)


def basic_conv(x_nchw, weight_oihw, gamma, beta, running_mean, running_var,
               *, stride=1, padding=1, eps=1e-5, use_bn=True, relu=True,
               row_tile=16, co_tile=_LANE, matmul_dtype=jnp.bfloat16):
  """BasicConv forward. x_nchw: (N, Cin, H, W) f32 -> (N, Cout, Ho, Wo) f32."""
  assert stride == 1, "this kernel implements stride=1"
  N, Cin, H, W = x_nchw.shape
  Cout, Cin_w, KH, KW = weight_oihw.shape
  assert Cin == Cin_w
  assert KH - 1 <= _HALO_BLK, "kernel height too large for the halo block"

  Ho = H + 2 * padding - KH + 1
  Wo = W + 2 * padding - KW + 1
  Wp = Wo + KW - 1                                  # padded input width

  # --- tiling ----------------------------------------------------------------
  TH = min(_round_up(row_tile, _HALO_BLK), _round_up(Ho, _HALO_BLK))
  Ho_pad = _round_up(Ho, TH)                        # output rows, tile-padded
  nH = Ho_pad // TH
  CO = co_tile
  Co_pad = _round_up(Cout, CO)
  nCo = Co_pad // CO
  Hx = Ho_pad + _HALO_BLK                           # rows carried in padded x
  halo_step = TH // _HALO_BLK

  # --- boundary glue: layout, dtype, BN folding --------------------------------
  x = jnp.transpose(x_nchw, (0, 2, 3, 1)).astype(matmul_dtype)       # NHWC
  x = jnp.pad(x, ((0, 0),
                  (padding, Hx - H - padding),
                  (padding, padding),
                  (0, 0)))                                           # (N,Hx,Wp,Cin)
  w = jnp.transpose(weight_oihw, (2, 3, 1, 0)).astype(matmul_dtype)  # HWIO
  w = jnp.pad(w, ((0, 0), (0, 0), (0, 0), (0, Co_pad - Cout)))

  if use_bn:
    scale = (gamma / jnp.sqrt(running_var + eps)).astype(jnp.float32)
    bias = (beta - running_mean * scale).astype(jnp.float32)
  else:
    scale = jnp.ones((Cout,), jnp.float32)
    bias = jnp.zeros((Cout,), jnp.float32)
  scale = jnp.pad(scale, (0, Co_pad - Cout)).reshape(1, Co_pad)
  bias = jnp.pad(bias, (0, Co_pad - Cout)).reshape(1, Co_pad)

  kernel = functools.partial(_basic_conv_kernel, TH=TH, Wo=Wo, KH=KH, KW=KW,
                             Cin=Cin, CO=CO, apply_relu=relu)

  flops = 2 * N * Ho_pad * Wo * KH * KW * Cin * Co_pad
  bytes_accessed = (x.size * x.dtype.itemsize + w.size * w.dtype.itemsize
                    + N * Ho_pad * Wo * Co_pad * 4)

  out_nhwc = pl.pallas_call(
      kernel,
      out_shape=jax.ShapeDtypeStruct((N, Ho_pad, Wo, Co_pad), jnp.float32),
      grid_spec=pltpu.PrefetchScalarGridSpec(
          num_scalar_prefetch=0,
          grid=(N, nH, nCo),
          in_specs=[
              # body rows of the input tile
              pl.BlockSpec((1, TH, Wp, Cin), lambda n, h, c: (n, h, 0, 0)),
              # halo rows just below the tile (second view of the same array)
              pl.BlockSpec((1, _HALO_BLK, Wp, Cin),
                           lambda n, h, c: (n, (h + 1) * halo_step, 0, 0)),
              pl.BlockSpec((KH, KW, Cin, CO), lambda n, h, c: (0, 0, 0, c)),
              pl.BlockSpec((1, CO), lambda n, h, c: (0, c)),
              pl.BlockSpec((1, CO), lambda n, h, c: (0, c)),
          ],
          out_specs=pl.BlockSpec((1, TH, Wo, CO),
                                 lambda n, h, c: (n, h, 0, c)),
          scratch_shapes=[
              pltpu.VMEM((TH + _HALO_BLK, Wp, Cin), matmul_dtype),
              pltpu.VMEM((TH * Wo, CO), jnp.float32),
          ]),
      compiler_params=pltpu.CompilerParams(
          dimension_semantics=("parallel", "parallel", "arbitrary"),
          vmem_limit_bytes=32 * 1024 * 1024),
      cost_estimate=pl.CostEstimate(flops=flops, transcendentals=0,
                                    bytes_accessed=bytes_accessed),
  )(x, x, w, scale, bias)

  out = out_nhwc[:, :Ho, :, :Cout]
  return jnp.transpose(out, (0, 3, 1, 2))                            # NCHW


def _reference(x_nchw, weight_oihw, gamma, beta, mean, var, eps=1e-5,
               padding=1, use_bn=True, relu=True):
  y = lax.conv_general_dilated(
      x_nchw, weight_oihw, window_strides=(1, 1),
      padding=((padding, padding), (padding, padding)),
      dimension_numbers=("NCHW", "OIHW", "NCHW"))
  if use_bn:
    scale = (gamma / jnp.sqrt(var + eps)).reshape(1, -1, 1, 1)
    bias = (beta - mean * gamma / jnp.sqrt(var + eps)).reshape(1, -1, 1, 1)
    y = y * scale + bias
  if relu:
    y = jnp.where(y > 0, y, NEG_SLOPE * y)
  return y


if __name__ == "__main__":
  key = jax.random.PRNGKey(0)
  k_x, k_w, k_g, k_b, k_m, k_v = jax.random.split(key, 6)

  N, Cin, Cout, H, W, K = 2, 4, 8, 16, 16, 3

  x = jax.random.normal(k_x, (N, Cin, H, W), jnp.float32)
  # Conv2d weight (Cout, Cin, KH, KW), bias=False in BasicConv
  weight = jax.random.normal(k_w, (Cout, Cin, K, K), jnp.float32) * 0.1
  # BatchNorm2d params / running stats (deterministic synthetic values)
  gamma = 1.0 + 0.1 * jax.random.normal(k_g, (Cout,), jnp.float32)
  beta = 0.1 * jax.random.normal(k_b, (Cout,), jnp.float32)
  running_mean = 0.1 * jax.random.normal(k_m, (Cout,), jnp.float32)
  running_var = jnp.abs(jax.random.normal(k_v, (Cout,), jnp.float32)) + 0.5

  out = basic_conv(x, weight, gamma, beta, running_mean, running_var,
                   stride=1, padding=1, row_tile=8)   # row_tile=8 -> 2 H tiles
  out = jax.block_until_ready(out)

  ref = _reference(x, weight, gamma, beta, running_mean, running_var)
  assert out.shape == (N, Cout, H, W), out.shape
  # bf16 matmul inputs (f32 accumulation) -> slightly looser tolerance vs f32 ref
  max_err = float(jnp.max(jnp.abs(out - ref)))
  assert jnp.allclose(out, ref, atol=2e-2, rtol=2e-2), max_err

  print("KERNEL_OK")
</pallas_src>

<mosaic_0001>
module attributes {stable_mosaic.version = 11 : i64} {
  func.func @_basic_conv_kernel(%arg0: i32, %arg1: i32, %arg2: i32, %arg3: memref<1x8x18x4xbf16, #tpu.memory_space<vmem>>, %arg4: memref<1x8x18x4xbf16, #tpu.memory_space<vmem>>, %arg5: memref<3x3x4x128xbf16, #tpu.memory_space<vmem>>, %arg6: memref<1x128xf32, #tpu.memory_space<vmem>>, %arg7: memref<1x128xf32, #tpu.memory_space<vmem>>, %arg8: memref<1x8x16x128xf32, #tpu.memory_space<vmem>>, %arg9: memref<16x18x4xbf16, #tpu.memory_space<vmem>>, %arg10: memref<128x128xf32, #tpu.memory_space<vmem>>) attributes {dimension_semantics = [#tpu.dimension_semantics<parallel>, #tpu.dimension_semantics<parallel>, #tpu.dimension_semantics<arbitrary>], iteration_bounds = array<i64: 2, 2, 1>, scalar_prefetch = 0 : i64, scratch_operands = 2 : i64, tpu.core_type = #tpu.core_type<tc>, window_params = [{transform_indices = @transform_0, window_bounds = array<i64: 1, 8, 18, 4>}, {transform_indices = @transform_1, window_bounds = array<i64: 1, 8, 18, 4>}, {transform_indices = @transform_2, window_bounds = array<i64: 3, 3, 4, 128>}, {transform_indices = @transform_3, window_bounds = array<i64: 1, 128>}, {transform_indices = @transform_4, window_bounds = array<i64: 1, 128>}, {transform_indices = @transform_5, window_bounds = array<i64: 1, 8, 16, 128>}]} {
    %c0_i32 = arith.constant 0 : i32
    %0 = arith.cmpi eq, %arg2, %c0_i32 : i32
    %1 = arith.extui %0 : i1 to i32
    %c0_i32_0 = arith.constant 0 : i32
    %2 = arith.cmpi ne, %1, %c0_i32_0 : i32
    scf.if %2 {
      %c0_120 = arith.constant 0 : index
      %c0_121 = arith.constant 0 : index
      %c0_122 = arith.constant 0 : index
      %c0_123 = arith.constant 0 : index
      %91 = vector.load %arg3[%c0_120, %c0_121, %c0_122, %c0_123] : memref<1x8x18x4xbf16, #tpu.memory_space<vmem>>, vector<1x8x18x4xbf16>
      %92 = vector.shape_cast %91 : vector<1x8x18x4xbf16> to vector<8x18x4xbf16>
      %c0_124 = arith.constant 0 : index
      %c0_125 = arith.constant 0 : index
      %c0_126 = arith.constant 0 : index
      %93 = vector.load %arg9[%c0_124, %c0_125, %c0_126] : memref<16x18x4xbf16, #tpu.memory_space<vmem>>, vector<8x18x4xbf16>
      tpu.vector_store %arg9[%c0_124, %c0_125, %c0_126], %92 {strides = array<i32>} : memref<16x18x4xbf16, #tpu.memory_space<vmem>>, vector<8x18x4xbf16>,
      %c0_127 = arith.constant 0 : index
      %c0_128 = arith.constant 0 : index
      %c0_129 = arith.constant 0 : index
      %c0_130 = arith.constant 0 : index
      %94 = vector.load %arg4[%c0_127, %c0_128, %c0_129, %c0_130] : memref<1x8x18x4xbf16, #tpu.memory_space<vmem>>, vector<1x8x18x4xbf16>
      %95 = vector.shape_cast %94 : vector<1x8x18x4xbf16> to vector<8x18x4xbf16>
      %c8 = arith.constant 8 : index
      %c0_131 = arith.constant 0 : index
      %c0_132 = arith.constant 0 : index
      %96 = vector.load %arg9[%c8, %c0_131, %c0_132] : memref<16x18x4xbf16, #tpu.memory_space<vmem>>, vector<8x18x4xbf16>
      tpu.vector_store %arg9[%c8, %c0_131, %c0_132], %95 {strides = array<i32>} : memref<16x18x4xbf16, #tpu.memory_space<vmem>>, vector<8x18x4xbf16>,
    } else {
    }
    %cst = arith.constant 0.000000e+00 : f32
    %3 = vector.broadcast %cst : f32 to vector<128x128xf32>
    %c0 = arith.constant 0 : index
    %c0_1 = arith.constant 0 : index
    %4 = vector.load %arg10[%c0, %c0_1] : memref<128x128xf32, #tpu.memory_space<vmem>>, vector<128x128xf32>
    tpu.vector_store %arg10[%c0, %c0_1], %3 {strides = array<i32>} : memref<128x128xf32, #tpu.memory_space<vmem>>, vector<128x128xf32>,
    %c0_2 = arith.constant 0 : index
    %c0_3 = arith.constant 0 : index
    %c0_4 = arith.constant 0 : index
    %5 = vector.load %arg9[%c0_2, %c0_3, %c0_4] : memref<16x18x4xbf16, #tpu.memory_space<vmem>>, vector<8x16x4xbf16>
    %6 = vector.shape_cast %5 : vector<8x16x4xbf16> to vector<128x4xbf16>
    %c0_5 = arith.constant 0 : index
    %c0_6 = arith.constant 0 : index
    %7 = vector.load %arg10[%c0_5, %c0_6] : memref<128x128xf32, #tpu.memory_space<vmem>>, vector<128x128xf32>
    %c0_7 = arith.constant 0 : index
    %c0_8 = arith.constant 0 : index
    %c0_9 = arith.constant 0 : index
    %c0_10 = arith.constant 0 : index
    %8 = vector.load %arg5[%c0_7, %c0_8, %c0_9, %c0_10] : memref<3x3x4x128xbf16, #tpu.memory_space<vmem>>, vector<1x1x4x128xbf16>
    %9 = vector.shape_cast %8 : vector<1x1x4x128xbf16> to vector<4x128xbf16>
    %cst_11 = arith.constant dense<0.000000e+00> : vector<128x128xf32>
    %10 = tpu.matmul %6, %9, %cst_11 {dimension_numbers = #tpu.dot_dimension_numbers<[1], [0], [0], [1], [0, 0, 1, 1], [], []>} : vector<128x4xbf16>, vector<4x128xbf16>, vector<128x128xf32> -> vector<128x128xf32>
    %11 = arith.addf %7, %10 : vector<128x128xf32>
    %c0_12 = arith.constant 0 : index
    %c0_13 = arith.constant 0 : index
    %12 = vector.load %arg10[%c0_12, %c0_13] : memref<128x128xf32, #tpu.memory_space<vmem>>, vector<128x128xf32>
    tpu.vector_store %arg10[%c0_12, %c0_13], %11 {strides = array<i32>} : memref<128x128xf32, #tpu.memory_space<vmem>>, vector<128x128xf32>,
    %c0_14 = arith.constant 0 : index
    %c1 = arith.constant 1 : index
    %c0_15 = arith.constant 0 : index
    %13 = vector.load %arg9[%c0_14, %c1, %c0_15] : memref<16x18x4xbf16, #tpu.memory_space<vmem>>, vector<8x16x4xbf16>
    %14 = vector.shape_cast %13 : vector<8x16x4xbf16> to vector<128x4xbf16>
    %c0_16 = arith.constant 0 : index
    %c0_17 = arith.constant 0 : index
    %15 = vector.load %arg10[%c0_16, %c0_17] : memref<128x128xf32, #tpu.memory_space<vmem>>, vector<128x128xf32>
    %c0_18 = arith.constant 0 : index
    %c1_19 = arith.constant 1 : index
    %c0_20 = arith.constant 0 : index
    %c0_21 = arith.constant 0 : index
    %16 = vector.load %arg5[%c0_18, %c1_19, %c0_20, %c0_21] : memref<3x3x4x128xbf16, #tpu.memory_space<vmem>>, vector<1x1x4x128xbf16>
    %17 = vector.shape_cast %16 : vector<1x1x4x128xbf16> to vector<4x128xbf16>
    %cst_22 = arith.constant dense<0.000000e+00> : vector<128x128xf32>
    %18 = tpu.matmul %14, %17, %cst_22 {dimension_numbers = #tpu.dot_dimension_numbers<[1], [0], [0], [1], [0, 0, 1, 1], [], []>} : vector<128x4xbf16>, vector<4x128xbf16>, vector<128x128xf32> -> vector<128x128xf32>
    %19 = arith.addf %15, %18 : vector<128x128xf32>
    %c0_23 = arith.constant 0 : index
    %c0_24 = arith.constant 0 : index
    %20 = vector.load %arg10[%c0_23, %c0_24] : memref<128x128xf32, #tpu.memory_space<vmem>>, vector<128x128xf32>
    tpu.vector_store %arg10[%c0_23, %c0_24], %19 {strides = array<i32>} : memref<128x128xf32, #tpu.memory_space<vmem>>, vector<128x128xf32>,
    %c0_25 = arith.constant 0 : index
    %c2 = arith.constant 2 : index
    %c0_26 = arith.constant 0 : index
    %21 = vector.load %arg9[%c0_25, %c2, %c0_26] : memref<16x18x4xbf16, #tpu.memory_space<vmem>>, vector<8x16x4xbf16>
    %22 = vector.shape_cast %21 : vector<8x16x4xbf16> to vector<128x4xbf16>
    %c0_27 = arith.constant 0 : index
    %c0_28 = arith.constant 0 : index
    %23 = vector.load %arg10[%c0_27, %c0_28] : memref<128x128xf32, #tpu.memory_space<vmem>>, vector<128x128xf32>
    %c0_29 = arith.constant 0 : index
    %c2_30 = arith.constant 2 : index
    %c0_31 = arith.constant 0 : index
    %c0_32 = arith.constant 0 : index
    %24 = vector.load %arg5[%c0_29, %c2_30, %c0_31, %c0_32] : memref<3x3x4x128xbf16, #tpu.memory_space<vmem>>, vector<1x1x4x128xbf16>
    %25 = vector.shape_cast %24 : vector<1x1x4x128xbf16> to vector<4x128xbf16>
    %cst_33 = arith.constant dense<0.000000e+00> : vector<128x128xf32>
    %26 = tpu.matmul %22, %25, %cst_33 {dimension_numbers = #tpu.dot_dimension_numbers<[1], [0], [0], [1], [0, 0, 1, 1], [], []>} : vector<128x4xbf16>, vector<4x128xbf16>, vector<128x128xf32> -> vector<128x128xf32>
    %27 = arith.addf %23, %26 : vector<128x128xf32>
    %c0_34 = arith.constant 0 : index
    %c0_35 = arith.constant 0 : index
    %28 = vector.load %arg10[%c0_34, %c0_35] : memref<128x128xf32, #tpu.memory_space<vmem>>, vector<128x128xf32>
    tpu.vector_store %arg10[%c0_34, %c0_35], %27 {strides = array<i32>} : memref<128x128xf32, #tpu.memory_space<vmem>>, vector<128x128xf32>,
    %c1_36 = arith.constant 1 : index
    %c0_37 = arith.constant 0 : index
    %c0_38 = arith.constant 0 : index
    %29 = vector.load %arg9[%c1_36, %c0_37, %c0_38] : memref<16x18x4xbf16, #tpu.memory_space<vmem>>, vector<8x16x4xbf16>
    %30 = vector.shape_cast %29 : vector<8x16x4xbf16> to vector<128x4xbf16>
    %c0_39 = arith.constant 0 : index
    %c0_40 = arith.constant 0 : index
    %31 = vector.load %arg10[%c0_39, %c0_40] : memref<128x128xf32, #tpu.memory_space<vmem>>, vector<128x128xf32>
    %c1_41 = arith.constant 1 : index
    %c0_42 = arith.constant 0 : index
    %c0_43 = arith.constant 0 : index
    %c0_44 = arith.constant 0 : index
    %32 = vector.load %arg5[%c1_41, %c0_42, %c0_43, %c0_44] : memref<3x3x4x128xbf16, #tpu.memory_space<vmem>>, vector<1x1x4x128xbf16>
    %33 = vector.shape_cast %32 : vector<1x1x4x128xbf16> to vector<4x128xbf16>
    %cst_45 = arith.constant dense<0.000000e+00> : vector<128x128xf32>
    %34 = tpu.matmul %30, %33, %cst_45 {dimension_numbers = #tpu.dot_dimension_numbers<[1], [0], [0], [1], [0, 0, 1, 1], [], []>} : vector<128x4xbf16>, vector<4x128xbf16>, vector<128x128xf32> -> vector<128x128xf32>
    %35 = arith.addf %31, %34 : vector<128x128xf32>
    %c0_46 = arith.constant 0 : index
    %c0_47 = arith.constant 0 : index
    %36 = vector.load %arg10[%c0_46, %c0_47] : memref<128x128xf32, #tpu.memory_space<vmem>>, vector<128x128xf32>
    tpu.vector_store %arg10[%c0_46, %c0_47], %35 {strides = array<i32>} : memref<128x128xf32, #tpu.memory_space<vmem>>, vector<128x128xf32>,
    %c1_48 = arith.constant 1 : index
    %c1_49 = arith.constant 1 : index
    %c0_50 = arith.constant 0 : index
    %37 = vector.load %arg9[%c1_48, %c1_49, %c0_50] : memref<16x18x4xbf16, #tpu.memory_space<vmem>>, vector<8x16x4xbf16>
    %38 = vector.shape_cast %37 : vector<8x16x4xbf16> to vector<128x4xbf16>
    %c0_51 = arith.constant 0 : index
    %c0_52 = arith.constant 0 : index
    %39 = vector.load %arg10[%c0_51, %c0_52] : memref<128x128xf32, #tpu.memory_space<vmem>>, vector<128x128xf32>
    %c1_53 = arith.constant 1 : index
    %c1_54 = arith.constant 1 : index
    %c0_55 = arith.constant 0 : index
    %c0_56 = arith.constant 0 : index
    %40 = vector.load %arg5[%c1_53, %c1_54, %c0_55, %c0_56] : memref<3x3x4x128xbf16, #tpu.memory_space<vmem>>, vector<1x1x4x128xbf16>
    %41 = vector.shape_cast %40 : vector<1x1x4x128xbf16> to vector<4x128xbf16>
    %cst_57 = arith.constant dense<0.000000e+00> : vector<128x128xf32>
    %42 = tpu.matmul %38, %41, %cst_57 {dimension_numbers = #tpu.dot_dimension_numbers<[1], [0], [0], [1], [0, 0, 1, 1], [], []>} : vector<128x4xbf16>, vector<4x128xbf16>, vector<128x128xf32> -> vector<128x128xf32>
    %43 = arith.addf %39, %42 : vector<128x128xf32>
    %c0_58 = arith.constant 0 : index
    %c0_59 = arith.constant 0 : index
    %44 = vector.load %arg10[%c0_58, %c0_59] : memref<128x128xf32, #tpu.memory_space<vmem>>, vector<128x128xf32>
    tpu.vector_store %arg10[%c0_58, %c0_59], %43 {strides = array<i32>} : memref<128x128xf32, #tpu.memory_space<vmem>>, vector<128x128xf32>,
    %c1_60 = arith.constant 1 : index
    %c2_61 = arith.constant 2 : index
    %c0_62 = arith.constant 0 : index
    %45 = vector.load %arg9[%c1_60, %c2_61, %c0_62] : memref<16x18x4xbf16, #tpu.memory_space<vmem>>, vector<8x16x4xbf16>
    %46 = vector.shape_cast %45 : vector<8x16x4xbf16> to vector<128x4xbf16>
    %c0_63 = arith.constant 0 : index
    %c0_64 = arith.constant 0 : index
    %47 = vector.load %arg10[%c0_63, %c0_64] : memref<128x128xf32, #tpu.memory_space<vmem>>, vector<128x128xf32>
    %c1_65 = arith.constant 1 : index
    %c2_66 = arith.constant 2 : index
    %c0_67 = arith.constant 0 : index
    %c0_68 = arith.constant 0 : index
    %48 = vector.load %arg5[%c1_65, %c2_66, %c0_67, %c0_68] : memref<3x3x4x128xbf16, #tpu.memory_space<vmem>>, vector<1x1x4x128xbf16>
    %49 = vector.shape_cast %48 : vector<1x1x4x128xbf16> to vector<4x128xbf16>
    %cst_69 = arith.constant dense<0.000000e+00> : vector<128x128xf32>
    %50 = tpu.matmul %46, %49, %cst_69 {dimension_numbers = #tpu.dot_dimension_numbers<[1], [0], [0], [1], [0, 0, 1, 1], [], []>} : vector<128x4xbf16>, vector<4x128xbf16>, vector<128x128xf32> -> vector<128x128xf32>
    %51 = arith.addf %47, %50 : vector<128x128xf32>
    %c0_70 = arith.constant 0 : index
    %c0_71 = arith.constant 0 : index
    %52 = vector.load %arg10[%c0_70, %c0_71] : memref<128x128xf32, #tpu.memory_space<vmem>>, vector<128x128xf32>
    tpu.vector_store %arg10[%c0_70, %c0_71], %51 {strides = array<i32>} : memref<128x128xf32, #tpu.memory_space<vmem>>, vector<128x128xf32>,
    %c2_72 = arith.constant 2 : index
    %c0_73 = arith.constant 0 : index
    %c0_74 = arith.constant 0 : index
    %53 = vector.load %arg9[%c2_72, %c0_73, %c0_74] : memref<16x18x4xbf16, #tpu.memory_space<vmem>>, vector<8x16x4xbf16>
    %54 = vector.shape_cast %53 : vector<8x16x4xbf16> to vector<128x4xbf16>
    %c0_75 = arith.constant 0 : index
    %c0_76 = arith.constant 0 : index
    %55 = vector.load %arg10[%c0_75, %c0_76] : memref<128x128xf32, #tpu.memory_space<vmem>>, vector<128x128xf32>
    %c2_77 = arith.constant 2 : index
    %c0_78 = arith.constant 0 : index
    %c0_79 = arith.constant 0 : index
    %c0_80 = arith.constant 0 : index
    %56 = vector.load %arg5[%c2_77, %c0_78, %c0_79, %c0_80] : memref<3x3x4x128xbf16, #tpu.memory_space<vmem>>, vector<1x1x4x128xbf16>
    %57 = vector.shape_cast %56 : vector<1x1x4x128xbf16> to vector<4x128xbf16>
    %cst_81 = arith.constant dense<0.000000e+00> : vector<128x128xf32>
    %58 = tpu.matmul %54, %57, %cst_81 {dimension_numbers = #tpu.dot_dimension_numbers<[1], [0], [0], [1], [0, 0, 1, 1], [], []>} : vector<128x4xbf16>, vector<4x128xbf16>, vector<128x128xf32> -> vector<128x128xf32>
    %59 = arith.addf %55, %58 : vector<128x128xf32>
    %c0_82 = arith.constant 0 : index
    %c0_83 = arith.constant 0 : index
    %60 = vector.load %arg10[%c0_82, %c0_83] : memref<128x128xf32, #tpu.memory_space<vmem>>, vector<128x128xf32>
    tpu.vector_store %arg10[%c0_82, %c0_83], %59 {strides = array<i32>} : memref<128x128xf32, #tpu.memory_space<vmem>>, vector<128x128xf32>,
    %c2_84 = arith.constant 2 : index
    %c1_85 = arith.constant 1 : index
    %c0_86 = arith.constant 0 : index
    %61 = vector.load %arg9[%c2_84, %c1_85, %c0_86] : memref<16x18x4xbf16, #tpu.memory_space<vmem>>, vector<8x16x4xbf16>
    %62 = vector.shape_cast %61 : vector<8x16x4xbf16> to vector<128x4xbf16>
    %c0_87 = arith.constant 0 : index
    %c0_88 = arith.constant 0 : index
    %63 = vector.load %arg10[%c0_87, %c0_88] : memref<128x128xf32, #tpu.memory_space<vmem>>, vector<128x128xf32>
    %c2_89 = arith.constant 2 : index
    %c1_90 = arith.constant 1 : index
    %c0_91 = arith.constant 0 : index
    %c0_92 = arith.constant 0 : index
    %64 = vector.load %arg5[%c2_89, %c1_90, %c0_91, %c0_92] : memref<3x3x4x128xbf16, #tpu.memory_space<vmem>>, vector<1x1x4x128xbf16>
    %65 = vector.shape_cast %64 : vector<1x1x4x128xbf16> to vector<4x128xbf16>
    %cst_93 = arith.constant dense<0.000000e+00> : vector<128x128xf32>
    %66 = tpu.matmul %62, %65, %cst_93 {dimension_numbers = #tpu.dot_dimension_numbers<[1], [0], [0], [1], [0, 0, 1, 1], [], []>} : vector<128x4xbf16>, vector<4x128xbf16>, vector<128x128xf32> -> vector<128x128xf32>
    %67 = arith.addf %63, %66 : vector<128x128xf32>
    %c0_94 = arith.constant 0 : index
    %c0_95 = arith.constant 0 : index
    %68 = vector.load %arg10[%c0_94, %c0_95] : memref<128x128xf32, #tpu.memory_space<vmem>>, vector<128x128xf32>
    tpu.vector_store %arg10[%c0_94, %c0_95], %67 {strides = array<i32>} : memref<128x128xf32, #tpu.memory_space<vmem>>, vector<128x128xf32>,
    %c2_96 = arith.constant 2 : index
    %c2_97 = arith.constant 2 : index
    %c0_98 = arith.constant 0 : index
    %69 = vector.load %arg9[%c2_96, %c2_97, %c0_98] : memref<16x18x4xbf16, #tpu.memory_space<vmem>>, vector<8x16x4xbf16>
    %70 = vector.shape_cast %69 : vector<8x16x4xbf16> to vector<128x4xbf16>
    %c0_99 = arith.constant 0 : index
    %c0_100 = arith.constant 0 : index
    %71 = vector.load %arg10[%c0_99, %c0_100] : memref<128x128xf32, #tpu.memory_space<vmem>>, vector<128x128xf32>
    %c2_101 = arith.constant 2 : index
    %c2_102 = arith.constant 2 : index
    %c0_103 = arith.constant 0 : index
    %c0_104 = arith.constant 0 : index
    %72 = vector.load %arg5[%c2_101, %c2_102, %c0_103, %c0_104] : memref<3x3x4x128xbf16, #tpu.memory_space<vmem>>, vector<1x1x4x128xbf16>
    %73 = vector.shape_cast %72 : vector<1x1x4x128xbf16> to vector<4x128xbf16>
    %cst_105 = arith.constant dense<0.000000e+00> : vector<128x128xf32>
    %74 = tpu.matmul %70, %73, %cst_105 {dimension_numbers = #tpu.dot_dimension_numbers<[1], [0], [0], [1], [0, 0, 1, 1], [], []>} : vector<128x4xbf16>, vector<4x128xbf16>, vector<128x128xf32> -> vector<128x128xf32>
    %75 = arith.addf %71, %74 : vector<128x128xf32>
    %c0_106 = arith.constant 0 : index
    %c0_107 = arith.constant 0 : index
    %76 = vector.load %arg10[%c0_106, %c0_107] : memref<128x128xf32, #tpu.memory_space<vmem>>, vector<128x128xf32>
    tpu.vector_store %arg10[%c0_106, %c0_107], %75 {strides = array<i32>} : memref<128x128xf32, #tpu.memory_space<vmem>>, vector<128x128xf32>,
    %c0_108 = arith.constant 0 : index
    %c0_109 = arith.constant 0 : index
    %77 = vector.load %arg10[%c0_108, %c0_109] : memref<128x128xf32, #tpu.memory_space<vmem>>, vector<128x128xf32>
    %c0_110 = arith.constant 0 : index
    %c0_111 = arith.constant 0 : index
    %78 = vector.load %arg6[%c0_110, %c0_111] : memref<1x128xf32, #tpu.memory_space<vmem>>, vector<1x128xf32>
    %79 = vector.broadcast %78 : vector<1x128xf32> to vector<128x128xf32>
    %80 = arith.mulf %77, %79 : vector<128x128xf32>
    %c0_112 = arith.constant 0 : index
    %c0_113 = arith.constant 0 : index
    %81 = vector.load %arg7[%c0_112, %c0_113] : memref<1x128xf32, #tpu.memory_space<vmem>>, vector<1x128xf32>
    %82 = vector.broadcast %81 : vector<1x128xf32> to vector<128x128xf32>
    %83 = arith.addf %80, %82 : vector<128x128xf32>
    %cst_114 = arith.constant 0.000000e+00 : f32
    %84 = vector.broadcast %cst_114 : f32 to vector<128x128xf32>
    %85 = arith.cmpf ogt, %83, %84 : vector<128x128xf32>
    %cst_115 = arith.constant 0.00999999977 : f32
    %86 = vector.broadcast %cst_115 : f32 to vector<128x128xf32>
    %87 = arith.mulf %86, %83 : vector<128x128xf32>
    %88 = arith.select %85, %83, %87 : vector<128x128xi1>, vector<128x128xf32>
    %89 = vector.shape_cast %88 : vector<128x128xf32> to vector<1x8x16x128xf32>
    %c0_116 = arith.constant 0 : index
    %c0_117 = arith.constant 0 : index
    %c0_118 = arith.constant 0 : index
    %c0_119 = arith.constant 0 : index
    %90 = vector.load %arg8[%c0_116, %c0_117, %c0_118, %c0_119] : memref<1x8x16x128xf32, #tpu.memory_space<vmem>>, vector<1x8x16x128xf32>
    tpu.vector_store %arg8[%c0_116, %c0_117, %c0_118, %c0_119], %89 {strides = array<i32>} : memref<1x8x16x128xf32, #tpu.memory_space<vmem>>, vector<1x8x16x128xf32>,
    return
  }
  func.func @transform_0(%arg0: i32, %arg1: i32, %arg2: i32) -> (i32, i32, i32, i32) {
    %c0_i32 = arith.constant 0 : i32
    %c0_i32_0 = arith.constant 0 : i32
    %c0_i32_1 = arith.constant 0 : i32
    return %arg0, %arg1, %c0_i32, %c0_i32_0 : i32, i32, i32, i32
  }
  func.func @transform_1(%arg0: i32, %arg1: i32, %arg2: i32) -> (i32, i32, i32, i32) {
    %c1_i32 = arith.constant 1 : i32
    %0 = arith.addi %arg1, %c1_i32 : i32
    %c1_i32_0 = arith.constant 1 : i32
    %1 = arith.muli %0, %c1_i32_0 : i32
    %c0_i32 = arith.constant 0 : i32
    %c0_i32_1 = arith.constant 0 : i32
    %c0_i32_2 = arith.constant 0 : i32
    return %arg0, %1, %c0_i32, %c0_i32_1 : i32, i32, i32, i32
  }
  func.func @transform_2(%arg0: i32, %arg1: i32, %arg2: i32) -> (i32, i32, i32, i32) {
    %c0_i32 = arith.constant 0 : i32
    %c0_i32_0 = arith.constant 0 : i32
    %c0_i32_1 = arith.constant 0 : i32
    %c0_i32_2 = arith.constant 0 : i32
    return %c0_i32, %c0_i32_0, %c0_i32_1, %arg2 : i32, i32, i32, i32
  }
  func.func @transform_3(%arg0: i32, %arg1: i32, %arg2: i32) -> (i32, i32) {
    %c0_i32 = arith.constant 0 : i32
    %c0_i32_0 = arith.constant 0 : i32
    return %c0_i32, %arg2 : i32, i32
  }
  func.func @transform_4(%arg0: i32, %arg1: i32, %arg2: i32) -> (i32, i32) {
    %c0_i32 = arith.constant 0 : i32
    %c0_i32_0 = arith.constant 0 : i32
    return %c0_i32, %arg2 : i32, i32
  }
  func.func @transform_5(%arg0: i32, %arg1: i32, %arg2: i32) -> (i32, i32, i32, i32) {
    %c0_i32 = arith.constant 0 : i32
    %c0_i32_0 = arith.constant 0 : i32
    return %arg0, %arg1, %c0_i32, %arg2 : i32, i32, i32, i32
  }
}

</mosaic_0001>

<llo_original>
// kernel: tpu_custom_call.1
$region0: #{tpu_custom_call.1}
  #allocation0 [shape = 'u32[]', space=smem, size = 0x4, offset = 0x4, fixed_abs, tag = 'smem constant byte address 0x4 - core index']
  #allocation1 [shape = 'u32[144,128]{1,0:T(1,128)}', space=vmem, size = 0x12000, scoped, tag = 'internal scratch']
  #allocation2 [shape = 'bf16[16,18,4]{2,1,0:T(8,128)(2,1)}', space=vmem, size = 0x18000, scoped, tag = 'scratch operand']
  #allocation3 [shape = 'f32[128,128]{1,0:T(8,128)}', space=vmem, size = 0x10000, scoped, tag = 'scratch operand']
  %s0 = inlined_call_operand.vmem [shape: bf16[2,24,18,4], index: 0, kind: input, shape index: {}]
  %s1 = inlined_call_operand.vmem [shape: bf16[2,24,18,4], index: 1, kind: input, shape index: {}]
  %s2 = inlined_call_operand.vmem [shape: bf16[3,3,4,128], index: 2, kind: input, shape index: {}]
  %s3 = inlined_call_operand.vmem [shape: f32[1,128], index: 3, kind: input, shape index: {}]
  %s4 = inlined_call_operand.vmem [shape: f32[1,128], index: 4, kind: input, shape index: {}]
  %s5 = inlined_call_operand.hbm [shape: f32[2,16,16,128], index: 5, kind: output, shape index: {}]
  %s6 = sld [smem:[#allocation0]]
  $region57: #{tpu_custom_call.1} parent=0
    _
  %s8 = ssub.s32 1, %s6
  %s9 = scalar_select 0, %s8, %s6
  $region1: #{tpu_custom_call.1} parent=0
    #allocation4 [shape = 'u8[131072]{0}', space=vmem, size = 0x20000, scoped, tag = 'output window, operand 0']
    #allocation5 [shape = 's32[2]{0}', space=sflag, size = 0x8, scoped, tag = 'scoped memory for tpu_custom_call.1']
    %10 = vsyncpa [#allocation5], 0
    %s11 = scalar_lea.sflag [#allocation5], 1
    %12 = vsyncpa %s11, 0
    loop: start=0, step=1, limit=6
    $region2: #{tpu_custom_call.1} parent=1 // loop_pre_header
      _
    $region3: #{tpu_custom_call.1} parent=1 // loop_header
      %s14 = sphi 0, %s18
      %p15 = scmp.ge.s32.totalorder %s14, 6
      %s21 = sphi 0, %s40
      %s22 = sphi 0, %s36
      %s23 = sphi 0, %s32
      %s24 = sphi 0, %s21
      %s25 = sphi 0, %s22
      %s26 = sphi 0, %s23
      %s27 = sphi 0, %s24
      %s28 = sphi 0, %s25
      %s29 = sphi 0, %s26
      %s45 = sphi 0, %s47
      %s48 = sphi 0, %s45
      %s49 = sphi 0, %s48
      %s65 = sphi 0, %s49
      %s75 = sphi 0, %s77
      %s78 = sphi 0, %s75
      %s79 = sphi 0, %s78
      %s95 = sphi 0, %s79
      %s101 = sphi 0, %s103
      %s104 = sphi 0, %s101
      %s105 = sphi 0, %s104
      %s121 = sphi 0, %s105
      %s127 = sphi 0, %s129
      %s130 = sphi 0, %s127
      %s131 = sphi 0, %s130
      %s147 = sphi 0, %s131
      %s153 = sphi 0, %s155
      %s156 = sphi 0, %s153
      %s157 = sphi 0, %s156
      %s173 = sphi 0, %s157
      %s183 = sphi 0, %s185
      %s186 = sphi 0, %s183
      %s187 = sphi 0, %s186
      %s203 = sphi 0, %s187
    $region4: #{tpu_custom_call.1} parent=1 // loop_header_branch
      %17 = sbr.rel (%p15) target = $region8
    $region5: #{tpu_custom_call.1} parent=1 // loop_body
      %s19 = ssub.s32 %s14, 1
      %s20 = ssub.s32 %s14, 2
      %s30 = sadd.s32 1, %s23
      %p31 = scmp.ge.s32.totalorder %s30, 1
      %s32 = scalar_select %p31, 0, %s30
      %s33 = sadd.s32 1, %s22
      %s34 = scalar_select %p31, %s33, %s22
      %p35 = scmp.ge.s32.totalorder %s34, 2
      %s36 = scalar_select %p35, 0, %s34
      %s37 = sadd.s32 1, %s21
      %s38 = scalar_select %p35, %s37, %s21
      %p39 = scmp.ge.s32.totalorder %s38, 2
      %s40 = scalar_select %p39, 0, %s38
      %s41 = ssub.s32 %s21, %s40
      %s42 = ssub.s32 %s22, %s36
      %s43 = sor.u32 %s41, %s42
      %p44 = scmp.eq.s32.totalorder %s43, 0
      %s46 = sadd.s32 %s45, 1
      %s47 = scalar_select %p44, %s45, %s46
      %p50 = pneg %p44
      %p51 = scmp.eq.s32.totalorder %s14, 3
      %p52 = por %p50, %p51
      %p53 = scmp.ne.s32.totalorder %s45, %s48
      %p54 = scmp.eq.s32.totalorder %s14, 0
      %p55 = por %p53, %p54
      %p56 = scmp.ne.s32.totalorder %s45, %s48
      %p57 = scmp.eq.s32.totalorder %s19, 3
      %p58 = por %p56, %p57
      %p59 = scmp.ne.s32.totalorder %s48, %s49
      %p60 = scmp.eq.s32.totalorder %s19, 0
      %p61 = por %p59, %p60
      %p62 = scmp.ne.s32.totalorder %s48, %s49
      %p63 = scmp.eq.s32.totalorder %s20, 3
      %p64 = por %p62, %p63
      %p66 = scmp.ne.s32.totalorder %s49, %s65
      %p67 = scmp.eq.s32.totalorder %s20, 0
      %p68 = por %p66, %p67
      %s69 = sadd.s32 %s22, 1
      %s70 = sadd.s32 %s36, 1
      %s71 = ssub.s32 %s21, %s40
      %s72 = ssub.s32 %s69, %s70
      %s73 = sor.u32 %s71, %s72
      %p74 = scmp.eq.s32.totalorder %s73, 0
      %s76 = sadd.s32 %s75, 1
      %s77 = scalar_select %p74, %s75, %s76
      %p80 = pneg %p74
      %p81 = scmp.eq.s32.totalorder %s14, 3
      %p82 = por %p80, %p81
      %p83 = scmp.ne.s32.totalorder %s75, %s78
      %p84 = scmp.eq.s32.totalorder %s14, 0
      %p85 = por %p83, %p84
      %p86 = scmp.ne.s32.totalorder %s75, %s78
      %p87 = scmp.eq.s32.totalorder %s19, 3
      %p88 = por %p86, %p87
      %p89 = scmp.ne.s32.totalorder %s78, %s79
      %p90 = scmp.eq.s32.totalorder %s19, 0
      %p91 = por %p89, %p90
      %p92 = scmp.ne.s32.totalorder %s78, %s79
      %p93 = scmp.eq.s32.totalorder %s20, 3
      %p94 = por %p92, %p93
      %p96 = scmp.ne.s32.totalorder %s79, %s95
      %p97 = scmp.eq.s32.totalorder %s20, 0
      %p98 = por %p96, %p97
      %s99 = ssub.s32 %s23, %s32
      %p100 = scmp.eq.s32.totalorder %s99, 0
      %s102 = sadd.s32 %s101, 1
      %s103 = scalar_select %p100, %s101, %s102
      %p106 = pneg %p100
      %p107 = scmp.eq.s32.totalorder %s14, 3
      %p108 = por %p106, %p107
      %p109 = scmp.ne.s32.totalorder %s101, %s104
      %p110 = scmp.eq.s32.totalorder %s14, 0
      %p111 = por %p109, %p110
      %p112 = scmp.ne.s32.totalorder %s101, %s104
      %p113 = scmp.eq.s32.totalorder %s19, 3
      %p114 = por %p112, %p113
      %p115 = scmp.ne.s32.totalorder %s104, %s105
      %p116 = scmp.eq.s32.totalorder %s19, 0
      %p117 = por %p115, %p116
      %p118 = scmp.ne.s32.totalorder %s104, %s105
      %p119 = scmp.eq.s32.totalorder %s20, 3
      %p120 = por %p118, %p119
      %p122 = scmp.ne.s32.totalorder %s105, %s121
      %p123 = scmp.eq.s32.totalorder %s20, 0
      %p124 = por %p122, %p123
      %s125 = ssub.s32 %s23, %s32
      %p126 = scmp.eq.s32.totalorder %s125, 0
      %s128 = sadd.s32 %s127, 1
      %s129 = scalar_select %p126, %s127, %s128
      %p132 = pneg %p126
      %p133 = scmp.eq.s32.totalorder %s14, 3
      %p134 = por %p132, %p133
      %p135 = scmp.ne.s32.totalorder %s127, %s130
      %p136 = scmp.eq.s32.totalorder %s14, 0
      %p137 = por %p135, %p136
      %p138 = scmp.ne.s32.totalorder %s127, %s130
      %p139 = scmp.eq.s32.totalorder %s19, 3
      %p140 = por %p138, %p139
      %p141 = scmp.ne.s32.totalorder %s130, %s131
      %p142 = scmp.eq.s32.totalorder %s19, 0
      %p143 = por %p141, %p142
      %p144 = scmp.ne.s32.totalorder %s130, %s131
      %p145 = scmp.eq.s32.totalorder %s20, 3
      %p146 = por %p144, %p145
      %p148 = scmp.ne.s32.totalorder %s131, %s147
      %p149 = scmp.eq.s32.totalorder %s20, 0
      %p150 = por %p148, %p149
      %s151 = ssub.s32 %s23, %s32
      %p152 = scmp.eq.s32.totalorder %s151, 0
      %s154 = sadd.s32 %s153, 1
      %s155 = scalar_select %p152, %s153, %s154
      %p158 = pneg %p152
      %p159 = scmp.eq.s32.totalorder %s14, 3
      %p160 = por %p158, %p159
      %p161 = scmp.ne.s32.totalorder %s153, %s156
      %p162 = scmp.eq.s32.totalorder %s14, 0
      %p163 = por %p161, %p162
      %p164 = scmp.ne.s32.totalorder %s153, %s156
      %p165 = scmp.eq.s32.totalorder %s19, 3
      %p166 = por %p164, %p165
      %p167 = scmp.ne.s32.totalorder %s156, %s157
      %p168 = scmp.eq.s32.totalorder %s19, 0
      %p169 = por %p167, %p168
      %p170 = scmp.ne.s32.totalorder %s156, %s157
      %p171 = scmp.eq.s32.totalorder %s20, 3
      %p172 = por %p170, %p171
      %p174 = scmp.ne.s32.totalorder %s157, %s173
      %p175 = scmp.eq.s32.totalorder %s20, 0
      %p176 = por %p174, %p175
      %s177 = ssub.s32 %s21, %s40
      %s178 = ssub.s32 %s22, %s36
      %s179 = sor.u32 %s177, %s178
      %s180 = ssub.s32 %s23, %s32
      %s181 = sor.u32 %s179, %s180
      %p182 = scmp.eq.s32.totalorder %s181, 0
      %s184 = sadd.s32 %s183, 1
      %s185 = scalar_select %p182, %s183, %s184
      %p188 = pneg %p182
      %p189 = scmp.eq.s32.totalorder %s14, 3
      %p190 = por %p188, %p189
      %p191 = scmp.ne.s32.totalorder %s183, %s186
      %p192 = scmp.eq.s32.totalorder %s14, 0
      %p193 = por %p191, %p192
      %p194 = scmp.ne.s32.totalorder %s183, %s186
      %p195 = scmp.eq.s32.totalorder %s19, 3
      %p196 = por %p194, %p195
      %p197 = scmp.ne.s32.totalorder %s186, %s187
      %p198 = scmp.eq.s32.totalorder %s19, 0
      %p199 = por %p197, %p198
      %p200 = scmp.ne.s32.totalorder %s186, %s187
      %p201 = scmp.eq.s32.totalorder %s20, 3
      %p202 = por %p200, %p201
      %p204 = scmp.ne.s32.totalorder %s187, %s203
      %p205 = scmp.eq.s32.totalorder %s20, 0
      %p206 = por %p204, %p205
      %p207 = scmp.le.s32.totalorder 1, %s14
      %p208 = scmp.lt.s32.totalorder %s14, 5
      %p209 = pnand %p207, %p208
      %p210 = pneg %p209
      // Predicated region
      $region9: #{tpu_custom_call.1} parent=5 // pred_check
        _
      $region10: #{tpu_custom_call.1} parent=5 // pred_check_branch
        %212 = sbr.rel (%p209) target = $region12
      $region11: #{tpu_custom_call.1} parent=5 // pred_region
        %s213 = ssub.s32 %s14, 1
        // Predicated region
        $region13: #{tpu_custom_call.1} parent=11 // pred_check
          %p214 = pneg %p117
        $region14: #{tpu_custom_call.1} parent=11 // pred_check_branch
          %216 = sbr.rel (%p214) target = $region16
        $region15: #{tpu_custom_call.1} parent=11 // pred_region
          %p217 = scmp.lt.s32.totalorder %s26, 0
          %s218 = scalar_select %p217, %s26, 0
          %s219 = smul.addr %s218, 2
          %s220 = scalar_lea.vmem %s2, %s219
        $region16: #{tpu_custom_call.1} parent=11 // pred_fallthru
          _
        // Predicated region
        $region17: #{tpu_custom_call.1} parent=11 // pred_check
          %p221 = pneg %p143
        $region18: #{tpu_custom_call.1} parent=11 // pred_check_branch
          %223 = sbr.rel (%p221) target = $region20
        $region19: #{tpu_custom_call.1} parent=11 // pred_region
          %p224 = scmp.lt.s32.totalorder %s26, 0
          %s225 = scalar_select %p224, %s26, 0
          %s226 = scalar_lea.vmem %s3, %s225
        $region20: #{tpu_custom_call.1} parent=11 // pred_fallthru
          _
        // Predicated region
        $region21: #{tpu_custom_call.1} parent=11 // pred_check
          %p227 = pneg %p169
        $region22: #{tpu_custom_call.1} parent=11 // pred_check_branch
          %229 = sbr.rel (%p227) target = $region24
        $region23: #{tpu_custom_call.1} parent=11 // pred_region
          %p230 = scmp.lt.s32.totalorder %s26, 0
          %s231 = scalar_select %p230, %s26, 0
          %s232 = scalar_lea.vmem %s4, %s231
        $region24: #{tpu_custom_call.1} parent=11 // pred_fallthru
          _
      $region12: #{tpu_custom_call.1} parent=5 // pred_fallthru
        _
      %p233 = scmp.lt.s32.totalorder %s14, 4
      // Predicated region
      $region25: #{tpu_custom_call.1} parent=5 // pred_check
        %p234 = pneg %p233
      $region26: #{tpu_custom_call.1} parent=5 // pred_check_branch
        %236 = sbr.rel (%p234) target = $region28
      $region27: #{tpu_custom_call.1} parent=5 // pred_region
        // Predicated region
        $region29: #{tpu_custom_call.1} parent=27 // pred_check
          %p237 = pneg %p55
        $region30: #{tpu_custom_call.1} parent=27 // pred_check_branch
          %239 = sbr.rel (%p237) target = $region32
        $region31: #{tpu_custom_call.1} parent=27 // pred_region
          %s240 = smul.u32 8, %s22
          %p241 = scmp.lt.s32.totalorder %s21, 1
          %s242 = scalar_select %p241, %s21, 1
          %p243 = scmp.lt.s32.totalorder %s240, 23
          %s244 = scalar_select %p243, %s240, 23
          %s245 = smul.addr %s244, 3
          %s246 = smul.addr %s242, 72
          %s247 = sadd.s32 %s245, %s246
          %s248 = smul.addr %s247, 4
          %s249 = scalar_lea.vmem %s0, %s248
          %s250 = smul.u32 8, %s22
        $region32: #{tpu_custom_call.1} parent=27 // pred_fallthru
          _
        // Predicated region
        $region33: #{tpu_custom_call.1} parent=27 // pred_check
          %p251 = pneg %p85
        $region34: #{tpu_custom_call.1} parent=27 // pred_check_branch
          %253 = sbr.rel (%p251) target = $region36
        $region35: #{tpu_custom_call.1} parent=27 // pred_region
          %s254 = sadd.s32 %s22, 1
          %s255 = smul.u32 8, %s254
          %p256 = scmp.lt.s32.totalorder %s21, 1
          %s257 = scalar_select %p256, %s21, 1
          %p258 = scmp.lt.s32.totalorder %s255, 23
          %s259 = scalar_select %p258, %s255, 23
          %s260 = smul.addr %s259, 3
          %s261 = smul.addr %s257, 72
          %s262 = sadd.s32 %s260, %s261
          %s263 = smul.addr %s262, 4
          %s264 = scalar_lea.vmem %s1, %s263
          %s265 = sadd.s32 %s22, 1
          %s266 = smul.u32 8, %s265
        $region36: #{tpu_custom_call.1} parent=27 // pred_fallthru
          _
      $region28: #{tpu_custom_call.1} parent=5 // pred_fallthru
        _
      %p267 = scmp.le.s32.totalorder 1, %s14
      %p268 = scmp.lt.s32.totalorder %s14, 5
      %p269 = pnand %p267, %p268
      %p270 = pneg %p269
      // Predicated region
      $region37: #{tpu_custom_call.1} parent=5 // pred_check
        _
      $region38: #{tpu_custom_call.1} parent=5 // pred_check_branch
        %272 = sbr.rel (%p269) target = $region40
      $region39: #{tpu_custom_call.1} parent=5 // pred_region
        %s273 = ssub.s32 %s14, 1
        %s274 = smul.u32 8, %s25
        %p275 = scmp.lt.s32.totalorder %s24, 1
        %s276 = scalar_select %p275, %s24, 1
        %p277 = scmp.lt.s32.totalorder %s274, 23
        %s278 = scalar_select %p277, %s274, 23
        %s279 = smul.addr %s278, 3
        %s280 = smul.addr %s276, 72
        %s281 = sadd.s32 %s279, %s280
        %s282 = smul.addr %s281, 4
        %s283 = scalar_lea.vmem %s0, %s282
        %p284 = pneg %p61
        %p285 = pneg %p58
        %s286 = sadd.s32 %s25, 1
        %s287 = smul.u32 8, %s286
        %p288 = scmp.lt.s32.totalorder %s24, 1
        %s289 = scalar_select %p288, %s24, 1
        %p290 = scmp.lt.s32.totalorder %s287, 23
        %s291 = scalar_select %p290, %s287, 23
        %s292 = smul.addr %s291, 3
        %s293 = smul.addr %s289, 72
        %s294 = sadd.s32 %s292, %s293
        %s295 = smul.addr %s294, 4
        %s296 = scalar_lea.vmem %s1, %s295
        %p297 = pneg %p91
        %p298 = pneg %p88
        %p299 = scmp.lt.s32.totalorder %s26, 0
        %s300 = scalar_select %p299, %s26, 0
        %s301 = smul.addr %s300, 2
        %s302 = scalar_lea.vmem %s2, %s301
        %p303 = pneg %p117
        %p304 = pneg %p114
        %p305 = scmp.lt.s32.totalorder %s26, 0
        %s306 = scalar_select %p305, %s26, 0
        %s307 = scalar_lea.vmem %s3, %s306
        %p308 = pneg %p143
        %p309 = pneg %p140
        %p310 = scmp.lt.s32.totalorder %s26, 0
        %s311 = scalar_select %p310, %s26, 0
        %s312 = scalar_lea.vmem %s4, %s311
        %p313 = pneg %p169
        %p314 = pneg %p166
        %p315 = pneg %p199
        %p316 = pneg %p196
        %s317 = sand.u32 %s186, 1
        %s318 = scalar_lea.sflag [#allocation5], %s317
        %s319 = sand.u32 %s186, 1
        %s320 = smul.addr %s319, 128
        %s321 = scalar_lea.vmem [#allocation4], %s320
        %s322 = smul.u32 8, %s25
        %p323 = scmp.lt.s32.totalorder %s24, 1
        %s324 = scalar_select %p323, %s24, 1
        %p325 = scmp.lt.s32.totalorder %s322, 23
        %s326 = scalar_select %p325, %s322, 23
        %s327 = smul.addr %s326, 3
        %s328 = smul.addr %s324, 72
        %s329 = sadd.s32 %s327, %s328
        %s330 = smul.addr %s329, 4
        %s331 = scalar_lea.vmem %s0, %s330
        %s332 = smul.u32 8, %s25
        %s333 = sadd.s32 %s25, 1
        %s334 = smul.u32 8, %s333
        %p335 = scmp.lt.s32.totalorder %s24, 1
        %s336 = scalar_select %p335, %s24, 1
        %p337 = scmp.lt.s32.totalorder %s334, 23
        %s338 = scalar_select %p337, %s334, 23
        %s339 = smul.addr %s338, 3
        %s340 = smul.addr %s336, 72
        %s341 = sadd.s32 %s339, %s340
        %s342 = smul.addr %s341, 4
        %s343 = scalar_lea.vmem %s1, %s342
        %s344 = sadd.s32 %s25, 1
        %s345 = smul.u32 8, %s344
        %p346 = scmp.lt.s32.totalorder %s26, 0
        %s347 = scalar_select %p346, %s26, 0
        %s348 = smul.addr %s347, 2
        %s349 = scalar_lea.vmem %s2, %s348
        %p350 = scmp.lt.s32.totalorder %s26, 0
        %s351 = scalar_select %p350, %s26, 0
        %s352 = scalar_lea.vmem %s3, %s351
        %p353 = scmp.lt.s32.totalorder %s26, 0
        %s354 = scalar_select %p353, %s26, 0
        %s355 = scalar_lea.vmem %s4, %s354
        %s356 = smul.u32 8, %s25
        %p358 = scmp.eq.s32.totalorder %s26, 0
        // Predicated region
        $region41: #{tpu_custom_call.1} parent=39 // pred_check
          %p359 = pneg %p358
        $region42: #{tpu_custom_call.1} parent=39 // pred_check_branch
          %361 = sbr.rel (%p359) target = $region44
        $region43: #{tpu_custom_call.1} parent=39 // pred_region
          %v362 = vld [vmem:[%s331] sm:$0xf]
          %v363 = vld [vmem:[%s331 + $0x4] sm:$0xf]
          %v364 = vld [vmem:[%s331 + $0x8] sm:$0x1]
          %v365 = vld [vmem:[%s331 + $0xc] sm:$0xf]
          %v366 = vld [vmem:[%s331 + $0x10] sm:$0xf]
          %v367 = vld [vmem:[%s331 + $0x14] sm:$0x1]
          %v368 = vld [vmem:[%s331 + $0x18] sm:$0xf]
          %v369 = vld [vmem:[%s331 + $0x1c] sm:$0xf]
          %v370 = vld [vmem:[%s331 + $0x20] sm:$0x1]
          %v371 = vld [vmem:[%s331 + $0x24] sm:$0xf]
          %v372 = vld [vmem:[%s331 + $0x28] sm:$0xf]
          %v373 = vld [vmem:[%s331 + $0x2c] sm:$0x1]
          %v374 = vld [vmem:[%s331 + $0x30] sm:$0xf]
          %v375 = vld [vmem:[%s331 + $0x34] sm:$0xf]
          %v376 = vld [vmem:[%s331 + $0x38] sm:$0x1]
          %v377 = vld [vmem:[%s331 + $0x3c] sm:$0xf]
          %v378 = vld [vmem:[%s331 + $0x40] sm:$0xf]
          %v379 = vld [vmem:[%s331 + $0x44] sm:$0x1]
          %v380 = vld [vmem:[%s331 + $0x48] sm:$0xf]
          %v381 = vld [vmem:[%s331 + $0x4c] sm:$0xf]
          %v382 = vld [vmem:[%s331 + $0x50] sm:$0x1]
          %v383 = vld [vmem:[%s331 + $0x54] sm:$0xf]
          %v384 = vld [vmem:[%s331 + $0x58] sm:$0xf]
          %v385 = vld [vmem:[%s331 + $0x5c] sm:$0x1]
          %vm386 = vcmask 27648
          %387 = vst.msk [vmem:[#allocation2] sm:$0xf] %vm386, %v362
          %388 = vst.msk [vmem:[#allocation2 + $0x4] sm:$0xf] %vm386, %v363
          %vm389 = vcmask 24576
          %390 = vst.msk [vmem:[#allocation2 + $0x8] sm:$0x1] %vm389, %v364
          %391 = vst.msk [vmem:[#allocation2 + $0xc] sm:$0xf] %vm386, %v365
          %392 = vst.msk [vmem:[#allocation2 + $0x10] sm:$0xf] %vm386, %v366
          %393 = vst.msk [vmem:[#allocation2 + $0x14] sm:$0x1] %vm389, %v367
          %394 = vst.msk [vmem:[#allocation2 + $0x18] sm:$0xf] %vm386, %v368
          %395 = vst.msk [vmem:[#allocation2 + $0x1c] sm:$0xf] %vm386, %v369
          %396 = vst.msk [vmem:[#allocation2 + $0x20] sm:$0x1] %vm389, %v370
          %397 = vst.msk [vmem:[#allocation2 + $0x24] sm:$0xf] %vm386, %v371
          %398 = vst.msk [vmem:[#allocation2 + $0x28] sm:$0xf] %vm386, %v372
          %399 = vst.msk [vmem:[#allocation2 + $0x2c] sm:$0x1] %vm389, %v373
          %400 = vst.msk [vmem:[#allocation2 + $0x30] sm:$0xf] %vm386, %v374
          %401 = vst.msk [vmem:[#allocation2 + $0x34] sm:$0xf] %vm386, %v375
          %402 = vst.msk [vmem:[#allocation2 + $0x38] sm:$0x1] %vm389, %v376
          %403 = vst.msk [vmem:[#allocation2 + $0x3c] sm:$0xf] %vm386, %v377
          %404 = vst.msk [vmem:[#allocation2 + $0x40] sm:$0xf] %vm386, %v378
          %405 = vst.msk [vmem:[#allocation2 + $0x44] sm:$0x1] %vm389, %v379
          %406 = vst.msk [vmem:[#allocation2 + $0x48] sm:$0xf] %vm386, %v380
          %407 = vst.msk [vmem:[#allocation2 + $0x4c] sm:$0xf] %vm386, %v381
          %408 = vst.msk [vmem:[#allocation2 + $0x50] sm:$0x1] %vm389, %v382
          %409 = vst.msk [vmem:[#allocation2 + $0x54] sm:$0xf] %vm386, %v383
          %410 = vst.msk [vmem:[#allocation2 + $0x58] sm:$0xf] %vm386, %v384
          %411 = vst.msk [vmem:[#allocation2 + $0x5c] sm:$0x1] %vm389, %v385
          %v412 = vld [vmem:[%s343] sm:$0xf]
          %v413 = vld [vmem:[%s343 + $0x4] sm:$0xf]
          %v414 = vld [vmem:[%s343 + $0x8] sm:$0x1]
          %v415 = vld [vmem:[%s343 + $0xc] sm:$0xf]
          %v416 = vld [vmem:[%s343 + $0x10] sm:$0xf]
          %v417 = vld [vmem:[%s343 + $0x14] sm:$0x1]
          %v418 = vld [vmem:[%s343 + $0x18] sm:$0xf]
          %v419 = vld [vmem:[%s343 + $0x1c] sm:$0xf]
          %v420 = vld [vmem:[%s343 + $0x20] sm:$0x1]
          %v421 = vld [vmem:[%s343 + $0x24] sm:$0xf]
          %v422 = vld [vmem:[%s343 + $0x28] sm:$0xf]
          %v423 = vld [vmem:[%s343 + $0x2c] sm:$0x1]
          %v424 = vld [vmem:[%s343 + $0x30] sm:$0xf]
          %v425 = vld [vmem:[%s343 + $0x34] sm:$0xf]
          %v426 = vld [vmem:[%s343 + $0x38] sm:$0x1]
          %v427 = vld [vmem:[%s343 + $0x3c] sm:$0xf]
          %v428 = vld [vmem:[%s343 + $0x40] sm:$0xf]
          %v429 = vld [vmem:[%s343 + $0x44] sm:$0x1]
          %v430 = vld [vmem:[%s343 + $0x48] sm:$0xf]
          %v431 = vld [vmem:[%s343 + $0x4c] sm:$0xf]
          %v432 = vld [vmem:[%s343 + $0x50] sm:$0x1]
          %v433 = vld [vmem:[%s343 + $0x54] sm:$0xf]
          %v434 = vld [vmem:[%s343 + $0x58] sm:$0xf]
          %v435 = vld [vmem:[%s343 + $0x5c] sm:$0x1]
          %s436 = scalar_lea.vmem [#allocation2], 96
          %437 = vst.msk [vmem:[%s436] sm:$0xf] %vm386, %v412
          %438 = vst.msk [vmem:[%s436 + $0x4] sm:$0xf] %vm386, %v413
          %439 = vst.msk [vmem:[%s436 + $0x8] sm:$0x1] %vm389, %v414
          %440 = vst.msk [vmem:[%s436 + $0xc] sm:$0xf] %vm386, %v415
          %441 = vst.msk [vmem:[%s436 + $0x10] sm:$0xf] %vm386, %v416
          %442 = vst.msk [vmem:[%s436 + $0x14] sm:$0x1] %vm389, %v417
          %443 = vst.msk [vmem:[%s436 + $0x18] sm:$0xf] %vm386, %v418
          %444 = vst.msk [vmem:[%s436 + $0x1c] sm:$0xf] %vm386, %v419
          %445 = vst.msk [vmem:[%s436 + $0x20] sm:$0x1] %vm389, %v420
          %446 = vst.msk [vmem:[%s436 + $0x24] sm:$0xf] %vm386, %v421
          %447 = vst.msk [vmem:[%s436 + $0x28] sm:$0xf] %vm386, %v422
          %448 = vst.msk [vmem:[%s436 + $0x2c] sm:$0x1] %vm389, %v423
          %449 = vst.msk [vmem:[%s436 + $0x30] sm:$0xf] %vm386, %v424
          %450 = vst.msk [vmem:[%s436 + $0x34] sm:$0xf] %vm386, %v425
          %451 = vst.msk [vmem:[%s436 + $0x38] sm:$0x1] %vm389, %v426
          %452 = vst.msk [vmem:[%s436 + $0x3c] sm:$0xf] %vm386, %v427
          %453 = vst.msk [vmem:[%s436 + $0x40] sm:$0xf] %vm386, %v428
          %454 = vst.msk [vmem:[%s436 + $0x44] sm:$0x1] %vm389, %v429
          %455 = vst.msk [vmem:[%s436 + $0x48] sm:$0xf] %vm386, %v430
          %456 = vst.msk [vmem:[%s436 + $0x4c] sm:$0xf] %vm386, %v431
          %457 = vst.msk [vmem:[%s436 + $0x50] sm:$0x1] %vm389, %v432
          %458 = vst.msk [vmem:[%s436 + $0x54] sm:$0xf] %vm386, %v433
          %459 = vst.msk [vmem:[%s436 + $0x58] sm:$0xf] %vm386, %v434
          %460 = vst.msk [vmem:[%s436 + $0x5c] sm:$0x1] %vm389, %v435
        $region44: #{tpu_custom_call.1} parent=39 // pred_fallthru
          _
        %461 = vst [vmem:[#allocation3] sm:$0xff] 0.0
        %462 = vst [vmem:[#allocation3 + $0x8] sm:$0xff] 0.0
        %463 = vst [vmem:[#allocation3 + $0x10] sm:$0xff] 0.0
        %464 = vst [vmem:[#allocation3 + $0x18] sm:$0xff] 0.0
        %465 = vst [vmem:[#allocation3 + $0x20] sm:$0xff] 0.0
        %466 = vst [vmem:[#allocation3 + $0x28] sm:$0xff] 0.0
        %467 = vst [vmem:[#allocation3 + $0x30] sm:$0xff] 0.0
        %468 = vst [vmem:[#allocation3 + $0x38] sm:$0xff] 0.0
        %469 = vst [vmem:[#allocation3 + $0x40] sm:$0xff] 0.0
        %470 = vst [vmem:[#allocation3 + $0x48] sm:$0xff] 0.0
        %471 = vst [vmem:[#allocation3 + $0x50] sm:$0xff] 0.0
        %472 = vst [vmem:[#allocation3 + $0x58] sm:$0xff] 0.0
        %473 = vst [vmem:[#allocation3 + $0x60] sm:$0xff] 0.0
        %474 = vst [vmem:[#allocation3 + $0x68] sm:$0xff] 0.0
        %475 = vst [vmem:[#allocation3 + $0x70] sm:$0xff] 0.0
        %476 = vst [vmem:[#allocation3 + $0x78] sm:$0xff] 0.0
        %v477 = vld [vmem:[#allocation2] sm:$0xf]
        %v478 = vld [vmem:[#allocation2 + $0x4] sm:$0xf]
        %v479 = vld [vmem:[#allocation2 + $0xc] sm:$0xf]
        %v480 = vld [vmem:[#allocation2 + $0x10] sm:$0xf]
        %v481 = vld [vmem:[#allocation2 + $0x18] sm:$0xf]
        %v482 = vld [vmem:[#allocation2 + $0x1c] sm:$0xf]
        %v483 = vld [vmem:[#allocation2 + $0x24] sm:$0xf]
        %v484 = vld [vmem:[#allocation2 + $0x28] sm:$0xf]
        %v485 = vld [vmem:[#allocation2 + $0x30] sm:$0xf]
        %v486 = vld [vmem:[#allocation2 + $0x34] sm:$0xf]
        %v487 = vld [vmem:[#allocation2 + $0x3c] sm:$0xf]
        %v488 = vld [vmem:[#allocation2 + $0x40] sm:$0xf]
        %v489 = vld [vmem:[#allocation2 + $0x48] sm:$0xf]
        %v490 = vld [vmem:[#allocation2 + $0x4c] sm:$0xf]
        %v491 = vld [vmem:[#allocation2 + $0x54] sm:$0xf]
        %v492 = vld [vmem:[#allocation2 + $0x58] sm:$0xf]
        %v493 = vld [vmem:[#allocation3] sm:$0xff]
        %v494 = vld [vmem:[#allocation3 + $0x8] sm:$0xff]
        %v495 = vld [vmem:[#allocation3 + $0x10] sm:$0xff]
        %v496 = vld [vmem:[#allocation3 + $0x18] sm:$0xff]
        %v497 = vld [vmem:[#allocation3 + $0x20] sm:$0xff]
        %v498 = vld [vmem:[#allocation3 + $0x28] sm:$0xff]
        %v499 = vld [vmem:[#allocation3 + $0x30] sm:$0xff]
        %v500 = vld [vmem:[#allocation3 + $0x38] sm:$0xff]
        %v501 = vld [vmem:[#allocation3 + $0x40] sm:$0xff]
        %v502 = vld [vmem:[#allocation3 + $0x48] sm:$0xff]
        %v503 = vld [vmem:[#allocation3 + $0x50] sm:$0xff]
        %v504 = vld [vmem:[#allocation3 + $0x58] sm:$0xff]
        %v505 = vld [vmem:[#allocation3 + $0x60] sm:$0xff]
        %v506 = vld [vmem:[#allocation3 + $0x68] sm:$0xff]
        %v507 = vld [vmem:[#allocation3 + $0x70] sm:$0xff]
        %v508 = vld [vmem:[#allocation3 + $0x78] sm:$0xff]
        %v509 = vld [vmem:[%s349] sm:$0x3]
        %v526 = vunpack.c.l.b16 %v477
        %v527 = vunpack.c.l.b16 %v478
        %v528 = vunpack.c.l.b16 %v479
        %v529 = vunpack.c.l.b16 %v480
        %v530 = vunpack.c.l.b16 %v481
        %v531 = vunpack.c.l.b16 %v482
        %v532 = vunpack.c.l.b16 %v483
        %v533 = vunpack.c.l.b16 %v484
        %v534 = vunpack.c.l.b16 %v485
        %v535 = vunpack.c.l.b16 %v486
        %v536 = vunpack.c.l.b16 %v487
        %v537 = vunpack.c.l.b16 %v488
        %v538 = vunpack.c.l.b16 %v489
        %v539 = vunpack.c.l.b16 %v490
        %v540 = vunpack.c.l.b16 %v491
        %v541 = vunpack.c.l.b16 %v492
        %v542 = vpack.c.b16 %v527, %v526
        %v543 = vpack.c.b16 %v529, %v528
        %v544 = vpack.c.b16 %v531, %v530
        %v545 = vpack.c.b16 %v533, %v532
        %v546 = vpack.c.b16 %v535, %v534
        %v547 = vpack.c.b16 %v537, %v536
        %v548 = vpack.c.b16 %v539, %v538
        %v549 = vpack.c.b16 %v541, %v540
        %vm550 = vcmask 31744
        %v552 = vsel %vm550, %v542, 0
        %v555 = vsel %vm550, %v543, 0
        %v558 = vsel %vm550, %v544, 0
        %v561 = vsel %vm550, %v545, 0
        %v564 = vsel %vm550, %v546, 0
        %v567 = vsel %vm550, %v547, 0
        %v570 = vsel %vm550, %v548, 0
        %v573 = vsel %vm550, %v549, 0
        %vm575 = vcmask 1041408
        %v577 = vsel %vm575, %v509, 0
        %579 = vmatprep.subr.bf16.mxu0 0
        %580 = vmatpush1.bf16.msra.mxu0 0
        %581 = vmatprep.subr.bf16.mxu0 0
        %582 = vmatpush1.bf16.msra.mxu0 0
        %583 = vmatprep.subr.bf16.mxu0 0
        %584 = vmatpush1.bf16.msra.mxu0 0
        %585 = vmatprep.subr.bf16.mxu0 0
        %586 = vmatpush1.bf16.msra.mxu0 0
        %587 = vmatprep.subr.bf16.mxu0 0
        %588 = vmatpush1.bf16.msra.mxu0 0
        %589 = vmatprep.subr.bf16.mxu0 0
        %590 = vmatpush1.bf16.msra.mxu0 0
        %591 = vmatprep.subr.bf16.mxu0 0
        %592 = vmatpush1.bf16.msra.mxu0 0
        %593 = vmatprep.subr.bf16.mxu0 0
        %594 = vmatpush1.bf16.msra.mxu0 %v577
        %595 = vmatprep.subr.bf16.mxu0 0
        %596 = vmatpush2.bf16.msra.mxu0 0
        %597 = vmatprep.subr.bf16.mxu0 0
        %598 = vmatpush2.bf16.msra.mxu0 0
        %599 = vmatprep.subr.bf16.mxu0 0
        %600 = vmatpush2.bf16.msra.mxu0 0
        %601 = vmatprep.subr.bf16.mxu0 0
        %602 = vmatpush2.bf16.msra.mxu0 0
        %603 = vmatprep.subr.bf16.mxu0 0
        %604 = vmatpush2.bf16.msra.mxu0 0
        %605 = vmatprep.subr.bf16.mxu0 0
        %606 = vmatpush2.bf16.msra.mxu0 0
        %607 = vmatprep.subr.bf16.mxu0 0
        %608 = vmatpush2.bf16.msra.mxu0 0
        %609 = vmatprep.subr.bf16.mxu0 0
        %610 = vmatpush2.bf16.msra.mxu0 0
        %611 = vmatprep.mubr.bf16.mxu0 0
        %612 = vmatmul.mubr.bf16.gmra.mxu0 %v552
        %v613 = vpop.f32.mrf.mxu0
        %v614 = vadd.f32 0.0, %v613
        %v615 = vpop.f32.mrf.mxu0
        %v616 = vpop.f32.mrf.mxu0
        %v617 = vadd.f32 0.0, %v616
        %v618 = vpop.f32.mrf.mxu0
        %619 = vmatprep.mubr.bf16.mxu0 0
        %620 = vmatmul.mubr.bf16.gmra.mxu0 %v555
        %v621 = vpop.f32.mrf.mxu0
        %v622 = vadd.f32 0.0, %v621
        %v623 = vpop.f32.mrf.mxu0
        %v624 = vpop.f32.mrf.mxu0
        %v625 = vadd.f32 0.0, %v624
        %v626 = vpop.f32.mrf.mxu0
        %627 = vmatprep.mubr.bf16.mxu0 0
        %628 = vmatmul.mubr.bf16.gmra.mxu0 %v558
        %v629 = vpop.f32.mrf.mxu0
        %v630 = vadd.f32 0.0, %v629
        %v631 = vpop.f32.mrf.mxu0
        %v632 = vpop.f32.mrf.mxu0
        %v633 = vadd.f32 0.0, %v632
        %v634 = vpop.f32.mrf.mxu0
        %635 = vmatprep.mubr.bf16.mxu0 0
        %636 = vmatmul.mubr.bf16.gmra.mxu0 %v561
        %v637 = vpop.f32.mrf.mxu0
        %v638 = vadd.f32 0.0, %v637
        %v639 = vpop.f32.mrf.mxu0
        %v640 = vpop.f32.mrf.mxu0
        %v641 = vadd.f32 0.0, %v640
        %v642 = vpop.f32.mrf.mxu0
        %643 = vmatprep.mubr.bf16.mxu0 0
        %644 = vmatmul.mubr.bf16.gmra.mxu0 %v564
        %v645 = vpop.f32.mrf.mxu0
        %v646 = vadd.f32 0.0, %v645
        %v647 = vpop.f32.mrf.mxu0
        %v648 = vpop.f32.mrf.mxu0
        %v649 = vadd.f32 0.0, %v648
        %v650 = vpop.f32.mrf.mxu0
        %651 = vmatprep.mubr.bf16.mxu0 0
        %652 = vmatmul.mubr.bf16.gmra.mxu0 %v567
        %v653 = vpop.f32.mrf.mxu0
        %v654 = vadd.f32 0.0, %v653
        %v655 = vpop.f32.mrf.mxu0
        %v656 = vpop.f32.mrf.mxu0
        %v657 = vadd.f32 0.0, %v656
        %v658 = vpop.f32.mrf.mxu0
        %659 = vmatprep.mubr.bf16.mxu0 0
        %660 = vmatmul.mubr.bf16.gmra.mxu0 %v570
        %v661 = vpop.f32.mrf.mxu0
        %v662 = vadd.f32 0.0, %v661
        %v663 = vpop.f32.mrf.mxu0
        %v664 = vpop.f32.mrf.mxu0
        %v665 = vadd.f32 0.0, %v664
        %v666 = vpop.f32.mrf.mxu0
        %667 = vmatprep.mubr.bf16.mxu0 0
        %668 = vmatmul.mubr.bf16.gmra.mxu0 %v573
        %v669 = vpop.f32.mrf.mxu0
        %v670 = vadd.f32 0.0, %v669
        %v671 = vpop.f32.mrf.mxu0
        %v672 = vpop.f32.mrf.mxu0
        %v673 = vadd.f32 0.0, %v672
        %v674 = vpop.f32.mrf.mxu0
        %675 = vdwg.mxu0
        %v676 = vadd.f32 %v493, %v614
        %v677 = vadd.f32 %v494, %v617
        %v678 = vadd.f32 %v495, %v622
        %v679 = vadd.f32 %v496, %v625
        %v680 = vadd.f32 %v497, %v630
        %v681 = vadd.f32 %v498, %v633
        %v682 = vadd.f32 %v499, %v638
        %v683 = vadd.f32 %v500, %v641
        %v684 = vadd.f32 %v501, %v646
        %v685 = vadd.f32 %v502, %v649
        %v686 = vadd.f32 %v503, %v654
        %v687 = vadd.f32 %v504, %v657
        %v688 = vadd.f32 %v505, %v662
        %v689 = vadd.f32 %v506, %v665
        %v690 = vadd.f32 %v507, %v670
        %v691 = vadd.f32 %v508, %v673
        %692 = vst [vmem:[#allocation3] sm:$0xff] %v676
        %693 = vst [vmem:[#allocation3 + $0x8] sm:$0xff] %v677
        %694 = vst [vmem:[#allocation3 + $0x10] sm:$0xff] %v678
        %695 = vst [vmem:[#allocation3 + $0x18] sm:$0xff] %v679
        %696 = vst [vmem:[#allocation3 + $0x20] sm:$0xff] %v680
        %697 = vst [vmem:[#allocation3 + $0x28] sm:$0xff] %v681
        %698 = vst [vmem:[#allocation3 + $0x30] sm:$0xff] %v682
        %699 = vst [vmem:[#allocation3 + $0x38] sm:$0xff] %v683
        %700 = vst [vmem:[#allocation3 + $0x40] sm:$0xff] %v684
        %701 = vst [vmem:[#allocation3 + $0x48] sm:$0xff] %v685
        %702 = vst [vmem:[#allocation3 + $0x50] sm:$0xff] %v686
        %703 = vst [vmem:[#allocation3 + $0x58] sm:$0xff] %v687
        %704 = vst [vmem:[#allocation3 + $0x60] sm:$0xff] %v688
        %705 = vst [vmem:[#allocation3 + $0x68] sm:$0xff] %v689
        %706 = vst [vmem:[#allocation3 + $0x70] sm:$0xff] %v690
        %707 = vst [vmem:[#allocation3 + $0x78] sm:$0xff] %v691
        %v708 = vld [vmem:[#allocation2] sm:$0xf]
        %v709 = vld [vmem:[#allocation2 + $0x4] sm:$0xf]
        %v710 = vld [vmem:[#allocation2 + $0x8] sm:$0x1]
        %v711 = vld [vmem:[#allocation2 + $0xc] sm:$0xf]
        %v712 = vld [vmem:[#allocation2 + $0x10] sm:$0xf]
        %v713 = vld [vmem:[#allocation2 + $0x14] sm:$0x1]
        %v714 = vld [vmem:[#allocation2 + $0x18] sm:$0xf]
        %v715 = vld [vmem:[#allocation2 + $0x1c] sm:$0xf]
        %v716 = vld [vmem:[#allocation2 + $0x20] sm:$0x1]
        %v717 = vld [vmem:[#allocation2 + $0x24] sm:$0xf]
        %v718 = vld [vmem:[#allocation2 + $0x28] sm:$0xf]
        %v719 = vld [vmem:[#allocation2 + $0x2c] sm:$0x1]
        %v720 = vld [vmem:[#allocation2 + $0x30] sm:$0xf]
        %v721 = vld [vmem:[#allocation2 + $0x34] sm:$0xf]
        %v722 = vld [vmem:[#allocation2 + $0x38] sm:$0x1]
        %v723 = vld [vmem:[#allocation2 + $0x3c] sm:$0xf]
        %v724 = vld [vmem:[#allocation2 + $0x40] sm:$0xf]
        %v725 = vld [vmem:[#allocation2 + $0x44] sm:$0x1]
        %v726 = vld [vmem:[#allocation2 + $0x48] sm:$0xf]
        %v727 = vld [vmem:[#allocation2 + $0x4c] sm:$0xf]
        %v728 = vld [vmem:[#allocation2 + $0x50] sm:$0x1]
        %v729 = vld [vmem:[#allocation2 + $0x54] sm:$0xf]
        %v730 = vld [vmem:[#allocation2 + $0x58] sm:$0xf]
        %v731 = vld [vmem:[#allocation2 + $0x5c] sm:$0x1]
        %vm732 = vsmask.f32 3328
        %vm733 = vsmask.f32 7440
        %vm734 = vmor %vm732, %vm733
        %v736 = vshrl.u32 %v708, 16
        %v738 = vrot.slane %v736, 4
        %v739 = vshll.u32 %v708, 16
        %v741 = vrot.slane %v739, 5
        %v742 = vor.u32 %v738, %v741
        %v743 = vrot.slane %v742, 4
        %v745 = vshll.u32 %v709, 16
        %v747 = vrot.slane %v745, 5
        %v748 = vsel %vm734, %v743, %v747
        %v749 = vshrl.u32 %v709, 16
        %v751 = vrot.slane %v749, 4
        %v752 = vor.u32 %v751, %v747
        %v753 = vrot.slane %v752, 4
        %v755 = vshll.u32 %v710, 16
        %v757 = vrot.slane %v755, 5
        %v758 = vsel %vm734, %v753, %v757
        %v760 = vshrl.u32 %v711, 16
        %v762 = vrot.slane %v760, 4
        %v763 = vshll.u32 %v711, 16
        %v765 = vrot.slane %v763, 5
        %v766 = vor.u32 %v762, %v765
        %v767 = vrot.slane %v766, 4
        %v769 = vshll.u32 %v712, 16
        %v771 = vrot.slane %v769, 5
        %v772 = vsel %vm734, %v767, %v771
        %v773 = vshrl.u32 %v712, 16
        %v775 = vrot.slane %v773, 4
        %v776 = vor.u32 %v775, %v771
        %v777 = vrot.slane %v776, 4
        %v779 = vshll.u32 %v713, 16
        %v781 = vrot.slane %v779, 5
        %v782 = vsel %vm734, %v777, %v781
        %v784 = vshrl.u32 %v714, 16
        %v786 = vrot.slane %v784, 4
        %v787 = vshll.u32 %v714, 16
        %v789 = vrot.slane %v787, 5
        %v790 = vor.u32 %v786, %v789
        %v791 = vrot.slane %v790, 4
        %v793 = vshll.u32 %v715, 16
        %v795 = vrot.slane %v793, 5
        %v796 = vsel %vm734, %v791, %v795
        %v797 = vshrl.u32 %v715, 16
        %v799 = vrot.slane %v797, 4
        %v800 = vor.u32 %v799, %v795
        %v801 = vrot.slane %v800, 4
        %v803 = vshll.u32 %v716, 16
        %v805 = vrot.slane %v803, 5
        %v806 = vsel %vm734, %v801, %v805
        %v808 = vshrl.u32 %v717, 16
        %v810 = vrot.slane %v808, 4
        %v811 = vshll.u32 %v717, 16
        %v813 = vrot.slane %v811, 5
        %v814 = vor.u32 %v810, %v813
        %v815 = vrot.slane %v814, 4
        %v817 = vshll.u32 %v718, 16
        %v819 = vrot.slane %v817, 5
        %v820 = vsel %vm734, %v815, %v819
        %v821 = vshrl.u32 %v718, 16
        %v823 = vrot.slane %v821, 4
        %v824 = vor.u32 %v823, %v819
        %v825 = vrot.slane %v824, 4
        %v827 = vshll.u32 %v719, 16
        %v829 = vrot.slane %v827, 5
        %v830 = vsel %vm734, %v825, %v829
        %v832 = vshrl.u32 %v720, 16
        %v834 = vrot.slane %v832, 4
        %v835 = vshll.u32 %v720, 16
        %v837 = vrot.slane %v835, 5
        %v838 = vor.u32 %v834, %v837
        %v839 = vrot.slane %v838, 4
        %v841 = vshll.u32 %v721, 16
        %v843 = vrot.slane %v841, 5
        %v844 = vsel %vm734, %v839, %v843
        %v845 = vshrl.u32 %v721, 16
        %v847 = vrot.slane %v845, 4
        %v848 = vor.u32 %v847, %v843
        %v849 = vrot.slane %v848, 4
        %v851 = vshll.u32 %v722, 16
        %v853 = vrot.slane %v851, 5
        %v854 = vsel %vm734, %v849, %v853
        %v856 = vshrl.u32 %v723, 16
        %v858 = vrot.slane %v856, 4
        %v859 = vshll.u32 %v723, 16
        %v861 = vrot.slane %v859, 5
        %v862 = vor.u32 %v858, %v861
        %v863 = vrot.slane %v862, 4
        %v865 = vshll.u32 %v724, 16
        %v867 = vrot.slane %v865, 5
        %v868 = vsel %vm734, %v863, %v867
        %v869 = vshrl.u32 %v724, 16
        %v871 = vrot.slane %v869, 4
        %v872 = vor.u32 %v871, %v867
        %v873 = vrot.slane %v872, 4
        %v875 = vshll.u32 %v725, 16
        %v877 = vrot.slane %v875, 5
        %v878 = vsel %vm734, %v873, %v877
        %v880 = vshrl.u32 %v726, 16
        %v882 = vrot.slane %v880, 4
        %v883 = vshll.u32 %v726, 16
        %v885 = vrot.slane %v883, 5
        %v886 = vor.u32 %v882, %v885
        %v887 = vrot.slane %v886, 4
        %v889 = vshll.u32 %v727, 16
        %v891 = vrot.slane %v889, 5
        %v892 = vsel %vm734, %v887, %v891
        %v893 = vshrl.u32 %v727, 16
        %v895 = vrot.slane %v893, 4
        %v896 = vor.u32 %v895, %v891
        %v897 = vrot.slane %v896, 4
        %v899 = vshll.u32 %v728, 16
        %v901 = vrot.slane %v899, 5
        %v902 = vsel %vm734, %v897, %v901
        %v904 = vshrl.u32 %v729, 16
        %v906 = vrot.slane %v904, 4
        %v907 = vshll.u32 %v729, 16
        %v909 = vrot.slane %v907, 5
        %v910 = vor.u32 %v906, %v909
        %v911 = vrot.slane %v910, 4
        %v913 = vshll.u32 %v730, 16
        %v915 = vrot.slane %v913, 5
        %v916 = vsel %vm734, %v911, %v915
        %v917 = vshrl.u32 %v730, 16
        %v919 = vrot.slane %v917, 4
        %v920 = vor.u32 %v919, %v915
        %v921 = vrot.slane %v920, 4
        %v923 = vshll.u32 %v731, 16
        %v925 = vrot.slane %v923, 5
        %v926 = vsel %vm734, %v921, %v925
        %v927 = vld [vmem:[#allocation3] sm:$0xff]
        %v928 = vld [vmem:[#allocation3 + $0x8] sm:$0xff]
        %v929 = vld [vmem:[#allocation3 + $0x10] sm:$0xff]
        %v930 = vld [vmem:[#allocation3 + $0x18] sm:$0xff]
        %v931 = vld [vmem:[#allocation3 + $0x20] sm:$0xff]
        %v932 = vld [vmem:[#allocation3 + $0x28] sm:$0xff]
        %v933 = vld [vmem:[#allocation3 + $0x30] sm:$0xff]
        %v934 = vld [vmem:[#allocation3 + $0x38] sm:$0xff]
        %v935 = vld [vmem:[#allocation3 + $0x40] sm:$0xff]
        %v936 = vld [vmem:[#allocation3 + $0x48] sm:$0xff]
        %v937 = vld [vmem:[#allocation3 + $0x50] sm:$0xff]
        %v938 = vld [vmem:[#allocation3 + $0x58] sm:$0xff]
        %v939 = vld [vmem:[#allocation3 + $0x60] sm:$0xff]
        %v940 = vld [vmem:[#allocation3 + $0x68] sm:$0xff]
        %v941 = vld [vmem:[#allocation3 + $0x70] sm:$0xff]
        %v942 = vld [vmem:[#allocation3 + $0x78] sm:$0xff]
        %s943 = scalar_lea.vmem %s349, 2
        %v944 = vld [vmem:[%s943] sm:$0x3]
        %v945 = vunpack.c.l.b16 %v748
        %v946 = vunpack.c.l.b16 %v758
        %v947 = vunpack.c.l.b16 %v772
        %v948 = vunpack.c.l.b16 %v782
        %v949 = vunpack.c.l.b16 %v796
        %v950 = vunpack.c.l.b16 %v806
        %v951 = vunpack.c.l.b16 %v820
        %v952 = vunpack.c.l.b16 %v830
        %v953 = vunpack.c.l.b16 %v844
        %v954 = vunpack.c.l.b16 %v854
        %v955 = vunpack.c.l.b16 %v868
        %v956 = vunpack.c.l.b16 %v878
        %v957 = vunpack.c.l.b16 %v892
        %v958 = vunpack.c.l.b16 %v902
        %v959 = vunpack.c.l.b16 %v916
        %v960 = vunpack.c.l.b16 %v926
        %v961 = vpack.c.b16 %v946, %v945
        %v962 = vpack.c.b16 %v948, %v947
        %v963 = vpack.c.b16 %v950, %v949
        %v964 = vpack.c.b16 %v952, %v951
        %v965 = vpack.c.b16 %v954, %v953
        %v966 = vpack.c.b16 %v956, %v955
        %v967 = vpack.c.b16 %v958, %v957
        %v968 = vpack.c.b16 %v960, %v959
        %v970 = vsel %vm550, %v961, 0
        %v973 = vsel %vm550, %v962, 0
        %v976 = vsel %vm550, %v963, 0
        %v979 = vsel %vm550, %v964, 0
        %v982 = vsel %vm550, %v965, 0
        %v985 = vsel %vm550, %v966, 0
        %v988 = vsel %vm550, %v967, 0
        %v991 = vsel %vm550, %v968, 0
        %v994 = vsel %vm575, %v944, 0
        %996 = vmatprep.subr.bf16.mxu0 0
        %997 = vmatpush1.bf16.msra.mxu0 0
        %998 = vmatprep.subr.bf16.mxu0 0
        %999 = vmatpush1.bf16.msra.mxu0 0
        %1000 = vmatprep.subr.bf16.mxu0 0
        %1001 = vmatpush1.bf16.msra.mxu0 0
        %1002 = vmatprep.subr.bf16.mxu0 0
        %1003 = vmatpush1.bf16.msra.mxu0 0
        %1004 = vmatprep.subr.bf16.mxu0 0
        %1005 = vmatpush1.bf16.msra.mxu0 0
        %1006 = vmatprep.subr.bf16.mxu0 0
        %1007 = vmatpush1.bf16.msra.mxu0 0
        %1008 = vmatprep.subr.bf16.mxu0 0
        %1009 = vmatpush1.bf16.msra.mxu0 0
        %1010 = vmatprep.subr.bf16.mxu0 0
        %1011 = vmatpush1.bf16.msra.mxu0 %v994
        %1012 = vmatprep.subr.bf16.mxu0 0
        %1013 = vmatpush2.bf16.msra.mxu0 0
        %1014 = vmatprep.subr.bf16.mxu0 0
        %1015 = vmatpush2.bf16.msra.mxu0 0
        %1016 = vmatprep.subr.bf16.mxu0 0
        %1017 = vmatpush2.bf16.msra.mxu0 0
        %1018 = vmatprep.subr.bf16.mxu0 0
        %1019 = vmatpush2.bf16.msra.mxu0 0
        %1020 = vmatprep.subr.bf16.mxu0 0
        %1021 = vmatpush2.bf16.msra.mxu0 0
        %1022 = vmatprep.subr.bf16.mxu0 0
        %1023 = vmatpush2.bf16.msra.mxu0 0
        %1024 = vmatprep.subr.bf16.mxu0 0
        %1025 = vmatpush2.bf16.msra.mxu0 0
        %1026 = vmatprep.subr.bf16.mxu0 0
        %1027 = vmatpush2.bf16.msra.mxu0 0
        %1028 = vmatprep.mubr.bf16.mxu0 0
        %1029 = vmatmul.mubr.bf16.gmra.mxu0 %v970
        %v1030 = vpop.f32.mrf.mxu0
        %v1031 = vadd.f32 0.0, %v1030
        %v1032 = vpop.f32.mrf.mxu0
        %v1033 = vpop.f32.mrf.mxu0
        %v1034 = vadd.f32 0.0, %v1033
        %v1035 = vpop.f32.mrf.mxu0
        %1036 = vmatprep.mubr.bf16.mxu0 0
        %1037 = vmatmul.mubr.bf16.gmra.mxu0 %v973
        %v1038 = vpop.f32.mrf.mxu0
        %v1039 = vadd.f32 0.0, %v1038
        %v1040 = vpop.f32.mrf.mxu0
        %v1041 = vpop.f32.mrf.mxu0
        %v1042 = vadd.f32 0.0, %v1041
        %v1043 = vpop.f32.mrf.mxu0
        %1044 = vmatprep.mubr.bf16.mxu0 0
        %1045 = vmatmul.mubr.bf16.gmra.mxu0 %v976
        %v1046 = vpop.f32.mrf.mxu0
        %v1047 = vadd.f32 0.0, %v1046
        %v1048 = vpop.f32.mrf.mxu0
        %v1049 = vpop.f32.mrf.mxu0
        %v1050 = vadd.f32 0.0, %v1049
        %v1051 = vpop.f32.mrf.mxu0
        %1052 = vmatprep.mubr.bf16.mxu0 0
        %1053 = vmatmul.mubr.bf16.gmra.mxu0 %v979
        %v1054 = vpop.f32.mrf.mxu0
        %v1055 = vadd.f32 0.0, %v1054
        %v1056 = vpop.f32.mrf.mxu0
        %v1057 = vpop.f32.mrf.mxu0
        %v1058 = vadd.f32 0.0, %v1057
        %v1059 = vpop.f32.mrf.mxu0
        %1060 = vmatprep.mubr.bf16.mxu0 0
        %1061 = vmatmul.mubr.bf16.gmra.mxu0 %v982
        %v1062 = vpop.f32.mrf.mxu0
        %v1063 = vadd.f32 0.0, %v1062
        %v1064 = vpop.f32.mrf.mxu0
        %v1065 = vpop.f32.mrf.mxu0
        %v1066 = vadd.f32 0.0, %v1065
        %v1067 = vpop.f32.mrf.mxu0
        %1068 = vmatprep.mubr.bf16.mxu0 0
        %1069 = vmatmul.mubr.bf16.gmra.mxu0 %v985
        %v1070 = vpop.f32.mrf.mxu0
        %v1071 = vadd.f32 0.0, %v1070
        %v1072 = vpop.f32.mrf.mxu0
        %v1073 = vpop.f32.mrf.mxu0
        %v1074 = vadd.f32 0.0, %v1073
        %v1075 = vpop.f32.mrf.mxu0
        %1076 = vmatprep.mubr.bf16.mxu0 0
        %1077 = vmatmul.mubr.bf16.gmra.mxu0 %v988
        %v1078 = vpop.f32.mrf.mxu0
        %v1079 = vadd.f32 0.0, %v1078
        %v1080 = vpop.f32.mrf.mxu0
        %v1081 = vpop.f32.mrf.mxu0
        %v1082 = vadd.f32 0.0, %v1081
        %v1083 = vpop.f32.mrf.mxu0
        %1084 = vmatprep.mubr.bf16.mxu0 0
        %1085 = vmatmul.mubr.bf16.gmra.mxu0 %v991
        %v1086 = vpop.f32.mrf.mxu0
        %v1087 = vadd.f32 0.0, %v1086
        %v1088 = vpop.f32.mrf.mxu0
        %v1089 = vpop.f32.mrf.mxu0
        %v1090 = vadd.f32 0.0, %v1089
        %v1091 = vpop.f32.mrf.mxu0
        %1092 = vdwg.mxu0
        %v1093 = vadd.f32 %v927, %v1031
        %v1094 = vadd.f32 %v928, %v1034
        %v1095 = vadd.f32 %v929, %v1039
        %v1096 = vadd.f32 %v930, %v1042
        %v1097 = vadd.f32 %v931, %v1047
        %v1098 = vadd.f32 %v932, %v1050
        %v1099 = vadd.f32 %v933, %v1055
        %v1100 = vadd.f32 %v934, %v1058
        %v1101 = vadd.f32 %v935, %v1063
        %v1102 = vadd.f32 %v936, %v1066
        %v1103 = vadd.f32 %v937, %v1071
        %v1104 = vadd.f32 %v938, %v1074
        %v1105 = vadd.f32 %v939, %v1079
        %v1106 = vadd.f32 %v940, %v1082
        %v1107 = vadd.f32 %v941, %v1087
        %v1108 = vadd.f32 %v942, %v1090
        %1109 = vst [vmem:[#allocation3] sm:$0xff] %v1093
        %1110 = vst [vmem:[#allocation3 + $0x8] sm:$0xff] %v1094
        %1111 = vst [vmem:[#allocation3 + $0x10] sm:$0xff] %v1095
        %1112 = vst [vmem:[#allocation3 + $0x18] sm:$0xff] %v1096
        %1113 = vst [vmem:[#allocation3 + $0x20] sm:$0xff] %v1097
        %1114 = vst [vmem:[#allocation3 + $0x28] sm:$0xff] %v1098
        %1115 = vst [vmem:[#allocation3 + $0x30] sm:$0xff] %v1099
        %1116 = vst [vmem:[#allocation3 + $0x38] sm:$0xff] %v1100
        %1117 = vst [vmem:[#allocation3 + $0x40] sm:$0xff] %v1101
        %1118 = vst [vmem:[#allocation3 + $0x48] sm:$0xff] %v1102
        %1119 = vst [vmem:[#allocation3 + $0x50] sm:$0xff] %v1103
        %1120 = vst [vmem:[#allocation3 + $0x58] sm:$0xff] %v1104
        %1121 = vst [vmem:[#allocation3 + $0x60] sm:$0xff] %v1105
        %1122 = vst [vmem:[#allocation3 + $0x68] sm:$0xff] %v1106
        %1123 = vst [vmem:[#allocation3 + $0x70] sm:$0xff] %v1107
        %1124 = vst [vmem:[#allocation3 + $0x78] sm:$0xff] %v1108
        %v1125 = vld [vmem:[#allocation2] sm:$0xe]
        %v1126 = vld [vmem:[#allocation2 + $0x4] sm:$0xf]
        %v1127 = vld [vmem:[#allocation2 + $0x8] sm:$0x1]
        %v1128 = vld [vmem:[#allocation2 + $0xc] sm:$0xe]
        %v1129 = vld [vmem:[#allocation2 + $0x10] sm:$0xf]
        %v1130 = vld [vmem:[#allocation2 + $0x14] sm:$0x1]
        %v1131 = vld [vmem:[#allocation2 + $0x18] sm:$0xe]
        %v1132 = vld [vmem:[#allocation2 + $0x1c] sm:$0xf]
        %v1133 = vld [vmem:[#allocation2 + $0x20] sm:$0x1]
        %v1134 = vld [vmem:[#allocation2 + $0x24] sm:$0xe]
        %v1135 = vld [vmem:[#allocation2 + $0x28] sm:$0xf]
        %v1136 = vld [vmem:[#allocation2 + $0x2c] sm:$0x1]
        %v1137 = vld [vmem:[#allocation2 + $0x30] sm:$0xe]
        %v1138 = vld [vmem:[#allocation2 + $0x34] sm:$0xf]
        %v1139 = vld [vmem:[#allocation2 + $0x38] sm:$0x1]
        %v1140 = vld [vmem:[#allocation2 + $0x3c] sm:$0xe]
        %v1141 = vld [vmem:[#allocation2 + $0x40] sm:$0xf]
        %v1142 = vld [vmem:[#allocation2 + $0x44] sm:$0x1]
        %v1143 = vld [vmem:[#allocation2 + $0x48] sm:$0xe]
        %v1144 = vld [vmem:[#allocation2 + $0x4c] sm:$0xf]
        %v1145 = vld [vmem:[#allocation2 + $0x50] sm:$0x1]
        %v1146 = vld [vmem:[#allocation2 + $0x54] sm:$0xe]
        %v1147 = vld [vmem:[#allocation2 + $0x58] sm:$0xf]
        %v1148 = vld [vmem:[#allocation2 + $0x5c] sm:$0x1]
        %vm1173 = vcmask 1042432
        %vm1174 = vcmask 1046532
        %vm1175 = vmor %vm1173, %vm1174
        %v1176 = vrot.slane %v1125, 5
        %v1177 = vrot.slane %v1176, 4
        %v1178 = vrot.slane %v1126, 5
        %v1179 = vsel %vm1175, %v1177, %v1178
        %v1180 = vrot.slane %v1178, 4
        %v1181 = vrot.slane %v1127, 5
        %v1182 = vsel %vm1175, %v1180, %v1181
        %v1183 = vrot.slane %v1128, 5
        %v1184 = vrot.slane %v1183, 4
        %v1185 = vrot.slane %v1129, 5
        %v1186 = vsel %vm1175, %v1184, %v1185
        %v1187 = vrot.slane %v1185, 4
        %v1188 = vrot.slane %v1130, 5
        %v1189 = vsel %vm1175, %v1187, %v1188
        %v1190 = vrot.slane %v1131, 5
        %v1191 = vrot.slane %v1190, 4
        %v1192 = vrot.slane %v1132, 5
        %v1193 = vsel %vm1175, %v1191, %v1192
        %v1194 = vrot.slane %v1192, 4
        %v1195 = vrot.slane %v1133, 5
        %v1196 = vsel %vm1175, %v1194, %v1195
        %v1197 = vrot.slane %v1134, 5
        %v1198 = vrot.slane %v1197, 4
        %v1199 = vrot.slane %v1135, 5
        %v1200 = vsel %vm1175, %v1198, %v1199
        %v1201 = vrot.slane %v1199, 4
        %v1202 = vrot.slane %v1136, 5
        %v1203 = vsel %vm1175, %v1201, %v1202
        %v1204 = vrot.slane %v1137, 5
        %v1205 = vrot.slane %v1204, 4
        %v1206 = vrot.slane %v1138, 5
        %v1207 = vsel %vm1175, %v1205, %v1206
        %v1208 = vrot.slane %v1206, 4
        %v1209 = vrot.slane %v1139, 5
        %v1210 = vsel %vm1175, %v1208, %v1209
        %v1211 = vrot.slane %v1140, 5
        %v1212 = vrot.slane %v1211, 4
        %v1213 = vrot.slane %v1141, 5
        %v1214 = vsel %vm1175, %v1212, %v1213
        %v1215 = vrot.slane %v1213, 4
        %v1216 = vrot.slane %v1142, 5
        %v1217 = vsel %vm1175, %v1215, %v1216
        %v1218 = vrot.slane %v1143, 5
        %v1219 = vrot.slane %v1218, 4
        %v1220 = vrot.slane %v1144, 5
        %v1221 = vsel %vm1175, %v1219, %v1220
        %v1222 = vrot.slane %v1220, 4
        %v1223 = vrot.slane %v1145, 5
        %v1224 = vsel %vm1175, %v1222, %v1223
        %v1225 = vrot.slane %v1146, 5
        %v1226 = vrot.slane %v1225, 4
        %v1227 = vrot.slane %v1147, 5
        %v1228 = vsel %vm1175, %v1226, %v1227
        %v1229 = vrot.slane %v1227, 4
        %v1230 = vrot.slane %v1148, 5
        %v1231 = vsel %vm1175, %v1229, %v1230
        %v1232 = vld [vmem:[#allocation3] sm:$0xff]
        %v1233 = vld [vmem:[#allocation3 + $0x8] sm:$0xff]
        %v1234 = vld [vmem:[#allocation3 + $0x10] sm:$0xff]
        %v1235 = vld [vmem:[#allocation3 + $0x18] sm:$0xff]
        %v1236 = vld [vmem:[#allocation3 + $0x20] sm:$0xff]
        %v1237 = vld [vmem:[#allocation3 + $0x28] sm:$0xff]
        %v1238 = vld [vmem:[#allocation3 + $0x30] sm:$0xff]
        %v1239 = vld [vmem:[#allocation3 + $0x38] sm:$0xff]
        %v1240 = vld [vmem:[#allocation3 + $0x40] sm:$0xff]
        %v1241 = vld [vmem:[#allocation3 + $0x48] sm:$0xff]
        %v1242 = vld [vmem:[#allocation3 + $0x50] sm:$0xff]
        %v1243 = vld [vmem:[#allocation3 + $0x58] sm:$0xff]
        %v1244 = vld [vmem:[#allocation3 + $0x60] sm:$0xff]
        %v1245 = vld [vmem:[#allocation3 + $0x68] sm:$0xff]
        %v1246 = vld [vmem:[#allocation3 + $0x70] sm:$0xff]
        %v1247 = vld [vmem:[#allocation3 + $0x78] sm:$0xff]
        %s1248 = scalar_lea.vmem %s349, 4
        %v1249 = vld [vmem:[%s1248] sm:$0x3]
        %v1250 = vunpack.c.l.b16 %v1179
        %v1251 = vunpack.c.l.b16 %v1182
        %v1252 = vunpack.c.l.b16 %v1186
        %v1253 = vunpack.c.l.b16 %v1189
        %v1254 = vunpack.c.l.b16 %v1193
        %v1255 = vunpack.c.l.b16 %v1196
        %v1256 = vunpack.c.l.b16 %v1200
        %v1257 = vunpack.c.l.b16 %v1203
        %v1258 = vunpack.c.l.b16 %v1207
        %v1259 = vunpack.c.l.b16 %v1210
        %v1260 = vunpack.c.l.b16 %v1214
        %v1261 = vunpack.c.l.b16 %v1217
        %v1262 = vunpack.c.l.b16 %v1221
        %v1263 = vunpack.c.l.b16 %v1224
        %v1264 = vunpack.c.l.b16 %v1228
        %v1265 = vunpack.c.l.b16 %v1231
        %v1266 = vpack.c.b16 %v1251, %v1250
        %v1267 = vpack.c.b16 %v1253, %v1252
        %v1268 = vpack.c.b16 %v1255, %v1254
        %v1269 = vpack.c.b16 %v1257, %v1256
        %v1270 = vpack.c.b16 %v1259, %v1258
        %v1271 = vpack.c.b16 %v1261, %v1260
        %v1272 = vpack.c.b16 %v1263, %v1262
        %v1273 = vpack.c.b16 %v1265, %v1264
        %v1275 = vsel %vm550, %v1266, 0
        %v1278 = vsel %vm550, %v1267, 0
        %v1281 = vsel %vm550, %v1268, 0
        %v1284 = vsel %vm550, %v1269, 0
        %v1287 = vsel %vm550, %v1270, 0
        %v1290 = vsel %vm550, %v1271, 0
        %v1293 = vsel %vm550, %v1272, 0
        %v1296 = vsel %vm550, %v1273, 0
        %v1299 = vsel %vm575, %v1249, 0
        %1301 = vmatprep.subr.bf16.mxu0 0
        %1302 = vmatpush1.bf16.msra.mxu0 0
        %1303 = vmatprep.subr.bf16.mxu0 0
        %1304 = vmatpush1.bf16.msra.mxu0 0
        %1305 = vmatprep.subr.bf16.mxu0 0
        %1306 = vmatpush1.bf16.msra.mxu0 0
        %1307 = vmatprep.subr.bf16.mxu0 0
        %1308 = vmatpush1.bf16.msra.mxu0 0
        %1309 = vmatprep.subr.bf16.mxu0 0
        %1310 = vmatpush1.bf16.msra.mxu0 0
        %1311 = vmatprep.subr.bf16.mxu0 0
        %1312 = vmatpush1.bf16.msra.mxu0 0
        %1313 = vmatprep.subr.bf16.mxu0 0
        %1314 = vmatpush1.bf16.msra.mxu0 0
        %1315 = vmatprep.subr.bf16.mxu0 0
        %1316 = vmatpush1.bf16.msra.mxu0 %v1299
        %1317 = vmatprep.subr.bf16.mxu0 0
        %1318 = vmatpush2.bf16.msra.mxu0 0
        %1319 = vmatprep.subr.bf16.mxu0 0
        %1320 = vmatpush2.bf16.msra.mxu0 0
        %1321 = vmatprep.subr.bf16.mxu0 0
        %1322 = vmatpush2.bf16.msra.mxu0 0
        %1323 = vmatprep.subr.bf16.mxu0 0
        %1324 = vmatpush2.bf16.msra.mxu0 0
        %1325 = vmatprep.subr.bf16.mxu0 0
        %1326 = vmatpush2.bf16.msra.mxu0 0
        %1327 = vmatprep.subr.bf16.mxu0 0
        %1328 = vmatpush2.bf16.msra.mxu0 0
        %1329 = vmatprep.subr.bf16.mxu0 0
        %1330 = vmatpush2.bf16.msra.mxu0 0
        %1331 = vmatprep.subr.bf16.mxu0 0
        %1332 = vmatpush2.bf16.msra.mxu0 0
        %1333 = vmatprep.mubr.bf16.mxu0 0
        %1334 = vmatmul.mubr.bf16.gmra.mxu0 %v1275
        %v1335 = vpop.f32.mrf.mxu0
        %v1336 = vadd.f32 0.0, %v1335
        %v1337 = vpop.f32.mrf.mxu0
        %v1338 = vpop.f32.mrf.mxu0
        %v1339 = vadd.f32 0.0, %v1338
        %v1340 = vpop.f32.mrf.mxu0
        %1341 = vmatprep.mubr.bf16.mxu0 0
        %1342 = vmatmul.mubr.bf16.gmra.mxu0 %v1278
        %v1343 = vpop.f32.mrf.mxu0
        %v1344 = vadd.f32 0.0, %v1343
        %v1345 = vpop.f32.mrf.mxu0
        %v1346 = vpop.f32.mrf.mxu0
        %v1347 = vadd.f32 0.0, %v1346
        %v1348 = vpop.f32.mrf.mxu0
        %1349 = vmatprep.mubr.bf16.mxu0 0
        %1350 = vmatmul.mubr.bf16.gmra.mxu0 %v1281
        %v1351 = vpop.f32.mrf.mxu0
        %v1352 = vadd.f32 0.0, %v1351
        %v1353 = vpop.f32.mrf.mxu0
        %v1354 = vpop.f32.mrf.mxu0
        %v1355 = vadd.f32 0.0, %v1354
        %v1356 = vpop.f32.mrf.mxu0
        %1357 = vmatprep.mubr.bf16.mxu0 0
        %1358 = vmatmul.mubr.bf16.gmra.mxu0 %v1284
        %v1359 = vpop.f32.mrf.mxu0
        %v1360 = vadd.f32 0.0, %v1359
        %v1361 = vpop.f32.mrf.mxu0
        %v1362 = vpop.f32.mrf.mxu0
        %v1363 = vadd.f32 0.0, %v1362
        %v1364 = vpop.f32.mrf.mxu0
        %1365 = vmatprep.mubr.bf16.mxu0 0
        %1366 = vmatmul.mubr.bf16.gmra.mxu0 %v1287
        %v1367 = vpop.f32.mrf.mxu0
        %v1368 = vadd.f32 0.0, %v1367
        %v1369 = vpop.f32.mrf.mxu0
        %v1370 = vpop.f32.mrf.mxu0
        %v1371 = vadd.f32 0.0, %v1370
        %v1372 = vpop.f32.mrf.mxu0
        %1373 = vmatprep.mubr.bf16.mxu0 0
        %1374 = vmatmul.mubr.bf16.gmra.mxu0 %v1290
        %v1375 = vpop.f32.mrf.mxu0
        %v1376 = vadd.f32 0.0, %v1375
        %v1377 = vpop.f32.mrf.mxu0
        %v1378 = vpop.f32.mrf.mxu0
        %v1379 = vadd.f32 0.0, %v1378
        %v1380 = vpop.f32.mrf.mxu0
        %1381 = vmatprep.mubr.bf16.mxu0 0
        %1382 = vmatmul.mubr.bf16.gmra.mxu0 %v1293
        %v1383 = vpop.f32.mrf.mxu0
        %v1384 = vadd.f32 0.0, %v1383
        %v1385 = vpop.f32.mrf.mxu0
        %v1386 = vpop.f32.mrf.mxu0
        %v1387 = vadd.f32 0.0, %v1386
        %v1388 = vpop.f32.mrf.mxu0
        %1389 = vmatprep.mubr.bf16.mxu0 0
        %1390 = vmatmul.mubr.bf16.gmra.mxu0 %v1296
        %v1391 = vpop.f32.mrf.mxu0
        %v1392 = vadd.f32 0.0, %v1391
        %v1393 = vpop.f32.mrf.mxu0
        %v1394 = vpop.f32.mrf.mxu0
        %v1395 = vadd.f32 0.0, %v1394
        %v1396 = vpop.f32.mrf.mxu0
        %1397 = vdwg.mxu0
        %v1398 = vadd.f32 %v1232, %v1336
        %v1399 = vadd.f32 %v1233, %v1339
        %v1400 = vadd.f32 %v1234, %v1344
        %v1401 = vadd.f32 %v1235, %v1347
        %v1402 = vadd.f32 %v1236, %v1352
        %v1403 = vadd.f32 %v1237, %v1355
        %v1404 = vadd.f32 %v1238, %v1360
        %v1405 = vadd.f32 %v1239, %v1363
        %v1406 = vadd.f32 %v1240, %v1368
        %v1407 = vadd.f32 %v1241, %v1371
        %v1408 = vadd.f32 %v1242, %v1376
        %v1409 = vadd.f32 %v1243, %v1379
        %v1410 = vadd.f32 %v1244, %v1384
        %v1411 = vadd.f32 %v1245, %v1387
        %v1412 = vadd.f32 %v1246, %v1392
        %v1413 = vadd.f32 %v1247, %v1395
        %1414 = vst [vmem:[#allocation3] sm:$0xff] %v1398
        %1415 = vst [vmem:[#allocation3 + $0x8] sm:$0xff] %v1399
        %1416 = vst [vmem:[#allocation3 + $0x10] sm:$0xff] %v1400
        %1417 = vst [vmem:[#allocation3 + $0x18] sm:$0xff] %v1401
        %1418 = vst [vmem:[#allocation3 + $0x20] sm:$0xff] %v1402
        %1419 = vst [vmem:[#allocation3 + $0x28] sm:$0xff] %v1403
        %1420 = vst [vmem:[#allocation3 + $0x30] sm:$0xff] %v1404
        %1421 = vst [vmem:[#allocation3 + $0x38] sm:$0xff] %v1405
        %1422 = vst [vmem:[#allocation3 + $0x40] sm:$0xff] %v1406
        %1423 = vst [vmem:[#allocation3 + $0x48] sm:$0xff] %v1407
        %1424 = vst [vmem:[#allocation3 + $0x50] sm:$0xff] %v1408
        %1425 = vst [vmem:[#allocation3 + $0x58] sm:$0xff] %v1409
        %1426 = vst [vmem:[#allocation3 + $0x60] sm:$0xff] %v1410
        %1427 = vst [vmem:[#allocation3 + $0x68] sm:$0xff] %v1411
        %1428 = vst [vmem:[#allocation3 + $0x70] sm:$0xff] %v1412
        %1429 = vst [vmem:[#allocation3 + $0x78] sm:$0xff] %v1413
        %s1430 = scalar_lea.vmem [#allocation2], 12
        %v1431 = vld [vmem:[%s1430] sm:$0xf]
        %v1432 = vld [vmem:[%s1430 + $0x4] sm:$0xf]
        %v1433 = vld [vmem:[%s1430 + $0xc] sm:$0xf]
        %v1434 = vld [vmem:[%s1430 + $0x10] sm:$0xf]
        %v1435 = vld [vmem:[%s1430 + $0x18] sm:$0xf]
        %v1436 = vld [vmem:[%s1430 + $0x1c] sm:$0xf]
        %v1437 = vld [vmem:[%s1430 + $0x24] sm:$0xf]
        %v1438 = vld [vmem:[%s1430 + $0x28] sm:$0xf]
        %v1439 = vld [vmem:[%s1430 + $0x30] sm:$0xf]
        %v1440 = vld [vmem:[%s1430 + $0x34] sm:$0xf]
        %v1441 = vld [vmem:[%s1430 + $0x3c] sm:$0xf]
        %v1442 = vld [vmem:[%s1430 + $0x40] sm:$0xf]
        %v1443 = vld [vmem:[%s1430 + $0x48] sm:$0xf]
        %v1444 = vld [vmem:[%s1430 + $0x4c] sm:$0xf]
        %v1445 = vld [vmem:[%s1430 + $0x54] sm:$0xf]
        %v1446 = vld [vmem:[%s1430 + $0x58] sm:$0xf]
        %v1447 = vld [vmem:[#allocation3] sm:$0xff]
        %v1448 = vld [vmem:[#allocation3 + $0x8] sm:$0xff]
        %v1449 = vld [vmem:[#allocation3 + $0x10] sm:$0xff]
        %v1450 = vld [vmem:[#allocation3 + $0x18] sm:$0xff]
        %v1451 = vld [vmem:[#allocation3 + $0x20] sm:$0xff]
        %v1452 = vld [vmem:[#allocation3 + $0x28] sm:$0xff]
        %v1453 = vld [vmem:[#allocation3 + $0x30] sm:$0xff]
        %v1454 = vld [vmem:[#allocation3 + $0x38] sm:$0xff]
        %v1455 = vld [vmem:[#allocation3 + $0x40] sm:$0xff]
        %v1456 = vld [vmem:[#allocation3 + $0x48] sm:$0xff]
        %v1457 = vld [vmem:[#allocation3 + $0x50] sm:$0xff]
        %v1458 = vld [vmem:[#allocation3 + $0x58] sm:$0xff]
        %v1459 = vld [vmem:[#allocation3 + $0x60] sm:$0xff]
        %v1460 = vld [vmem:[#allocation3 + $0x68] sm:$0xff]
        %v1461 = vld [vmem:[#allocation3 + $0x70] sm:$0xff]
        %v1462 = vld [vmem:[#allocation3 + $0x78] sm:$0xff]
        %s1463 = scalar_lea.vmem %s349, 6
        %v1464 = vld [vmem:[%s1463] sm:$0x3]
        %v1481 = vunpack.c.l.b16 %v1431
        %v1482 = vunpack.c.l.b16 %v1432
        %v1483 = vunpack.c.l.b16 %v1433
        %v1484 = vunpack.c.l.b16 %v1434
        %v1485 = vunpack.c.l.b16 %v1435
        %v1486 = vunpack.c.l.b16 %v1436
        %v1487 = vunpack.c.l.b16 %v1437
        %v1488 = vunpack.c.l.b16 %v1438
        %v1489 = vunpack.c.l.b16 %v1439
        %v1490 = vunpack.c.l.b16 %v1440
        %v1491 = vunpack.c.l.b16 %v1441
        %v1492 = vunpack.c.l.b16 %v1442
        %v1493 = vunpack.c.l.b16 %v1443
        %v1494 = vunpack.c.l.b16 %v1444
        %v1495 = vunpack.c.l.b16 %v1445
        %v1496 = vunpack.c.l.b16 %v1446
        %v1497 = vpack.c.b16 %v1482, %v1481
        %v1498 = vpack.c.b16 %v1484, %v1483
        %v1499 = vpack.c.b16 %v1486, %v1485
        %v1500 = vpack.c.b16 %v1488, %v1487
        %v1501 = vpack.c.b16 %v1490, %v1489
        %v1502 = vpack.c.b16 %v1492, %v1491
        %v1503 = vpack.c.b16 %v1494, %v1493
        %v1504 = vpack.c.b16 %v1496, %v1495
        %v1506 = vsel %vm550, %v1497, 0
        %v1509 = vsel %vm550, %v1498, 0
        %v1512 = vsel %vm550, %v1499, 0
        %v1515 = vsel %vm550, %v1500, 0
        %v1518 = vsel %vm550, %v1501, 0
        %v1521 = vsel %vm550, %v1502, 0
        %v1524 = vsel %vm550, %v1503, 0
        %v1527 = vsel %vm550, %v1504, 0
        %v1530 = vsel %vm575, %v1464, 0
        %1532 = vmatprep.subr.bf16.mxu0 0
        %1533 = vmatpush1.bf16.msra.mxu0 0
        %1534 = vmatprep.subr.bf16.mxu0 0
        %1535 = vmatpush1.bf16.msra.mxu0 0
        %1536 = vmatprep.subr.bf16.mxu0 0
        %1537 = vmatpush1.bf16.msra.mxu0 0
        %1538 = vmatprep.subr.bf16.mxu0 0
        %1539 = vmatpush1.bf16.msra.mxu0 0
        %1540 = vmatprep.subr.bf16.mxu0 0
        %1541 = vmatpush1.bf16.msra.mxu0 0
        %1542 = vmatprep.subr.bf16.mxu0 0
        %1543 = vmatpush1.bf16.msra.mxu0 0
        %1544 = vmatprep.subr.bf16.mxu0 0
        %1545 = vmatpush1.bf16.msra.mxu0 0
        %1546 = vmatprep.subr.bf16.mxu0 0
        %1547 = vmatpush1.bf16.msra.mxu0 %v1530
        %1548 = vmatprep.subr.bf16.mxu0 0
        %1549 = vmatpush2.bf16.msra.mxu0 0
        %1550 = vmatprep.subr.bf16.mxu0 0
        %1551 = vmatpush2.bf16.msra.mxu0 0
        %1552 = vmatprep.subr.bf16.mxu0 0
        %1553 = vmatpush2.bf16.msra.mxu0 0
        %1554 = vmatprep.subr.bf16.mxu0 0
        %1555 = vmatpush2.bf16.msra.mxu0 0
        %1556 = vmatprep.subr.bf16.mxu0 0
        %1557 = vmatpush2.bf16.msra.mxu0 0
        %1558 = vmatprep.subr.bf16.mxu0 0
        %1559 = vmatpush2.bf16.msra.mxu0 0
        %1560 = vmatprep.subr.bf16.mxu0 0
        %1561 = vmatpush2.bf16.msra.mxu0 0
        %1562 = vmatprep.subr.bf16.mxu0 0
        %1563 = vmatpush2.bf16.msra.mxu0 0
        %1564 = vmatprep.mubr.bf16.mxu0 0
        %1565 = vmatmul.mubr.bf16.gmra.mxu0 %v1506
        %v1566 = vpop.f32.mrf.mxu0
        %v1567 = vadd.f32 0.0, %v1566
        %v1568 = vpop.f32.mrf.mxu0
        %v1569 = vpop.f32.mrf.mxu0
        %v1570 = vadd.f32 0.0, %v1569
        %v1571 = vpop.f32.mrf.mxu0
        %1572 = vmatprep.mubr.bf16.mxu0 0
        %1573 = vmatmul.mubr.bf16.gmra.mxu0 %v1509
        %v1574 = vpop.f32.mrf.mxu0
        %v1575 = vadd.f32 0.0, %v1574
        %v1576 = vpop.f32.mrf.mxu0
        %v1577 = vpop.f32.mrf.mxu0
        %v1578 = vadd.f32 0.0, %v1577
        %v1579 = vpop.f32.mrf.mxu0
        %1580 = vmatprep.mubr.bf16.mxu0 0
        %1581 = vmatmul.mubr.bf16.gmra.mxu0 %v1512
        %v1582 = vpop.f32.mrf.mxu0
        %v1583 = vadd.f32 0.0, %v1582
        %v1584 = vpop.f32.mrf.mxu0
        %v1585 = vpop.f32.mrf.mxu0
        %v1586 = vadd.f32 0.0, %v1585
        %v1587 = vpop.f32.mrf.mxu0
        %1588 = vmatprep.mubr.bf16.mxu0 0
        %1589 = vmatmul.mubr.bf16.gmra.mxu0 %v1515
        %v1590 = vpop.f32.mrf.mxu0
        %v1591 = vadd.f32 0.0, %v1590
        %v1592 = vpop.f32.mrf.mxu0
        %v1593 = vpop.f32.mrf.mxu0
        %v1594 = vadd.f32 0.0, %v1593
        %v1595 = vpop.f32.mrf.mxu0
        %1596 = vmatprep.mubr.bf16.mxu0 0
        %1597 = vmatmul.mubr.bf16.gmra.mxu0 %v1518
        %v1598 = vpop.f32.mrf.mxu0
        %v1599 = vadd.f32 0.0, %v1598
        %v1600 = vpop.f32.mrf.mxu0
        %v1601 = vpop.f32.mrf.mxu0
        %v1602 = vadd.f32 0.0, %v1601
        %v1603 = vpop.f32.mrf.mxu0
        %1604 = vmatprep.mubr.bf16.mxu0 0
        %1605 = vmatmul.mubr.bf16.gmra.mxu0 %v1521
        %v1606 = vpop.f32.mrf.mxu0
        %v1607 = vadd.f32 0.0, %v1606
        %v1608 = vpop.f32.mrf.mxu0
        %v1609 = vpop.f32.mrf.mxu0
        %v1610 = vadd.f32 0.0, %v1609
        %v1611 = vpop.f32.mrf.mxu0
        %1612 = vmatprep.mubr.bf16.mxu0 0
        %1613 = vmatmul.mubr.bf16.gmra.mxu0 %v1524
        %v1614 = vpop.f32.mrf.mxu0
        %v1615 = vadd.f32 0.0, %v1614
        %v1616 = vpop.f32.mrf.mxu0
        %v1617 = vpop.f32.mrf.mxu0
        %v1618 = vadd.f32 0.0, %v1617
        %v1619 = vpop.f32.mrf.mxu0
        %1620 = vmatprep.mubr.bf16.mxu0 0
        %1621 = vmatmul.mubr.bf16.gmra.mxu0 %v1527
        %v1622 = vpop.f32.mrf.mxu0
        %v1623 = vadd.f32 0.0, %v1622
        %v1624 = vpop.f32.mrf.mxu0
        %v1625 = vpop.f32.mrf.mxu0
        %v1626 = vadd.f32 0.0, %v1625
        %v1627 = vpop.f32.mrf.mxu0
        %1628 = vdwg.mxu0
        %v1629 = vadd.f32 %v1447, %v1567
        %v1630 = vadd.f32 %v1448, %v1570
        %v1631 = vadd.f32 %v1449, %v1575
        %v1632 = vadd.f32 %v1450, %v1578
        %v1633 = vadd.f32 %v1451, %v1583
        %v1634 = vadd.f32 %v1452, %v1586
        %v1635 = vadd.f32 %v1453, %v1591
        %v1636 = vadd.f32 %v1454, %v1594
        %v1637 = vadd.f32 %v1455, %v1599
        %v1638 = vadd.f32 %v1456, %v1602
        %v1639 = vadd.f32 %v1457, %v1607
        %v1640 = vadd.f32 %v1458, %v1610
        %v1641 = vadd.f32 %v1459, %v1615
        %v1642 = vadd.f32 %v1460, %v1618
        %v1643 = vadd.f32 %v1461, %v1623
        %v1644 = vadd.f32 %v1462, %v1626
        %1645 = vst [vmem:[#allocation3] sm:$0xff] %v1629
        %1646 = vst [vmem:[#allocation3 + $0x8] sm:$0xff] %v1630
        %1647 = vst [vmem:[#allocation3 + $0x10] sm:$0xff] %v1631
        %1648 = vst [vmem:[#allocation3 + $0x18] sm:$0xff] %v1632
        %1649 = vst [vmem:[#allocation3 + $0x20] sm:$0xff] %v1633
        %1650 = vst [vmem:[#allocation3 + $0x28] sm:$0xff] %v1634
        %1651 = vst [vmem:[#allocation3 + $0x30] sm:$0xff] %v1635
        %1652 = vst [vmem:[#allocation3 + $0x38] sm:$0xff] %v1636
        %1653 = vst [vmem:[#allocation3 + $0x40] sm:$0xff] %v1637
        %1654 = vst [vmem:[#allocation3 + $0x48] sm:$0xff] %v1638
        %1655 = vst [vmem:[#allocation3 + $0x50] sm:$0xff] %v1639
        %1656 = vst [vmem:[#allocation3 + $0x58] sm:$0xff] %v1640
        %1657 = vst [vmem:[#allocation3 + $0x60] sm:$0xff] %v1641
        %1658 = vst [vmem:[#allocation3 + $0x68] sm:$0xff] %v1642
        %1659 = vst [vmem:[#allocation3 + $0x70] sm:$0xff] %v1643
        %1660 = vst [vmem:[#allocation3 + $0x78] sm:$0xff] %v1644
        %v1661 = vld [vmem:[%s1430] sm:$0xf]
        %v1662 = vld [vmem:[%s1430 + $0x4] sm:$0xf]
        %v1663 = vld [vmem:[%s1430 + $0x8] sm:$0x1]
        %v1664 = vld [vmem:[%s1430 + $0xc] sm:$0xf]
        %v1665 = vld [vmem:[%s1430 + $0x10] sm:$0xf]
        %v1666 = vld [vmem:[%s1430 + $0x14] sm:$0x1]
        %v1667 = vld [vmem:[%s1430 + $0x18] sm:$0xf]
        %v1668 = vld [vmem:[%s1430 + $0x1c] sm:$0xf]
        %v1669 = vld [vmem:[%s1430 + $0x20] sm:$0x1]
        %v1670 = vld [vmem:[%s1430 + $0x24] sm:$0xf]
        %v1671 = vld [vmem:[%s1430 + $0x28] sm:$0xf]
        %v1672 = vld [vmem:[%s1430 + $0x2c] sm:$0x1]
        %v1673 = vld [vmem:[%s1430 + $0x30] sm:$0xf]
        %v1674 = vld [vmem:[%s1430 + $0x34] sm:$0xf]
        %v1675 = vld [vmem:[%s1430 + $0x38] sm:$0x1]
        %v1676 = vld [vmem:[%s1430 + $0x3c] sm:$0xf]
        %v1677 = vld [vmem:[%s1430 + $0x40] sm:$0xf]
        %v1678 = vld [vmem:[%s1430 + $0x44] sm:$0x1]
        %v1679 = vld [vmem:[%s1430 + $0x48] sm:$0xf]
        %v1680 = vld [vmem:[%s1430 + $0x4c] sm:$0xf]
        %v1681 = vld [vmem:[%s1430 + $0x50] sm:$0x1]
        %v1682 = vld [vmem:[%s1430 + $0x54] sm:$0xf]
        %v1683 = vld [vmem:[%s1430 + $0x58] sm:$0xf]
        %v1684 = vld [vmem:[%s1430 + $0x5c] sm:$0x1]
        %v1686 = vshrl.u32 %v1661, 16
        %v1688 = vrot.slane %v1686, 4
        %v1689 = vshll.u32 %v1661, 16
        %v1691 = vrot.slane %v1689, 5
        %v1692 = vor.u32 %v1688, %v1691
        %v1693 = vrot.slane %v1692, 4
        %v1695 = vshll.u32 %v1662, 16
        %v1697 = vrot.slane %v1695, 5
        %v1698 = vsel %vm734, %v1693, %v1697
        %v1699 = vshrl.u32 %v1662, 16
        %v1701 = vrot.slane %v1699, 4
        %v1702 = vor.u32 %v1701, %v1697
        %v1703 = vrot.slane %v1702, 4
        %v1705 = vshll.u32 %v1663, 16
        %v1707 = vrot.slane %v1705, 5
        %v1708 = vsel %vm734, %v1703, %v1707
        %v1710 = vshrl.u32 %v1664, 16
        %v1712 = vrot.slane %v1710, 4
        %v1713 = vshll.u32 %v1664, 16
        %v1715 = vrot.slane %v1713, 5
        %v1716 = vor.u32 %v1712, %v1715
        %v1717 = vrot.slane %v1716, 4
        %v1719 = vshll.u32 %v1665, 16
        %v1721 = vrot.slane %v1719, 5
        %v1722 = vsel %vm734, %v1717, %v1721
        %v1723 = vshrl.u32 %v1665, 16
        %v1725 = vrot.slane %v1723, 4
        %v1726 = vor.u32 %v1725, %v1721
        %v1727 = vrot.slane %v1726, 4
        %v1729 = vshll.u32 %v1666, 16
        %v1731 = vrot.slane %v1729, 5
        %v1732 = vsel %vm734, %v1727, %v1731
        %v1734 = vshrl.u32 %v1667, 16
        %v1736 = vrot.slane %v1734, 4
        %v1737 = vshll.u32 %v1667, 16
        %v1739 = vrot.slane %v1737, 5
        %v1740 = vor.u32 %v1736, %v1739
        %v1741 = vrot.slane %v1740, 4
        %v1743 = vshll.u32 %v1668, 16
        %v1745 = vrot.slane %v1743, 5
        %v1746 = vsel %vm734, %v1741, %v1745
        %v1747 = vshrl.u32 %v1668, 16
        %v1749 = vrot.slane %v1747, 4
        %v1750 = vor.u32 %v1749, %v1745
        %v1751 = vrot.slane %v1750, 4
        %v1753 = vshll.u32 %v1669, 16
        %v1755 = vrot.slane %v1753, 5
        %v1756 = vsel %vm734, %v1751, %v1755
        %v1758 = vshrl.u32 %v1670, 16
        %v1760 = vrot.slane %v1758, 4
        %v1761 = vshll.u32 %v1670, 16
        %v1763 = vrot.slane %v1761, 5
        %v1764 = vor.u32 %v1760, %v1763
        %v1765 = vrot.slane %v1764, 4
        %v1767 = vshll.u32 %v1671, 16
        %v1769 = vrot.slane %v1767, 5
        %v1770 = vsel %vm734, %v1765, %v1769
        %v1771 = vshrl.u32 %v1671, 16
        %v1773 = vrot.slane %v1771, 4
        %v1774 = vor.u32 %v1773, %v1769
        %v1775 = vrot.slane %v1774, 4
        %v1777 = vshll.u32 %v1672, 16
        %v1779 = vrot.slane %v1777, 5
        %v1780 = vsel %vm734, %v1775, %v1779
        %v1782 = vshrl.u32 %v1673, 16
        %v1784 = vrot.slane %v1782, 4
        %v1785 = vshll.u32 %v1673, 16
        %v1787 = vrot.slane %v1785, 5
        %v1788 = vor.u32 %v1784, %v1787
        %v1789 = vrot.slane %v1788, 4
        %v1791 = vshll.u32 %v1674, 16
        %v1793 = vrot.slane %v1791, 5
        %v1794 = vsel %vm734, %v1789, %v1793
        %v1795 = vshrl.u32 %v1674, 16
        %v1797 = vrot.slane %v1795, 4
        %v1798 = vor.u32 %v1797, %v1793
        %v1799 = vrot.slane %v1798, 4
        %v1801 = vshll.u32 %v1675, 16
        %v1803 = vrot.slane %v1801, 5
        %v1804 = vsel %vm734, %v1799, %v1803
        %v1806 = vshrl.u32 %v1676, 16
        %v1808 = vrot.slane %v1806, 4
        %v1809 = vshll.u32 %v1676, 16
        %v1811 = vrot.slane %v1809, 5
        %v1812 = vor.u32 %v1808, %v1811
        %v1813 = vrot.slane %v1812, 4
        %v1815 = vshll.u32 %v1677, 16
        %v1817 = vrot.slane %v1815, 5
        %v1818 = vsel %vm734, %v1813, %v1817
        %v1819 = vshrl.u32 %v1677, 16
        %v1821 = vrot.slane %v1819, 4
        %v1822 = vor.u32 %v1821, %v1817
        %v1823 = vrot.slane %v1822, 4
        %v1825 = vshll.u32 %v1678, 16
        %v1827 = vrot.slane %v1825, 5
        %v1828 = vsel %vm734, %v1823, %v1827
        %v1830 = vshrl.u32 %v1679, 16
        %v1832 = vrot.slane %v1830, 4
        %v1833 = vshll.u32 %v1679, 16
        %v1835 = vrot.slane %v1833, 5
        %v1836 = vor.u32 %v1832, %v1835
        %v1837 = vrot.slane %v1836, 4
        %v1839 = vshll.u32 %v1680, 16
        %v1841 = vrot.slane %v1839, 5
        %v1842 = vsel %vm734, %v1837, %v1841
        %v1843 = vshrl.u32 %v1680, 16
        %v1845 = vrot.slane %v1843, 4
        %v1846 = vor.u32 %v1845, %v1841
        %v1847 = vrot.slane %v1846, 4
        %v1849 = vshll.u32 %v1681, 16
        %v1851 = vrot.slane %v1849, 5
        %v1852 = vsel %vm734, %v1847, %v1851
        %v1854 = vshrl.u32 %v1682, 16
        %v1856 = vrot.slane %v1854, 4
        %v1857 = vshll.u32 %v1682, 16
        %v1859 = vrot.slane %v1857, 5
        %v1860 = vor.u32 %v1856, %v1859
        %v1861 = vrot.slane %v1860, 4
        %v1863 = vshll.u32 %v1683, 16
        %v1865 = vrot.slane %v1863, 5
        %v1866 = vsel %vm734, %v1861, %v1865
        %v1867 = vshrl.u32 %v1683, 16
        %v1869 = vrot.slane %v1867, 4
        %v1870 = vor.u32 %v1869, %v1865
        %v1871 = vrot.slane %v1870, 4
        %v1873 = vshll.u32 %v1684, 16
        %v1875 = vrot.slane %v1873, 5
        %v1876 = vsel %vm734, %v1871, %v1875
        %v1877 = vld [vmem:[#allocation3] sm:$0xff]
        %v1878 = vld [vmem:[#allocation3 + $0x8] sm:$0xff]
        %v1879 = vld [vmem:[#allocation3 + $0x10] sm:$0xff]
        %v1880 = vld [vmem:[#allocation3 + $0x18] sm:$0xff]
        %v1881 = vld [vmem:[#allocation3 + $0x20] sm:$0xff]
        %v1882 = vld [vmem:[#allocation3 + $0x28] sm:$0xff]
        %v1883 = vld [vmem:[#allocation3 + $0x30] sm:$0xff]
        %v1884 = vld [vmem:[#allocation3 + $0x38] sm:$0xff]
        %v1885 = vld [vmem:[#allocation3 + $0x40] sm:$0xff]
        %v1886 = vld [vmem:[#allocation3 + $0x48] sm:$0xff]
        %v1887 = vld [vmem:[#allocation3 + $0x50] sm:$0xff]
        %v1888 = vld [vmem:[#allocation3 + $0x58] sm:$0xff]
        %v1889 = vld [vmem:[#allocation3 + $0x60] sm:$0xff]
        %v1890 = vld [vmem:[#allocation3 + $0x68] sm:$0xff]
        %v1891 = vld [vmem:[#allocation3 + $0x70] sm:$0xff]
        %v1892 = vld [vmem:[#allocation3 + $0x78] sm:$0xff]
        %s1893 = scalar_lea.vmem %s349, 8
        %v1894 = vld [vmem:[%s1893] sm:$0x3]
        %v1895 = vunpack.c.l.b16 %v1698
        %v1896 = vunpack.c.l.b16 %v1708
        %v1897 = vunpack.c.l.b16 %v1722
        %v1898 = vunpack.c.l.b16 %v1732
        %v1899 = vunpack.c.l.b16 %v1746
        %v1900 = vunpack.c.l.b16 %v1756
        %v1901 = vunpack.c.l.b16 %v1770
        %v1902 = vunpack.c.l.b16 %v1780
        %v1903 = vunpack.c.l.b16 %v1794
        %v1904 = vunpack.c.l.b16 %v1804
        %v1905 = vunpack.c.l.b16 %v1818
        %v1906 = vunpack.c.l.b16 %v1828
        %v1907 = vunpack.c.l.b16 %v1842
        %v1908 = vunpack.c.l.b16 %v1852
        %v1909 = vunpack.c.l.b16 %v1866
        %v1910 = vunpack.c.l.b16 %v1876
        %v1911 = vpack.c.b16 %v1896, %v1895
        %v1912 = vpack.c.b16 %v1898, %v1897
        %v1913 = vpack.c.b16 %v1900, %v1899
        %v1914 = vpack.c.b16 %v1902, %v1901
        %v1915 = vpack.c.b16 %v1904, %v1903
        %v1916 = vpack.c.b16 %v1906, %v1905
        %v1917 = vpack.c.b16 %v1908, %v1907
        %v1918 = vpack.c.b16 %v1910, %v1909
        %v1920 = vsel %vm550, %v1911, 0
        %v1923 = vsel %vm550, %v1912, 0
        %v1926 = vsel %vm550, %v1913, 0
        %v1929 = vsel %vm550, %v1914, 0
        %v1932 = vsel %vm550, %v1915, 0
        %v1935 = vsel %vm550, %v1916, 0
        %v1938 = vsel %vm550, %v1917, 0
        %v1941 = vsel %vm550, %v1918, 0
        %v1944 = vsel %vm575, %v1894, 0
        %1946 = vmatprep.subr.bf16.mxu0 0
        %1947 = vmatpush1.bf16.msra.mxu0 0
        %1948 = vmatprep.subr.bf16.mxu0 0
        %1949 = vmatpush1.bf16.msra.mxu0 0
        %1950 = vmatprep.subr.bf16.mxu0 0
        %1951 = vmatpush1.bf16.msra.mxu0 0
        %1952 = vmatprep.subr.bf16.mxu0 0
        %1953 = vmatpush1.bf16.msra.mxu0 0
        %1954 = vmatprep.subr.bf16.mxu0 0
        %1955 = vmatpush1.bf16.msra.mxu0 0
        %1956 = vmatprep.subr.bf16.mxu0 0
        %1957 = vmatpush1.bf16.msra.mxu0 0
        %1958 = vmatprep.subr.bf16.mxu0 0
        %1959 = vmatpush1.bf16.msra.mxu0 0
        %1960 = vmatprep.subr.bf16.mxu0 0
        %1961 = vmatpush1.bf16.msra.mxu0 %v1944
        %1962 = vmatprep.subr.bf16.mxu0 0
        %1963 = vmatpush2.bf16.msra.mxu0 0
        %1964 = vmatprep.subr.bf16.mxu0 0
        %1965 = vmatpush2.bf16.msra.mxu0 0
        %1966 = vmatprep.subr.bf16.mxu0 0
        %1967 = vmatpush2.bf16.msra.mxu0 0
        %1968 = vmatprep.subr.bf16.mxu0 0
        %1969 = vmatpush2.bf16.msra.mxu0 0
        %1970 = vmatprep.subr.bf16.mxu0 0
        %1971 = vmatpush2.bf16.msra.mxu0 0
        %1972 = vmatprep.subr.bf16.mxu0 0
        %1973 = vmatpush2.bf16.msra.mxu0 0
        %1974 = vmatprep.subr.bf16.mxu0 0
        %1975 = vmatpush2.bf16.msra.mxu0 0
        %1976 = vmatprep.subr.bf16.mxu0 0
        %1977 = vmatpush2.bf16.msra.mxu0 0
        %1978 = vmatprep.mubr.bf16.mxu0 0
        %1979 = vmatmul.mubr.bf16.gmra.mxu0 %v1920
        %v1980 = vpop.f32.mrf.mxu0
        %v1981 = vadd.f32 0.0, %v1980
        %v1982 = vpop.f32.mrf.mxu0
        %v1983 = vpop.f32.mrf.mxu0
        %v1984 = vadd.f32 0.0, %v1983
        %v1985 = vpop.f32.mrf.mxu0
        %1986 = vmatprep.mubr.bf16.mxu0 0
        %1987 = vmatmul.mubr.bf16.gmra.mxu0 %v1923
        %v1988 = vpop.f32.mrf.mxu0
        %v1989 = vadd.f32 0.0, %v1988
        %v1990 = vpop.f32.mrf.mxu0
        %v1991 = vpop.f32.mrf.mxu0
        %v1992 = vadd.f32 0.0, %v1991
        %v1993 = vpop.f32.mrf.mxu0
        %1994 = vmatprep.mubr.bf16.mxu0 0
        %1995 = vmatmul.mubr.bf16.gmra.mxu0 %v1926
        %v1996 = vpop.f32.mrf.mxu0
        %v1997 = vadd.f32 0.0, %v1996
        %v1998 = vpop.f32.mrf.mxu0
        %v1999 = vpop.f32.mrf.mxu0
        %v2000 = vadd.f32 0.0, %v1999
        %v2001 = vpop.f32.mrf.mxu0
        %2002 = vmatprep.mubr.bf16.mxu0 0
        %2003 = vmatmul.mubr.bf16.gmra.mxu0 %v1929
        %v2004 = vpop.f32.mrf.mxu0
        %v2005 = vadd.f32 0.0, %v2004
        %v2006 = vpop.f32.mrf.mxu0
        %v2007 = vpop.f32.mrf.mxu0
        %v2008 = vadd.f32 0.0, %v2007
        %v2009 = vpop.f32.mrf.mxu0
        %2010 = vmatprep.mubr.bf16.mxu0 0
        %2011 = vmatmul.mubr.bf16.gmra.mxu0 %v1932
        %v2012 = vpop.f32.mrf.mxu0
        %v2013 = vadd.f32 0.0, %v2012
        %v2014 = vpop.f32.mrf.mxu0
        %v2015 = vpop.f32.mrf.mxu0
        %v2016 = vadd.f32 0.0, %v2015
        %v2017 = vpop.f32.mrf.mxu0
        %2018 = vmatprep.mubr.bf16.mxu0 0
        %2019 = vmatmul.mubr.bf16.gmra.mxu0 %v1935
        %v2020 = vpop.f32.mrf.mxu0
        %v2021 = vadd.f32 0.0, %v2020
        %v2022 = vpop.f32.mrf.mxu0
        %v2023 = vpop.f32.mrf.mxu0
        %v2024 = vadd.f32 0.0, %v2023
        %v2025 = vpop.f32.mrf.mxu0
        %2026 = vmatprep.mubr.bf16.mxu0 0
        %2027 = vmatmul.mubr.bf16.gmra.mxu0 %v1938
        %v2028 = vpop.f32.mrf.mxu0
        %v2029 = vadd.f32 0.0, %v2028
        %v2030 = vpop.f32.mrf.mxu0
        %v2031 = vpop.f32.mrf.mxu0
        %v2032 = vadd.f32 0.0, %v2031
        %v2033 = vpop.f32.mrf.mxu0
        %2034 = vmatprep.mubr.bf16.mxu0 0
        %2035 = vmatmul.mubr.bf16.gmra.mxu0 %v1941
        %v2036 = vpop.f32.mrf.mxu0
        %v2037 = vadd.f32 0.0, %v2036
        %v2038 = vpop.f32.mrf.mxu0
        %v2039 = vpop.f32.mrf.mxu0
        %v2040 = vadd.f32 0.0, %v2039
        %v2041 = vpop.f32.mrf.mxu0
        %2042 = vdwg.mxu0
        %v2043 = vadd.f32 %v1877, %v1981
        %v2044 = vadd.f32 %v1878, %v1984
        %v2045 = vadd.f32 %v1879, %v1989
        %v2046 = vadd.f32 %v1880, %v1992
        %v2047 = vadd.f32 %v1881, %v1997
        %v2048 = vadd.f32 %v1882, %v2000
        %v2049 = vadd.f32 %v1883, %v2005
        %v2050 = vadd.f32 %v1884, %v2008
        %v2051 = vadd.f32 %v1885, %v2013
        %v2052 = vadd.f32 %v1886, %v2016
        %v2053 = vadd.f32 %v1887, %v2021
        %v2054 = vadd.f32 %v1888, %v2024
        %v2055 = vadd.f32 %v1889, %v2029
        %v2056 = vadd.f32 %v1890, %v2032
        %v2057 = vadd.f32 %v1891, %v2037
        %v2058 = vadd.f32 %v1892, %v2040
        %2059 = vst [vmem:[#allocation3] sm:$0xff] %v2043
        %2060 = vst [vmem:[#allocation3 + $0x8] sm:$0xff] %v2044
        %2061 = vst [vmem:[#allocation3 + $0x10] sm:$0xff] %v2045
        %2062 = vst [vmem:[#allocation3 + $0x18] sm:$0xff] %v2046
        %2063 = vst [vmem:[#allocation3 + $0x20] sm:$0xff] %v2047
        %2064 = vst [vmem:[#allocation3 + $0x28] sm:$0xff] %v2048
        %2065 = vst [vmem:[#allocation3 + $0x30] sm:$0xff] %v2049
        %2066 = vst [vmem:[#allocation3 + $0x38] sm:$0xff] %v2050
        %2067 = vst [vmem:[#allocation3 + $0x40] sm:$0xff] %v2051
        %2068 = vst [vmem:[#allocation3 + $0x48] sm:$0xff] %v2052
        %2069 = vst [vmem:[#allocation3 + $0x50] sm:$0xff] %v2053
        %2070 = vst [vmem:[#allocation3 + $0x58] sm:$0xff] %v2054
        %2071 = vst [vmem:[#allocation3 + $0x60] sm:$0xff] %v2055
        %2072 = vst [vmem:[#allocation3 + $0x68] sm:$0xff] %v2056
        %2073 = vst [vmem:[#allocation3 + $0x70] sm:$0xff] %v2057
        %2074 = vst [vmem:[#allocation3 + $0x78] sm:$0xff] %v2058
        %v2075 = vld [vmem:[%s1430] sm:$0xe]
        %v2076 = vld [vmem:[%s1430 + $0x4] sm:$0xf]
        %v2077 = vld [vmem:[%s1430 + $0x8] sm:$0x1]
        %v2078 = vld [vmem:[%s1430 + $0xc] sm:$0xe]
        %v2079 = vld [vmem:[%s1430 + $0x10] sm:$0xf]
        %v2080 = vld [vmem:[%s1430 + $0x14] sm:$0x1]
        %v2081 = vld [vmem:[%s1430 + $0x18] sm:$0xe]
        %v2082 = vld [vmem:[%s1430 + $0x1c] sm:$0xf]
        %v2083 = vld [vmem:[%s1430 + $0x20] sm:$0x1]
        %v2084 = vld [vmem:[%s1430 + $0x24] sm:$0xe]
        %v2085 = vld [vmem:[%s1430 + $0x28] sm:$0xf]
        %v2086 = vld [vmem:[%s1430 + $0x2c] sm:$0x1]
        %v2087 = vld [vmem:[%s1430 + $0x30] sm:$0xe]
        %v2088 = vld [vmem:[%s1430 + $0x34] sm:$0xf]
        %v2089 = vld [vmem:[%s1430 + $0x38] sm:$0x1]
        %v2090 = vld [vmem:[%s1430 + $0x3c] sm:$0xe]
        %v2091 = vld [vmem:[%s1430 + $0x40] sm:$0xf]
        %v2092 = vld [vmem:[%s1430 + $0x44] sm:$0x1]
        %v2093 = vld [vmem:[%s1430 + $0x48] sm:$0xe]
        %v2094 = vld [vmem:[%s1430 + $0x4c] sm:$0xf]
        %v2095 = vld [vmem:[%s1430 + $0x50] sm:$0x1]
        %v2096 = vld [vmem:[%s1430 + $0x54] sm:$0xe]
        %v2097 = vld [vmem:[%s1430 + $0x58] sm:$0xf]
        %v2098 = vld [vmem:[%s1430 + $0x5c] sm:$0x1]
        %v2123 = vrot.slane %v2075, 5
        %v2124 = vrot.slane %v2123, 4
        %v2125 = vrot.slane %v2076, 5
        %v2126 = vsel %vm1175, %v2124, %v2125
        %v2127 = vrot.slane %v2125, 4
        %v2128 = vrot.slane %v2077, 5
        %v2129 = vsel %vm1175, %v2127, %v2128
        %v2130 = vrot.slane %v2078, 5
        %v2131 = vrot.slane %v2130, 4
        %v2132 = vrot.slane %v2079, 5
        %v2133 = vsel %vm1175, %v2131, %v2132
        %v2134 = vrot.slane %v2132, 4
        %v2135 = vrot.slane %v2080, 5
        %v2136 = vsel %vm1175, %v2134, %v2135
        %v2137 = vrot.slane %v2081, 5
        %v2138 = vrot.slane %v2137, 4
        %v2139 = vrot.slane %v2082, 5
        %v2140 = vsel %vm1175, %v2138, %v2139
        %v2141 = vrot.slane %v2139, 4
        %v2142 = vrot.slane %v2083, 5
        %v2143 = vsel %vm1175, %v2141, %v2142
        %v2144 = vrot.slane %v2084, 5
        %v2145 = vrot.slane %v2144, 4
        %v2146 = vrot.slane %v2085, 5
        %v2147 = vsel %vm1175, %v2145, %v2146
        %v2148 = vrot.slane %v2146, 4
        %v2149 = vrot.slane %v2086, 5
        %v2150 = vsel %vm1175, %v2148, %v2149
        %v2151 = vrot.slane %v2087, 5
        %v2152 = vrot.slane %v2151, 4
        %v2153 = vrot.slane %v2088, 5
        %v2154 = vsel %vm1175, %v2152, %v2153
        %v2155 = vrot.slane %v2153, 4
        %v2156 = vrot.slane %v2089, 5
        %v2157 = vsel %vm1175, %v2155, %v2156
        %v2158 = vrot.slane %v2090, 5
        %v2159 = vrot.slane %v2158, 4
        %v2160 = vrot.slane %v2091, 5
        %v2161 = vsel %vm1175, %v2159, %v2160
        %v2162 = vrot.slane %v2160, 4
        %v2163 = vrot.slane %v2092, 5
        %v2164 = vsel %vm1175, %v2162, %v2163
        %v2165 = vrot.slane %v2093, 5
        %v2166 = vrot.slane %v2165, 4
        %v2167 = vrot.slane %v2094, 5
        %v2168 = vsel %vm1175, %v2166, %v2167
        %v2169 = vrot.slane %v2167, 4
        %v2170 = vrot.slane %v2095, 5
        %v2171 = vsel %vm1175, %v2169, %v2170
        %v2172 = vrot.slane %v2096, 5
        %v2173 = vrot.slane %v2172, 4
        %v2174 = vrot.slane %v2097, 5
        %v2175 = vsel %vm1175, %v2173, %v2174
        %v2176 = vrot.slane %v2174, 4
        %v2177 = vrot.slane %v2098, 5
        %v2178 = vsel %vm1175, %v2176, %v2177
        %v2179 = vld [vmem:[#allocation3] sm:$0xff]
        %v2180 = vld [vmem:[#allocation3 + $0x8] sm:$0xff]
        %v2181 = vld [vmem:[#allocation3 + $0x10] sm:$0xff]
        %v2182 = vld [vmem:[#allocation3 + $0x18] sm:$0xff]
        %v2183 = vld [vmem:[#allocation3 + $0x20] sm:$0xff]
        %v2184 = vld [vmem:[#allocation3 + $0x28] sm:$0xff]
        %v2185 = vld [vmem:[#allocation3 + $0x30] sm:$0xff]
        %v2186 = vld [vmem:[#allocation3 + $0x38] sm:$0xff]
        %v2187 = vld [vmem:[#allocation3 + $0x40] sm:$0xff]
        %v2188 = vld [vmem:[#allocation3 + $0x48] sm:$0xff]
        %v2189 = vld [vmem:[#allocation3 + $0x50] sm:$0xff]
        %v2190 = vld [vmem:[#allocation3 + $0x58] sm:$0xff]
        %v2191 = vld [vmem:[#allocation3 + $0x60] sm:$0xff]
        %v2192 = vld [vmem:[#allocation3 + $0x68] sm:$0xff]
        %v2193 = vld [vmem:[#allocation3 + $0x70] sm:$0xff]
        %v2194 = vld [vmem:[#allocation3 + $0x78] sm:$0xff]
        %s2195 = scalar_lea.vmem %s349, 10
        %v2196 = vld [vmem:[%s2195] sm:$0x3]
        %v2197 = vunpack.c.l.b16 %v2126
        %v2198 = vunpack.c.l.b16 %v2129
        %v2199 = vunpack.c.l.b16 %v2133
        %v2200 = vunpack.c.l.b16 %v2136
        %v2201 = vunpack.c.l.b16 %v2140
        %v2202 = vunpack.c.l.b16 %v2143
        %v2203 = vunpack.c.l.b16 %v2147
        %v2204 = vunpack.c.l.b16 %v2150
        %v2205 = vunpack.c.l.b16 %v2154
        %v2206 = vunpack.c.l.b16 %v2157
        %v2207 = vunpack.c.l.b16 %v2161
        %v2208 = vunpack.c.l.b16 %v2164
        %v2209 = vunpack.c.l.b16 %v2168
        %v2210 = vunpack.c.l.b16 %v2171
        %v2211 = vunpack.c.l.b16 %v2175
        %v2212 = vunpack.c.l.b16 %v2178
        %v2213 = vpack.c.b16 %v2198, %v2197
        %v2214 = vpack.c.b16 %v2200, %v2199
        %v2215 = vpack.c.b16 %v2202, %v2201
        %v2216 = vpack.c.b16 %v2204, %v2203
        %v2217 = vpack.c.b16 %v2206, %v2205
        %v2218 = vpack.c.b16 %v2208, %v2207
        %v2219 = vpack.c.b16 %v2210, %v2209
        %v2220 = vpack.c.b16 %v2212, %v2211
        %v2222 = vsel %vm550, %v2213, 0
        %v2225 = vsel %vm550, %v2214, 0
        %v2228 = vsel %vm550, %v2215, 0
        %v2231 = vsel %vm550, %v2216, 0
        %v2234 = vsel %vm550, %v2217, 0
        %v2237 = vsel %vm550, %v2218, 0
        %v2240 = vsel %vm550, %v2219, 0
        %v2243 = vsel %vm550, %v2220, 0
        %v2246 = vsel %vm575, %v2196, 0
        %2248 = vmatprep.subr.bf16.mxu0 0
        %2249 = vmatpush1.bf16.msra.mxu0 0
        %2250 = vmatprep.subr.bf16.mxu0 0
        %2251 = vmatpush1.bf16.msra.mxu0 0
        %2252 = vmatprep.subr.bf16.mxu0 0
        %2253 = vmatpush1.bf16.msra.mxu0 0
        %2254 = vmatprep.subr.bf16.mxu0 0
        %2255 = vmatpush1.bf16.msra.mxu0 0
        %2256 = vmatprep.subr.bf16.mxu0 0
        %2257 = vmatpush1.bf16.msra.mxu0 0
        %2258 = vmatprep.subr.bf16.mxu0 0
        %2259 = vmatpush1.bf16.msra.mxu0 0
        %2260 = vmatprep.subr.bf16.mxu0 0
        %2261 = vmatpush1.bf16.msra.mxu0 0
        %2262 = vmatprep.subr.bf16.mxu0 0
        %2263 = vmatpush1.bf16.msra.mxu0 %v2246
        %2264 = vmatprep.subr.bf16.mxu0 0
        %2265 = vmatpush2.bf16.msra.mxu0 0
        %2266 = vmatprep.subr.bf16.mxu0 0
        %2267 = vmatpush2.bf16.msra.mxu0 0
        %2268 = vmatprep.subr.bf16.mxu0 0
        %2269 = vmatpush2.bf16.msra.mxu0 0
        %2270 = vmatprep.subr.bf16.mxu0 0
        %2271 = vmatpush2.bf16.msra.mxu0 0
        %2272 = vmatprep.subr.bf16.mxu0 0
        %2273 = vmatpush2.bf16.msra.mxu0 0
        %2274 = vmatprep.subr.bf16.mxu0 0
        %2275 = vmatpush2.bf16.msra.mxu0 0
        %2276 = vmatprep.subr.bf16.mxu0 0
        %2277 = vmatpush2.bf16.msra.mxu0 0
        %2278 = vmatprep.subr.bf16.mxu0 0
        %2279 = vmatpush2.bf16.msra.mxu0 0
        %2280 = vmatprep.mubr.bf16.mxu0 0
        %2281 = vmatmul.mubr.bf16.gmra.mxu0 %v2222
        %v2282 = vpop.f32.mrf.mxu0
        %v2283 = vadd.f32 0.0, %v2282
        %v2284 = vpop.f32.mrf.mxu0
        %v2285 = vpop.f32.mrf.mxu0
        %v2286 = vadd.f32 0.0, %v2285
        %v2287 = vpop.f32.mrf.mxu0
        %2288 = vmatprep.mubr.bf16.mxu0 0
        %2289 = vmatmul.mubr.bf16.gmra.mxu0 %v2225
        %v2290 = vpop.f32.mrf.mxu0
        %v2291 = vadd.f32 0.0, %v2290
        %v2292 = vpop.f32.mrf.mxu0
        %v2293 = vpop.f32.mrf.mxu0
        %v2294 = vadd.f32 0.0, %v2293
        %v2295 = vpop.f32.mrf.mxu0
        %2296 = vmatprep.mubr.bf16.mxu0 0
        %2297 = vmatmul.mubr.bf16.gmra.mxu0 %v2228
        %v2298 = vpop.f32.mrf.mxu0
        %v2299 = vadd.f32 0.0, %v2298
        %v2300 = vpop.f32.mrf.mxu0
        %v2301 = vpop.f32.mrf.mxu0
        %v2302 = vadd.f32 0.0, %v2301
        %v2303 = vpop.f32.mrf.mxu0
        %2304 = vmatprep.mubr.bf16.mxu0 0
        %2305 = vmatmul.mubr.bf16.gmra.mxu0 %v2231
        %v2306 = vpop.f32.mrf.mxu0
        %v2307 = vadd.f32 0.0, %v2306
        %v2308 = vpop.f32.mrf.mxu0
        %v2309 = vpop.f32.mrf.mxu0
        %v2310 = vadd.f32 0.0, %v2309
        %v2311 = vpop.f32.mrf.mxu0
        %2312 = vmatprep.mubr.bf16.mxu0 0
        %2313 = vmatmul.mubr.bf16.gmra.mxu0 %v2234
        %v2314 = vpop.f32.mrf.mxu0
        %v2315 = vadd.f32 0.0, %v2314
        %v2316 = vpop.f32.mrf.mxu0
        %v2317 = vpop.f32.mrf.mxu0
        %v2318 = vadd.f32 0.0, %v2317
        %v2319 = vpop.f32.mrf.mxu0
        %2320 = vmatprep.mubr.bf16.mxu0 0
        %2321 = vmatmul.mubr.bf16.gmra.mxu0 %v2237
        %v2322 = vpop.f32.mrf.mxu0
        %v2323 = vadd.f32 0.0, %v2322
        %v2324 = vpop.f32.mrf.mxu0
        %v2325 = vpop.f32.mrf.mxu0
        %v2326 = vadd.f32 0.0, %v2325
        %v2327 = vpop.f32.mrf.mxu0
        %2328 = vmatprep.mubr.bf16.mxu0 0
        %2329 = vmatmul.mubr.bf16.gmra.mxu0 %v2240
        %v2330 = vpop.f32.mrf.mxu0
        %v2331 = vadd.f32 0.0, %v2330
        %v2332 = vpop.f32.mrf.mxu0
        %v2333 = vpop.f32.mrf.mxu0
        %v2334 = vadd.f32 0.0, %v2333
        %v2335 = vpop.f32.mrf.mxu0
        %2336 = vmatprep.mubr.bf16.mxu0 0
        %2337 = vmatmul.mubr.bf16.gmra.mxu0 %v2243
        %v2338 = vpop.f32.mrf.mxu0
        %v2339 = vadd.f32 0.0, %v2338
        %v2340 = vpop.f32.mrf.mxu0
        %v2341 = vpop.f32.mrf.mxu0
        %v2342 = vadd.f32 0.0, %v2341
        %v2343 = vpop.f32.mrf.mxu0
        %2344 = vdwg.mxu0
        %v2345 = vadd.f32 %v2179, %v2283
        %v2346 = vadd.f32 %v2180, %v2286
        %v2347 = vadd.f32 %v2181, %v2291
        %v2348 = vadd.f32 %v2182, %v2294
        %v2349 = vadd.f32 %v2183, %v2299
        %v2350 = vadd.f32 %v2184, %v2302
        %v2351 = vadd.f32 %v2185, %v2307
        %v2352 = vadd.f32 %v2186, %v2310
        %v2353 = vadd.f32 %v2187, %v2315
        %v2354 = vadd.f32 %v2188, %v2318
        %v2355 = vadd.f32 %v2189, %v2323
        %v2356 = vadd.f32 %v2190, %v2326
        %v2357 = vadd.f32 %v2191, %v2331
        %v2358 = vadd.f32 %v2192, %v2334
        %v2359 = vadd.f32 %v2193, %v2339
        %v2360 = vadd.f32 %v2194, %v2342
        %2361 = vst [vmem:[#allocation3] sm:$0xff] %v2345
        %2362 = vst [vmem:[#allocation3 + $0x8] sm:$0xff] %v2346
        %2363 = vst [vmem:[#allocation3 + $0x10] sm:$0xff] %v2347
        %2364 = vst [vmem:[#allocation3 + $0x18] sm:$0xff] %v2348
        %2365 = vst [vmem:[#allocation3 + $0x20] sm:$0xff] %v2349
        %2366 = vst [vmem:[#allocation3 + $0x28] sm:$0xff] %v2350
        %2367 = vst [vmem:[#allocation3 + $0x30] sm:$0xff] %v2351
        %2368 = vst [vmem:[#allocation3 + $0x38] sm:$0xff] %v2352
        %2369 = vst [vmem:[#allocation3 + $0x40] sm:$0xff] %v2353
        %2370 = vst [vmem:[#allocation3 + $0x48] sm:$0xff] %v2354
        %2371 = vst [vmem:[#allocation3 + $0x50] sm:$0xff] %v2355
        %2372 = vst [vmem:[#allocation3 + $0x58] sm:$0xff] %v2356
        %2373 = vst [vmem:[#allocation3 + $0x60] sm:$0xff] %v2357
        %2374 = vst [vmem:[#allocation3 + $0x68] sm:$0xff] %v2358
        %2375 = vst [vmem:[#allocation3 + $0x70] sm:$0xff] %v2359
        %2376 = vst [vmem:[#allocation3 + $0x78] sm:$0xff] %v2360
        %s2377 = scalar_lea.vmem [#allocation2], 24
        %v2378 = vld [vmem:[%s2377] sm:$0xf]
        %v2379 = vld [vmem:[%s2377 + $0x4] sm:$0xf]
        %v2380 = vld [vmem:[%s2377 + $0xc] sm:$0xf]
        %v2381 = vld [vmem:[%s2377 + $0x10] sm:$0xf]
        %v2382 = vld [vmem:[%s2377 + $0x18] sm:$0xf]
        %v2383 = vld [vmem:[%s2377 + $0x1c] sm:$0xf]
        %v2384 = vld [vmem:[%s2377 + $0x24] sm:$0xf]
        %v2385 = vld [vmem:[%s2377 + $0x28] sm:$0xf]
        %v2386 = vld [vmem:[%s2377 + $0x30] sm:$0xf]
        %v2387 = vld [vmem:[%s2377 + $0x34] sm:$0xf]
        %v2388 = vld [vmem:[%s2377 + $0x3c] sm:$0xf]
        %v2389 = vld [vmem:[%s2377 + $0x40] sm:$0xf]
        %v2390 = vld [vmem:[%s2377 + $0x48] sm:$0xf]
        %v2391 = vld [vmem:[%s2377 + $0x4c] sm:$0xf]
        %v2392 = vld [vmem:[%s2377 + $0x54] sm:$0xf]
        %v2393 = vld [vmem:[%s2377 + $0x58] sm:$0xf]
        %v2394 = vld [vmem:[#allocation3] sm:$0xff]
        %v2395 = vld [vmem:[#allocation3 + $0x8] sm:$0xff]
        %v2396 = vld [vmem:[#allocation3 + $0x10] sm:$0xff]
        %v2397 = vld [vmem:[#allocation3 + $0x18] sm:$0xff]
        %v2398 = vld [vmem:[#allocation3 + $0x20] sm:$0xff]
        %v2399 = vld [vmem:[#allocation3 + $0x28] sm:$0xff]
        %v2400 = vld [vmem:[#allocation3 + $0x30] sm:$0xff]
        %v2401 = vld [vmem:[#allocation3 + $0x38] sm:$0xff]
        %v2402 = vld [vmem:[#allocation3 + $0x40] sm:$0xff]
        %v2403 = vld [vmem:[#allocation3 + $0x48] sm:$0xff]
        %v2404 = vld [vmem:[#allocation3 + $0x50] sm:$0xff]
        %v2405 = vld [vmem:[#allocation3 + $0x58] sm:$0xff]
        %v2406 = vld [vmem:[#allocation3 + $0x60] sm:$0xff]
        %v2407 = vld [vmem:[#allocation3 + $0x68] sm:$0xff]
        %v2408 = vld [vmem:[#allocation3 + $0x70] sm:$0xff]
        %v2409 = vld [vmem:[#allocation3 + $0x78] sm:$0xff]
        %s2410 = scalar_lea.vmem %s349, 12
        %v2411 = vld [vmem:[%s2410] sm:$0x3]
        %v2428 = vunpack.c.l.b16 %v2378
        %v2429 = vunpack.c.l.b16 %v2379
        %v2430 = vunpack.c.l.b16 %v2380
        %v2431 = vunpack.c.l.b16 %v2381
        %v2432 = vunpack.c.l.b16 %v2382
        %v2433 = vunpack.c.l.b16 %v2383
        %v2434 = vunpack.c.l.b16 %v2384
        %v2435 = vunpack.c.l.b16 %v2385
        %v2436 = vunpack.c.l.b16 %v2386
        %v2437 = vunpack.c.l.b16 %v2387
        %v2438 = vunpack.c.l.b16 %v2388
        %v2439 = vunpack.c.l.b16 %v2389
        %v2440 = vunpack.c.l.b16 %v2390
        %v2441 = vunpack.c.l.b16 %v2391
        %v2442 = vunpack.c.l.b16 %v2392
        %v2443 = vunpack.c.l.b16 %v2393
        %v2444 = vpack.c.b16 %v2429, %v2428
        %v2445 = vpack.c.b16 %v2431, %v2430
        %v2446 = vpack.c.b16 %v2433, %v2432
        %v2447 = vpack.c.b16 %v2435, %v2434
        %v2448 = vpack.c.b16 %v2437, %v2436
        %v2449 = vpack.c.b16 %v2439, %v2438
        %v2450 = vpack.c.b16 %v2441, %v2440
        %v2451 = vpack.c.b16 %v2443, %v2442
        %v2453 = vsel %vm550, %v2444, 0
        %v2456 = vsel %vm550, %v2445, 0
        %v2459 = vsel %vm550, %v2446, 0
        %v2462 = vsel %vm550, %v2447, 0
        %v2465 = vsel %vm550, %v2448, 0
        %v2468 = vsel %vm550, %v2449, 0
        %v2471 = vsel %vm550, %v2450, 0
        %v2474 = vsel %vm550, %v2451, 0
        %v2477 = vsel %vm575, %v2411, 0
        %2479 = vmatprep.subr.bf16.mxu0 0
        %2480 = vmatpush1.bf16.msra.mxu0 0
        %2481 = vmatprep.subr.bf16.mxu0 0
        %2482 = vmatpush1.bf16.msra.mxu0 0
        %2483 = vmatprep.subr.bf16.mxu0 0
        %2484 = vmatpush1.bf16.msra.mxu0 0
        %2485 = vmatprep.subr.bf16.mxu0 0
        %2486 = vmatpush1.bf16.msra.mxu0 0
        %2487 = vmatprep.subr.bf16.mxu0 0
        %2488 = vmatpush1.bf16.msra.mxu0 0
        %2489 = vmatprep.subr.bf16.mxu0 0
        %2490 = vmatpush1.bf16.msra.mxu0 0
        %2491 = vmatprep.subr.bf16.mxu0 0
        %2492 = vmatpush1.bf16.msra.mxu0 0
        %2493 = vmatprep.subr.bf16.mxu0 0
        %2494 = vmatpush1.bf16.msra.mxu0 %v2477
        %2495 = vmatprep.subr.bf16.mxu0 0
        %2496 = vmatpush2.bf16.msra.mxu0 0
        %2497 = vmatprep.subr.bf16.mxu0 0
        %2498 = vmatpush2.bf16.msra.mxu0 0
        %2499 = vmatprep.subr.bf16.mxu0 0
        %2500 = vmatpush2.bf16.msra.mxu0 0
        %2501 = vmatprep.subr.bf16.mxu0 0
        %2502 = vmatpush2.bf16.msra.mxu0 0
        %2503 = vmatprep.subr.bf16.mxu0 0
        %2504 = vmatpush2.bf16.msra.mxu0 0
        %2505 = vmatprep.subr.bf16.mxu0 0
        %2506 = vmatpush2.bf16.msra.mxu0 0
        %2507 = vmatprep.subr.bf16.mxu0 0
        %2508 = vmatpush2.bf16.msra.mxu0 0
        %2509 = vmatprep.subr.bf16.mxu0 0
        %2510 = vmatpush2.bf16.msra.mxu0 0
        %2511 = vmatprep.mubr.bf16.mxu0 0
        %2512 = vmatmul.mubr.bf16.gmra.mxu0 %v2453
        %v2513 = vpop.f32.mrf.mxu0
        %v2514 = vadd.f32 0.0, %v2513
        %v2515 = vpop.f32.mrf.mxu0
        %v2516 = vpop.f32.mrf.mxu0
        %v2517 = vadd.f32 0.0, %v2516
        %v2518 = vpop.f32.mrf.mxu0
        %2519 = vmatprep.mubr.bf16.mxu0 0
        %2520 = vmatmul.mubr.bf16.gmra.mxu0 %v2456
        %v2521 = vpop.f32.mrf.mxu0
        %v2522 = vadd.f32 0.0, %v2521
        %v2523 = vpop.f32.mrf.mxu0
        %v2524 = vpop.f32.mrf.mxu0
        %v2525 = vadd.f32 0.0, %v2524
        %v2526 = vpop.f32.mrf.mxu0
        %2527 = vmatprep.mubr.bf16.mxu0 0
        %2528 = vmatmul.mubr.bf16.gmra.mxu0 %v2459
        %v2529 = vpop.f32.mrf.mxu0
        %v2530 = vadd.f32 0.0, %v2529
        %v2531 = vpop.f32.mrf.mxu0
        %v2532 = vpop.f32.mrf.mxu0
        %v2533 = vadd.f32 0.0, %v2532
        %v2534 = vpop.f32.mrf.mxu0
        %2535 = vmatprep.mubr.bf16.mxu0 0
        %2536 = vmatmul.mubr.bf16.gmra.mxu0 %v2462
        %v2537 = vpop.f32.mrf.mxu0
        %v2538 = vadd.f32 0.0, %v2537
        %v2539 = vpop.f32.mrf.mxu0
        %v2540 = vpop.f32.mrf.mxu0
        %v2541 = vadd.f32 0.0, %v2540
        %v2542 = vpop.f32.mrf.mxu0
        %2543 = vmatprep.mubr.bf16.mxu0 0
        %2544 = vmatmul.mubr.bf16.gmra.mxu0 %v2465
        %v2545 = vpop.f32.mrf.mxu0
        %v2546 = vadd.f32 0.0, %v2545
        %v2547 = vpop.f32.mrf.mxu0
        %v2548 = vpop.f32.mrf.mxu0
        %v2549 = vadd.f32 0.0, %v2548
        %v2550 = vpop.f32.mrf.mxu0
        %2551 = vmatprep.mubr.bf16.mxu0 0
        %2552 = vmatmul.mubr.bf16.gmra.mxu0 %v2468
        %v2553 = vpop.f32.mrf.mxu0
        %v2554 = vadd.f32 0.0, %v2553
        %v2555 = vpop.f32.mrf.mxu0
        %v2556 = vpop.f32.mrf.mxu0
        %v2557 = vadd.f32 0.0, %v2556
        %v2558 = vpop.f32.mrf.mxu0
        %2559 = vmatprep.mubr.bf16.mxu0 0
        %2560 = vmatmul.mubr.bf16.gmra.mxu0 %v2471
        %v2561 = vpop.f32.mrf.mxu0
        %v2562 = vadd.f32 0.0, %v2561
        %v2563 = vpop.f32.mrf.mxu0
        %v2564 = vpop.f32.mrf.mxu0
        %v2565 = vadd.f32 0.0, %v2564
        %v2566 = vpop.f32.mrf.mxu0
        %2567 = vmatprep.mubr.bf16.mxu0 0
        %2568 = vmatmul.mubr.bf16.gmra.mxu0 %v2474
        %v2569 = vpop.f32.mrf.mxu0
        %v2570 = vadd.f32 0.0, %v2569
        %v2571 = vpop.f32.mrf.mxu0
        %v2572 = vpop.f32.mrf.mxu0
        %v2573 = vadd.f32 0.0, %v2572
        %v2574 = vpop.f32.mrf.mxu0
        %2575 = vdwg.mxu0
        %v2576 = vadd.f32 %v2394, %v2514
        %v2577 = vadd.f32 %v2395, %v2517
        %v2578 = vadd.f32 %v2396, %v2522
        %v2579 = vadd.f32 %v2397, %v2525
        %v2580 = vadd.f32 %v2398, %v2530
        %v2581 = vadd.f32 %v2399, %v2533
        %v2582 = vadd.f32 %v2400, %v2538
        %v2583 = vadd.f32 %v2401, %v2541
        %v2584 = vadd.f32 %v2402, %v2546
        %v2585 = vadd.f32 %v2403, %v2549
        %v2586 = vadd.f32 %v2404, %v2554
        %v2587 = vadd.f32 %v2405, %v2557
        %v2588 = vadd.f32 %v2406, %v2562
        %v2589 = vadd.f32 %v2407, %v2565
        %v2590 = vadd.f32 %v2408, %v2570
        %v2591 = vadd.f32 %v2409, %v2573
        %2592 = vst [vmem:[#allocation3] sm:$0xff] %v2576
        %2593 = vst [vmem:[#allocation3 + $0x8] sm:$0xff] %v2577
        %2594 = vst [vmem:[#allocation3 + $0x10] sm:$0xff] %v2578
        %2595 = vst [vmem:[#allocation3 + $0x18] sm:$0xff] %v2579
        %2596 = vst [vmem:[#allocation3 + $0x20] sm:$0xff] %v2580
        %2597 = vst [vmem:[#allocation3 + $0x28] sm:$0xff] %v2581
        %2598 = vst [vmem:[#allocation3 + $0x30] sm:$0xff] %v2582
        %2599 = vst [vmem:[#allocation3 + $0x38] sm:$0xff] %v2583
        %2600 = vst [vmem:[#allocation3 + $0x40] sm:$0xff] %v2584
        %2601 = vst [vmem:[#allocation3 + $0x48] sm:$0xff] %v2585
        %2602 = vst [vmem:[#allocation3 + $0x50] sm:$0xff] %v2586
        %2603 = vst [vmem:[#allocation3 + $0x58] sm:$0xff] %v2587
        %2604 = vst [vmem:[#allocation3 + $0x60] sm:$0xff] %v2588
        %2605 = vst [vmem:[#allocation3 + $0x68] sm:$0xff] %v2589
        %2606 = vst [vmem:[#allocation3 + $0x70] sm:$0xff] %v2590
        %2607 = vst [vmem:[#allocation3 + $0x78] sm:$0xff] %v2591
        %v2608 = vld [vmem:[%s2377] sm:$0xf]
        %v2609 = vld [vmem:[%s2377 + $0x4] sm:$0xf]
        %v2610 = vld [vmem:[%s2377 + $0x8] sm:$0x1]
        %v2611 = vld [vmem:[%s2377 + $0xc] sm:$0xf]
        %v2612 = vld [vmem:[%s2377 + $0x10] sm:$0xf]
        %v2613 = vld [vmem:[%s2377 + $0x14] sm:$0x1]
        %v2614 = vld [vmem:[%s2377 + $0x18] sm:$0xf]
        %v2615 = vld [vmem:[%s2377 + $0x1c] sm:$0xf]
        %v2616 = vld [vmem:[%s2377 + $0x20] sm:$0x1]
        %v2617 = vld [vmem:[%s2377 + $0x24] sm:$0xf]
        %v2618 = vld [vmem:[%s2377 + $0x28] sm:$0xf]
        %v2619 = vld [vmem:[%s2377 + $0x2c] sm:$0x1]
        %v2620 = vld [vmem:[%s2377 + $0x30] sm:$0xf]
        %v2621 = vld [vmem:[%s2377 + $0x34] sm:$0xf]
        %v2622 = vld [vmem:[%s2377 + $0x38] sm:$0x1]
        %v2623 = vld [vmem:[%s2377 + $0x3c] sm:$0xf]
        %v2624 = vld [vmem:[%s2377 + $0x40] sm:$0xf]
        %v2625 = vld [vmem:[%s2377 + $0x44] sm:$0x1]
        %v2626 = vld [vmem:[%s2377 + $0x48] sm:$0xf]
        %v2627 = vld [vmem:[%s2377 + $0x4c] sm:$0xf]
        %v2628 = vld [vmem:[%s2377 + $0x50] sm:$0x1]
        %v2629 = vld [vmem:[%s2377 + $0x54] sm:$0xf]
        %v2630 = vld [vmem:[%s2377 + $0x58] sm:$0xf]
        %v2631 = vld [vmem:[%s2377 + $0x5c] sm:$0x1]
        %v2633 = vshrl.u32 %v2608, 16
        %v2635 = vrot.slane %v2633, 4
        %v2636 = vshll.u32 %v2608, 16
        %v2638 = vrot.slane %v2636, 5
        %v2639 = vor.u32 %v2635, %v2638
        %v2640 = vrot.slane %v2639, 4
        %v2642 = vshll.u32 %v2609, 16
        %v2644 = vrot.slane %v2642, 5
        %v2645 = vsel %vm734, %v2640, %v2644
        %v2646 = vshrl.u32 %v2609, 16
        %v2648 = vrot.slane %v2646, 4
        %v2649 = vor.u32 %v2648, %v2644
        %v2650 = vrot.slane %v2649, 4
        %v2652 = vshll.u32 %v2610, 16
        %v2654 = vrot.slane %v2652, 5
        %v2655 = vsel %vm734, %v2650, %v2654
        %v2657 = vshrl.u32 %v2611, 16
        %v2659 = vrot.slane %v2657, 4
        %v2660 = vshll.u32 %v2611, 16
        %v2662 = vrot.slane %v2660, 5
        %v2663 = vor.u32 %v2659, %v2662
        %v2664 = vrot.slane %v2663, 4
        %v2666 = vshll.u32 %v2612, 16
        %v2668 = vrot.slane %v2666, 5
        %v2669 = vsel %vm734, %v2664, %v2668
        %v2670 = vshrl.u32 %v2612, 16
        %v2672 = vrot.slane %v2670, 4
        %v2673 = vor.u32 %v2672, %v2668
        %v2674 = vrot.slane %v2673, 4
        %v2676 = vshll.u32 %v2613, 16
        %v2678 = vrot.slane %v2676, 5
        %v2679 = vsel %vm734, %v2674, %v2678
        %v2681 = vshrl.u32 %v2614, 16
        %v2683 = vrot.slane %v2681, 4
        %v2684 = vshll.u32 %v2614, 16
        %v2686 = vrot.slane %v2684, 5
        %v2687 = vor.u32 %v2683, %v2686
        %v2688 = vrot.slane %v2687, 4
        %v2690 = vshll.u32 %v2615, 16
        %v2692 = vrot.slane %v2690, 5
        %v2693 = vsel %vm734, %v2688, %v2692
        %v2694 = vshrl.u32 %v2615, 16
        %v2696 = vrot.slane %v2694, 4
        %v2697 = vor.u32 %v2696, %v2692
        %v2698 = vrot.slane %v2697, 4
        %v2700 = vshll.u32 %v2616, 16
        %v2702 = vrot.slane %v2700, 5
        %v2703 = vsel %vm734, %v2698, %v2702
        %v2705 = vshrl.u32 %v2617, 16
        %v2707 = vrot.slane %v2705, 4
        %v2708 = vshll.u32 %v2617, 16
        %v2710 = vrot.slane %v2708, 5
        %v2711 = vor.u32 %v2707, %v2710
        %v2712 = vrot.slane %v2711, 4
        %v2714 = vshll.u32 %v2618, 16
        %v2716 = vrot.slane %v2714, 5
        %v2717 = vsel %vm734, %v2712, %v2716
        %v2718 = vshrl.u32 %v2618, 16
        %v2720 = vrot.slane %v2718, 4
        %v2721 = vor.u32 %v2720, %v2716
        %v2722 = vrot.slane %v2721, 4
        %v2724 = vshll.u32 %v2619, 16
        %v2726 = vrot.slane %v2724, 5
        %v2727 = vsel %vm734, %v2722, %v2726
        %v2729 = vshrl.u32 %v2620, 16
        %v2731 = vrot.slane %v2729, 4
        %v2732 = vshll.u32 %v2620, 16
        %v2734 = vrot.slane %v2732, 5
        %v2735 = vor.u32 %v2731, %v2734
        %v2736 = vrot.slane %v2735, 4
        %v2738 = vshll.u32 %v2621, 16
        %v2740 = vrot.slane %v2738, 5
        %v2741 = vsel %vm734, %v2736, %v2740
        %v2742 = vshrl.u32 %v2621, 16
        %v2744 = vrot.slane %v2742, 4
        %v2745 = vor.u32 %v2744, %v2740
        %v2746 = vrot.slane %v2745, 4
        %v2748 = vshll.u32 %v2622, 16
        %v2750 = vrot.slane %v2748, 5
        %v2751 = vsel %vm734, %v2746, %v2750
        %v2753 = vshrl.u32 %v2623, 16
        %v2755 = vrot.slane %v2753, 4
        %v2756 = vshll.u32 %v2623, 16
        %v2758 = vrot.slane %v2756, 5
        %v2759 = vor.u32 %v2755, %v2758
        %v2760 = vrot.slane %v2759, 4
        %v2762 = vshll.u32 %v2624, 16
        %v2764 = vrot.slane %v2762, 5
        %v2765 = vsel %vm734, %v2760, %v2764
        %v2766 = vshrl.u32 %v2624, 16
        %v2768 = vrot.slane %v2766, 4
        %v2769 = vor.u32 %v2768, %v2764
        %v2770 = vrot.slane %v2769, 4
        %v2772 = vshll.u32 %v2625, 16
        %v2774 = vrot.slane %v2772, 5
        %v2775 = vsel %vm734, %v2770, %v2774
        %v2777 = vshrl.u32 %v2626, 16
        %v2779 = vrot.slane %v2777, 4
        %v2780 = vshll.u32 %v2626, 16
        %v2782 = vrot.slane %v2780, 5
        %v2783 = vor.u32 %v2779, %v2782
        %v2784 = vrot.slane %v2783, 4
        %v2786 = vshll.u32 %v2627, 16
        %v2788 = vrot.slane %v2786, 5
        %v2789 = vsel %vm734, %v2784, %v2788
        %v2790 = vshrl.u32 %v2627, 16
        %v2792 = vrot.slane %v2790, 4
        %v2793 = vor.u32 %v2792, %v2788
        %v2794 = vrot.slane %v2793, 4
        %v2796 = vshll.u32 %v2628, 16
        %v2798 = vrot.slane %v2796, 5
        %v2799 = vsel %vm734, %v2794, %v2798
        %v2801 = vshrl.u32 %v2629, 16
        %v2803 = vrot.slane %v2801, 4
        %v2804 = vshll.u32 %v2629, 16
        %v2806 = vrot.slane %v2804, 5
        %v2807 = vor.u32 %v2803, %v2806
        %v2808 = vrot.slane %v2807, 4
        %v2810 = vshll.u32 %v2630, 16
        %v2812 = vrot.slane %v2810, 5
        %v2813 = vsel %vm734, %v2808, %v2812
        %v2814 = vshrl.u32 %v2630, 16
        %v2816 = vrot.slane %v2814, 4
        %v2817 = vor.u32 %v2816, %v2812
        %v2818 = vrot.slane %v2817, 4
        %v2820 = vshll.u32 %v2631, 16
        %v2822 = vrot.slane %v2820, 5
        %v2823 = vsel %vm734, %v2818, %v2822
        %v2824 = vld [vmem:[#allocation3] sm:$0xff]
        %v2825 = vld [vmem:[#allocation3 + $0x8] sm:$0xff]
        %v2826 = vld [vmem:[#allocation3 + $0x10] sm:$0xff]
        %v2827 = vld [vmem:[#allocation3 + $0x18] sm:$0xff]
        %v2828 = vld [vmem:[#allocation3 + $0x20] sm:$0xff]
        %v2829 = vld [vmem:[#allocation3 + $0x28] sm:$0xff]
        %v2830 = vld [vmem:[#allocation3 + $0x30] sm:$0xff]
        %v2831 = vld [vmem:[#allocation3 + $0x38] sm:$0xff]
        %v2832 = vld [vmem:[#allocation3 + $0x40] sm:$0xff]
        %v2833 = vld [vmem:[#allocation3 + $0x48] sm:$0xff]
        %v2834 = vld [vmem:[#allocation3 + $0x50] sm:$0xff]
        %v2835 = vld [vmem:[#allocation3 + $0x58] sm:$0xff]
        %v2836 = vld [vmem:[#allocation3 + $0x60] sm:$0xff]
        %v2837 = vld [vmem:[#allocation3 + $0x68] sm:$0xff]
        %v2838 = vld [vmem:[#allocation3 + $0x70] sm:$0xff]
        %v2839 = vld [vmem:[#allocation3 + $0x78] sm:$0xff]
        %s2840 = scalar_lea.vmem %s349, 14
        %v2841 = vld [vmem:[%s2840] sm:$0x3]
        %v2842 = vunpack.c.l.b16 %v2645
        %v2843 = vunpack.c.l.b16 %v2655
        %v2844 = vunpack.c.l.b16 %v2669
        %v2845 = vunpack.c.l.b16 %v2679
        %v2846 = vunpack.c.l.b16 %v2693
        %v2847 = vunpack.c.l.b16 %v2703
        %v2848 = vunpack.c.l.b16 %v2717
        %v2849 = vunpack.c.l.b16 %v2727
        %v2850 = vunpack.c.l.b16 %v2741
        %v2851 = vunpack.c.l.b16 %v2751
        %v2852 = vunpack.c.l.b16 %v2765
        %v2853 = vunpack.c.l.b16 %v2775
        %v2854 = vunpack.c.l.b16 %v2789
        %v2855 = vunpack.c.l.b16 %v2799
        %v2856 = vunpack.c.l.b16 %v2813
        %v2857 = vunpack.c.l.b16 %v2823
        %v2858 = vpack.c.b16 %v2843, %v2842
        %v2859 = vpack.c.b16 %v2845, %v2844
        %v2860 = vpack.c.b16 %v2847, %v2846
        %v2861 = vpack.c.b16 %v2849, %v2848
        %v2862 = vpack.c.b16 %v2851, %v2850
        %v2863 = vpack.c.b16 %v2853, %v2852
        %v2864 = vpack.c.b16 %v2855, %v2854
        %v2865 = vpack.c.b16 %v2857, %v2856
        %v2867 = vsel %vm550, %v2858, 0
        %v2870 = vsel %vm550, %v2859, 0
        %v2873 = vsel %vm550, %v2860, 0
        %v2876 = vsel %vm550, %v2861, 0
        %v2879 = vsel %vm550, %v2862, 0
        %v2882 = vsel %vm550, %v2863, 0
        %v2885 = vsel %vm550, %v2864, 0
        %v2888 = vsel %vm550, %v2865, 0
        %v2891 = vsel %vm575, %v2841, 0
        %2893 = vmatprep.subr.bf16.mxu0 0
        %2894 = vmatpush1.bf16.msra.mxu0 0
        %2895 = vmatprep.subr.bf16.mxu0 0
        %2896 = vmatpush1.bf16.msra.mxu0 0
        %2897 = vmatprep.subr.bf16.mxu0 0
        %2898 = vmatpush1.bf16.msra.mxu0 0
        %2899 = vmatprep.subr.bf16.mxu0 0
        %2900 = vmatpush1.bf16.msra.mxu0 0
        %2901 = vmatprep.subr.bf16.mxu0 0
        %2902 = vmatpush1.bf16.msra.mxu0 0
        %2903 = vmatprep.subr.bf16.mxu0 0
        %2904 = vmatpush1.bf16.msra.mxu0 0
        %2905 = vmatprep.subr.bf16.mxu0 0
        %2906 = vmatpush1.bf16.msra.mxu0 0
        %2907 = vmatprep.subr.bf16.mxu0 0
        %2908 = vmatpush1.bf16.msra.mxu0 %v2891
        %2909 = vmatprep.subr.bf16.mxu0 0
        %2910 = vmatpush2.bf16.msra.mxu0 0
        %2911 = vmatprep.subr.bf16.mxu0 0
        %2912 = vmatpush2.bf16.msra.mxu0 0
        %2913 = vmatprep.subr.bf16.mxu0 0
        %2914 = vmatpush2.bf16.msra.mxu0 0
        %2915 = vmatprep.subr.bf16.mxu0 0
        %2916 = vmatpush2.bf16.msra.mxu0 0
        %2917 = vmatprep.subr.bf16.mxu0 0
        %2918 = vmatpush2.bf16.msra.mxu0 0
        %2919 = vmatprep.subr.bf16.mxu0 0
        %2920 = vmatpush2.bf16.msra.mxu0 0
        %2921 = vmatprep.subr.bf16.mxu0 0
        %2922 = vmatpush2.bf16.msra.mxu0 0
        %2923 = vmatprep.subr.bf16.mxu0 0
        %2924 = vmatpush2.bf16.msra.mxu0 0
        %2925 = vmatprep.mubr.bf16.mxu0 0
        %2926 = vmatmul.mubr.bf16.gmra.mxu0 %v2867
        %v2927 = vpop.f32.mrf.mxu0
        %v2928 = vadd.f32 0.0, %v2927
        %v2929 = vpop.f32.mrf.mxu0
        %v2930 = vpop.f32.mrf.mxu0
        %v2931 = vadd.f32 0.0, %v2930
        %v2932 = vpop.f32.mrf.mxu0
        %2933 = vmatprep.mubr.bf16.mxu0 0
        %2934 = vmatmul.mubr.bf16.gmra.mxu0 %v2870
        %v2935 = vpop.f32.mrf.mxu0
        %v2936 = vadd.f32 0.0, %v2935
        %v2937 = vpop.f32.mrf.mxu0
        %v2938 = vpop.f32.mrf.mxu0
        %v2939 = vadd.f32 0.0, %v2938
        %v2940 = vpop.f32.mrf.mxu0
        %2941 = vmatprep.mubr.bf16.mxu0 0
        %2942 = vmatmul.mubr.bf16.gmra.mxu0 %v2873
        %v2943 = vpop.f32.mrf.mxu0
        %v2944 = vadd.f32 0.0, %v2943
        %v2945 = vpop.f32.mrf.mxu0
        %v2946 = vpop.f32.mrf.mxu0
        %v2947 = vadd.f32 0.0, %v2946
        %v2948 = vpop.f32.mrf.mxu0
        %2949 = vmatprep.mubr.bf16.mxu0 0
        %2950 = vmatmul.mubr.bf16.gmra.mxu0 %v2876
        %v2951 = vpop.f32.mrf.mxu0
        %v2952 = vadd.f32 0.0, %v2951
        %v2953 = vpop.f32.mrf.mxu0
        %v2954 = vpop.f32.mrf.mxu0
        %v2955 = vadd.f32 0.0, %v2954
        %v2956 = vpop.f32.mrf.mxu0
        %2957 = vmatprep.mubr.bf16.mxu0 0
        %2958 = vmatmul.mubr.bf16.gmra.mxu0 %v2879
        %v2959 = vpop.f32.mrf.mxu0
        %v2960 = vadd.f32 0.0, %v2959
        %v2961 = vpop.f32.mrf.mxu0
        %v2962 = vpop.f32.mrf.mxu0
        %v2963 = vadd.f32 0.0, %v2962
        %v2964 = vpop.f32.mrf.mxu0
        %2965 = vmatprep.mubr.bf16.mxu0 0
        %2966 = vmatmul.mubr.bf16.gmra.mxu0 %v2882
        %v2967 = vpop.f32.mrf.mxu0
        %v2968 = vadd.f32 0.0, %v2967
        %v2969 = vpop.f32.mrf.mxu0
        %v2970 = vpop.f32.mrf.mxu0
        %v2971 = vadd.f32 0.0, %v2970
        %v2972 = vpop.f32.mrf.mxu0
        %2973 = vmatprep.mubr.bf16.mxu0 0
        %2974 = vmatmul.mubr.bf16.gmra.mxu0 %v2885
        %v2975 = vpop.f32.mrf.mxu0
        %v2976 = vadd.f32 0.0, %v2975
        %v2977 = vpop.f32.mrf.mxu0
        %v2978 = vpop.f32.mrf.mxu0
        %v2979 = vadd.f32 0.0, %v2978
        %v2980 = vpop.f32.mrf.mxu0
        %2981 = vmatprep.mubr.bf16.mxu0 0
        %2982 = vmatmul.mubr.bf16.gmra.mxu0 %v2888
        %v2983 = vpop.f32.mrf.mxu0
        %v2984 = vadd.f32 0.0, %v2983
        %v2985 = vpop.f32.mrf.mxu0
        %v2986 = vpop.f32.mrf.mxu0
        %v2987 = vadd.f32 0.0, %v2986
        %v2988 = vpop.f32.mrf.mxu0
        %2989 = vdwg.mxu0
        %v2990 = vadd.f32 %v2824, %v2928
        %v2991 = vadd.f32 %v2825, %v2931
        %v2992 = vadd.f32 %v2826, %v2936
        %v2993 = vadd.f32 %v2827, %v2939
        %v2994 = vadd.f32 %v2828, %v2944
        %v2995 = vadd.f32 %v2829, %v2947
        %v2996 = vadd.f32 %v2830, %v2952
        %v2997 = vadd.f32 %v2831, %v2955
        %v2998 = vadd.f32 %v2832, %v2960
        %v2999 = vadd.f32 %v2833, %v2963
        %v3000 = vadd.f32 %v2834, %v2968
        %v3001 = vadd.f32 %v2835, %v2971
        %v3002 = vadd.f32 %v2836, %v2976
        %v3003 = vadd.f32 %v2837, %v2979
        %v3004 = vadd.f32 %v2838, %v2984
        %v3005 = vadd.f32 %v2839, %v2987
        %3006 = vst [vmem:[#allocation3] sm:$0xff] %v2990
        %3007 = vst [vmem:[#allocation3 + $0x8] sm:$0xff] %v2991
        %3008 = vst [vmem:[#allocation3 + $0x10] sm:$0xff] %v2992
        %3009 = vst [vmem:[#allocation3 + $0x18] sm:$0xff] %v2993
        %3010 = vst [vmem:[#allocation3 + $0x20] sm:$0xff] %v2994
        %3011 = vst [vmem:[#allocation3 + $0x28] sm:$0xff] %v2995
        %3012 = vst [vmem:[#allocation3 + $0x30] sm:$0xff] %v2996
        %3013 = vst [vmem:[#allocation3 + $0x38] sm:$0xff] %v2997
        %3014 = vst [vmem:[#allocation3 + $0x40] sm:$0xff] %v2998
        %3015 = vst [vmem:[#allocation3 + $0x48] sm:$0xff] %v2999
        %3016 = vst [vmem:[#allocation3 + $0x50] sm:$0xff] %v3000
        %3017 = vst [vmem:[#allocation3 + $0x58] sm:$0xff] %v3001
        %3018 = vst [vmem:[#allocation3 + $0x60] sm:$0xff] %v3002
        %3019 = vst [vmem:[#allocation3 + $0x68] sm:$0xff] %v3003
        %3020 = vst [vmem:[#allocation3 + $0x70] sm:$0xff] %v3004
        %3021 = vst [vmem:[#allocation3 + $0x78] sm:$0xff] %v3005
        %v3022 = vld [vmem:[%s2377] sm:$0xe]
        %v3023 = vld [vmem:[%s2377 + $0x4] sm:$0xf]
        %v3024 = vld [vmem:[%s2377 + $0x8] sm:$0x1]
        %v3025 = vld [vmem:[%s2377 + $0xc] sm:$0xe]
        %v3026 = vld [vmem:[%s2377 + $0x10] sm:$0xf]
        %v3027 = vld [vmem:[%s2377 + $0x14] sm:$0x1]
        %v3028 = vld [vmem:[%s2377 + $0x18] sm:$0xe]
        %v3029 = vld [vmem:[%s2377 + $0x1c] sm:$0xf]
        %v3030 = vld [vmem:[%s2377 + $0x20] sm:$0x1]
        %v3031 = vld [vmem:[%s2377 + $0x24] sm:$0xe]
        %v3032 = vld [vmem:[%s2377 + $0x28] sm:$0xf]
        %v3033 = vld [vmem:[%s2377 + $0x2c] sm:$0x1]
        %v3034 = vld [vmem:[%s2377 + $0x30] sm:$0xe]
        %v3035 = vld [vmem:[%s2377 + $0x34] sm:$0xf]
        %v3036 = vld [vmem:[%s2377 + $0x38] sm:$0x1]
        %v3037 = vld [vmem:[%s2377 + $0x3c] sm:$0xe]
        %v3038 = vld [vmem:[%s2377 + $0x40] sm:$0xf]
        %v3039 = vld [vmem:[%s2377 + $0x44] sm:$0x1]
        %v3040 = vld [vmem:[%s2377 + $0x48] sm:$0xe]
        %v3041 = vld [vmem:[%s2377 + $0x4c] sm:$0xf]
        %v3042 = vld [vmem:[%s2377 + $0x50] sm:$0x1]
        %v3043 = vld [vmem:[%s2377 + $0x54] sm:$0xe]
        %v3044 = vld [vmem:[%s2377 + $0x58] sm:$0xf]
        %v3045 = vld [vmem:[%s2377 + $0x5c] sm:$0x1]
        %v3070 = vrot.slane %v3022, 5
        %v3071 = vrot.slane %v3070, 4
        %v3072 = vrot.slane %v3023, 5
        %v3073 = vsel %vm1175, %v3071, %v3072
        %v3074 = vrot.slane %v3072, 4
        %v3075 = vrot.slane %v3024, 5
        %v3076 = vsel %vm1175, %v3074, %v3075
        %v3077 = vrot.slane %v3025, 5
        %v3078 = vrot.slane %v3077, 4
        %v3079 = vrot.slane %v3026, 5
        %v3080 = vsel %vm1175, %v3078, %v3079
        %v3081 = vrot.slane %v3079, 4
        %v3082 = vrot.slane %v3027, 5
        %v3083 = vsel %vm1175, %v3081, %v3082
        %v3084 = vrot.slane %v3028, 5
        %v3085 = vrot.slane %v3084, 4
        %v3086 = vrot.slane %v3029, 5
        %v3087 = vsel %vm1175, %v3085, %v3086
        %v3088 = vrot.slane %v3086, 4
        %v3089 = vrot.slane %v3030, 5
        %v3090 = vsel %vm1175, %v3088, %v3089
        %v3091 = vrot.slane %v3031, 5
        %v3092 = vrot.slane %v3091, 4
        %v3093 = vrot.slane %v3032, 5
        %v3094 = vsel %vm1175, %v3092, %v3093
        %v3095 = vrot.slane %v3093, 4
        %v3096 = vrot.slane %v3033, 5
        %v3097 = vsel %vm1175, %v3095, %v3096
        %v3098 = vrot.slane %v3034, 5
        %v3099 = vrot.slane %v3098, 4
        %v3100 = vrot.slane %v3035, 5
        %v3101 = vsel %vm1175, %v3099, %v3100
        %v3102 = vrot.slane %v3100, 4
        %v3103 = vrot.slane %v3036, 5
        %v3104 = vsel %vm1175, %v3102, %v3103
        %v3105 = vrot.slane %v3037, 5
        %v3106 = vrot.slane %v3105, 4
        %v3107 = vrot.slane %v3038, 5
        %v3108 = vsel %vm1175, %v3106, %v3107
        %v3109 = vrot.slane %v3107, 4
        %v3110 = vrot.slane %v3039, 5
        %v3111 = vsel %vm1175, %v3109, %v3110
        %v3112 = vrot.slane %v3040, 5
        %v3113 = vrot.slane %v3112, 4
        %v3114 = vrot.slane %v3041, 5
        %v3115 = vsel %vm1175, %v3113, %v3114
        %v3116 = vrot.slane %v3114, 4
        %v3117 = vrot.slane %v3042, 5
        %v3118 = vsel %vm1175, %v3116, %v3117
        %v3119 = vrot.slane %v3043, 5
        %v3120 = vrot.slane %v3119, 4
        %v3121 = vrot.slane %v3044, 5
        %v3122 = vsel %vm1175, %v3120, %v3121
        %v3123 = vrot.slane %v3121, 4
        %v3124 = vrot.slane %v3045, 5
        %v3125 = vsel %vm1175, %v3123, %v3124
        %v3126 = vld [vmem:[#allocation3] sm:$0xff]
        %v3127 = vld [vmem:[#allocation3 + $0x8] sm:$0xff]
        %v3128 = vld [vmem:[#allocation3 + $0x10] sm:$0xff]
        %v3129 = vld [vmem:[#allocation3 + $0x18] sm:$0xff]
        %v3130 = vld [vmem:[#allocation3 + $0x20] sm:$0xff]
        %v3131 = vld [vmem:[#allocation3 + $0x28] sm:$0xff]
        %v3132 = vld [vmem:[#allocation3 + $0x30] sm:$0xff]
        %v3133 = vld [vmem:[#allocation3 + $0x38] sm:$0xff]
        %v3134 = vld [vmem:[#allocation3 + $0x40] sm:$0xff]
        %v3135 = vld [vmem:[#allocation3 + $0x48] sm:$0xff]
        %v3136 = vld [vmem:[#allocation3 + $0x50] sm:$0xff]
        %v3137 = vld [vmem:[#allocation3 + $0x58] sm:$0xff]
        %v3138 = vld [vmem:[#allocation3 + $0x60] sm:$0xff]
        %v3139 = vld [vmem:[#allocation3 + $0x68] sm:$0xff]
        %v3140 = vld [vmem:[#allocation3 + $0x70] sm:$0xff]
        %v3141 = vld [vmem:[#allocation3 + $0x78] sm:$0xff]
        %s3142 = scalar_lea.vmem %s349, 16
        %v3143 = vld [vmem:[%s3142] sm:$0x3]
        %v3144 = vunpack.c.l.b16 %v3073
        %v3145 = vunpack.c.l.b16 %v3076
        %v3146 = vunpack.c.l.b16 %v3080
        %v3147 = vunpack.c.l.b16 %v3083
        %v3148 = vunpack.c.l.b16 %v3087
        %v3149 = vunpack.c.l.b16 %v3090
        %v3150 = vunpack.c.l.b16 %v3094
        %v3151 = vunpack.c.l.b16 %v3097
        %v3152 = vunpack.c.l.b16 %v3101
        %v3153 = vunpack.c.l.b16 %v3104
        %v3154 = vunpack.c.l.b16 %v3108
        %v3155 = vunpack.c.l.b16 %v3111
        %v3156 = vunpack.c.l.b16 %v3115
        %v3157 = vunpack.c.l.b16 %v3118
        %v3158 = vunpack.c.l.b16 %v3122
        %v3159 = vunpack.c.l.b16 %v3125
        %v3160 = vpack.c.b16 %v3145, %v3144
        %v3161 = vpack.c.b16 %v3147, %v3146
        %v3162 = vpack.c.b16 %v3149, %v3148
        %v3163 = vpack.c.b16 %v3151, %v3150
        %v3164 = vpack.c.b16 %v3153, %v3152
        %v3165 = vpack.c.b16 %v3155, %v3154
        %v3166 = vpack.c.b16 %v3157, %v3156
        %v3167 = vpack.c.b16 %v3159, %v3158
        %v3169 = vsel %vm550, %v3160, 0
        %v3172 = vsel %vm550, %v3161, 0
        %v3175 = vsel %vm550, %v3162, 0
        %v3178 = vsel %vm550, %v3163, 0
        %v3181 = vsel %vm550, %v3164, 0
        %v3184 = vsel %vm550, %v3165, 0
        %v3187 = vsel %vm550, %v3166, 0
        %v3190 = vsel %vm550, %v3167, 0
        %v3193 = vsel %vm575, %v3143, 0
        %3195 = vmatprep.subr.bf16.mxu0 0
        %3196 = vmatpush1.bf16.msra.mxu0 0
        %3197 = vmatprep.subr.bf16.mxu0 0
        %3198 = vmatpush1.bf16.msra.mxu0 0
        %3199 = vmatprep.subr.bf16.mxu0 0
        %3200 = vmatpush1.bf16.msra.mxu0 0
        %3201 = vmatprep.subr.bf16.mxu0 0
        %3202 = vmatpush1.bf16.msra.mxu0 0
        %3203 = vmatprep.subr.bf16.mxu0 0
        %3204 = vmatpush1.bf16.msra.mxu0 0
        %3205 = vmatprep.subr.bf16.mxu0 0
        %3206 = vmatpush1.bf16.msra.mxu0 0
        %3207 = vmatprep.subr.bf16.mxu0 0
        %3208 = vmatpush1.bf16.msra.mxu0 0
        %3209 = vmatprep.subr.bf16.mxu0 0
        %3210 = vmatpush1.bf16.msra.mxu0 %v3193
        %3211 = vmatprep.subr.bf16.mxu0 0
        %3212 = vmatpush2.bf16.msra.mxu0 0
        %3213 = vmatprep.subr.bf16.mxu0 0
        %3214 = vmatpush2.bf16.msra.mxu0 0
        %3215 = vmatprep.subr.bf16.mxu0 0
        %3216 = vmatpush2.bf16.msra.mxu0 0
        %3217 = vmatprep.subr.bf16.mxu0 0
        %3218 = vmatpush2.bf16.msra.mxu0 0
        %3219 = vmatprep.subr.bf16.mxu0 0
        %3220 = vmatpush2.bf16.msra.mxu0 0
        %3221 = vmatprep.subr.bf16.mxu0 0
        %3222 = vmatpush2.bf16.msra.mxu0 0
        %3223 = vmatprep.subr.bf16.mxu0 0
        %3224 = vmatpush2.bf16.msra.mxu0 0
        %3225 = vmatprep.subr.bf16.mxu0 0
        %3226 = vmatpush2.bf16.msra.mxu0 0
        %3227 = vmatprep.mubr.bf16.mxu0 0
        %3228 = vmatmul.mubr.bf16.gmra.mxu0 %v3169
        %v3229 = vpop.f32.mrf.mxu0
        %v3230 = vadd.f32 0.0, %v3229
        %v3231 = vpop.f32.mrf.mxu0
        %v3232 = vpop.f32.mrf.mxu0
        %v3233 = vadd.f32 0.0, %v3232
        %v3234 = vpop.f32.mrf.mxu0
        %3235 = vmatprep.mubr.bf16.mxu0 0
        %3236 = vmatmul.mubr.bf16.gmra.mxu0 %v3172
        %v3237 = vpop.f32.mrf.mxu0
        %v3238 = vadd.f32 0.0, %v3237
        %v3239 = vpop.f32.mrf.mxu0
        %v3240 = vpop.f32.mrf.mxu0
        %v3241 = vadd.f32 0.0, %v3240
        %v3242 = vpop.f32.mrf.mxu0
        %3243 = vmatprep.mubr.bf16.mxu0 0
        %3244 = vmatmul.mubr.bf16.gmra.mxu0 %v3175
        %v3245 = vpop.f32.mrf.mxu0
        %v3246 = vadd.f32 0.0, %v3245
        %v3247 = vpop.f32.mrf.mxu0
        %v3248 = vpop.f32.mrf.mxu0
        %v3249 = vadd.f32 0.0, %v3248
        %v3250 = vpop.f32.mrf.mxu0
        %3251 = vmatprep.mubr.bf16.mxu0 0
        %3252 = vmatmul.mubr.bf16.gmra.mxu0 %v3178
        %v3253 = vpop.f32.mrf.mxu0
        %v3254 = vadd.f32 0.0, %v3253
        %v3255 = vpop.f32.mrf.mxu0
        %v3256 = vpop.f32.mrf.mxu0
        %v3257 = vadd.f32 0.0, %v3256
        %v3258 = vpop.f32.mrf.mxu0
        %3259 = vmatprep.mubr.bf16.mxu0 0
        %3260 = vmatmul.mubr.bf16.gmra.mxu0 %v3181
        %v3261 = vpop.f32.mrf.mxu0
        %v3262 = vadd.f32 0.0, %v3261
        %v3263 = vpop.f32.mrf.mxu0
        %v3264 = vpop.f32.mrf.mxu0
        %v3265 = vadd.f32 0.0, %v3264
        %v3266 = vpop.f32.mrf.mxu0
        %3267 = vmatprep.mubr.bf16.mxu0 0
        %3268 = vmatmul.mubr.bf16.gmra.mxu0 %v3184
        %v3269 = vpop.f32.mrf.mxu0
        %v3270 = vadd.f32 0.0, %v3269
        %v3271 = vpop.f32.mrf.mxu0
        %v3272 = vpop.f32.mrf.mxu0
        %v3273 = vadd.f32 0.0, %v3272
        %v3274 = vpop.f32.mrf.mxu0
        %3275 = vmatprep.mubr.bf16.mxu0 0
        %3276 = vmatmul.mubr.bf16.gmra.mxu0 %v3187
        %v3277 = vpop.f32.mrf.mxu0
        %v3278 = vadd.f32 0.0, %v3277
        %v3279 = vpop.f32.mrf.mxu0
        %v3280 = vpop.f32.mrf.mxu0
        %v3281 = vadd.f32 0.0, %v3280
        %v3282 = vpop.f32.mrf.mxu0
        %3283 = vmatprep.mubr.bf16.mxu0 0
        %3284 = vmatmul.mubr.bf16.gmra.mxu0 %v3190
        %v3285 = vpop.f32.mrf.mxu0
        %v3286 = vadd.f32 0.0, %v3285
        %v3287 = vpop.f32.mrf.mxu0
        %v3288 = vpop.f32.mrf.mxu0
        %v3289 = vadd.f32 0.0, %v3288
        %v3290 = vpop.f32.mrf.mxu0
        %3291 = vdwg.mxu0
        %v3292 = vadd.f32 %v3126, %v3230
        %v3293 = vadd.f32 %v3127, %v3233
        %v3294 = vadd.f32 %v3128, %v3238
        %v3295 = vadd.f32 %v3129, %v3241
        %v3296 = vadd.f32 %v3130, %v3246
        %v3297 = vadd.f32 %v3131, %v3249
        %v3298 = vadd.f32 %v3132, %v3254
        %v3299 = vadd.f32 %v3133, %v3257
        %v3300 = vadd.f32 %v3134, %v3262
        %v3301 = vadd.f32 %v3135, %v3265
        %v3302 = vadd.f32 %v3136, %v3270
        %v3303 = vadd.f32 %v3137, %v3273
        %v3304 = vadd.f32 %v3138, %v3278
        %v3305 = vadd.f32 %v3139, %v3281
        %v3306 = vadd.f32 %v3140, %v3286
        %v3307 = vadd.f32 %v3141, %v3289
        %3308 = vst [vmem:[#allocation3] sm:$0xff] %v3292
        %3309 = vst [vmem:[#allocation3 + $0x8] sm:$0xff] %v3293
        %3310 = vst [vmem:[#allocation3 + $0x10] sm:$0xff] %v3294
        %3311 = vst [vmem:[#allocation3 + $0x18] sm:$0xff] %v3295
        %3312 = vst [vmem:[#allocation3 + $0x20] sm:$0xff] %v3296
        %3313 = vst [vmem:[#allocation3 + $0x28] sm:$0xff] %v3297
        %3314 = vst [vmem:[#allocation3 + $0x30] sm:$0xff] %v3298
        %3315 = vst [vmem:[#allocation3 + $0x38] sm:$0xff] %v3299
        %3316 = vst [vmem:[#allocation3 + $0x40] sm:$0xff] %v3300
        %3317 = vst [vmem:[#allocation3 + $0x48] sm:$0xff] %v3301
        %3318 = vst [vmem:[#allocation3 + $0x50] sm:$0xff] %v3302
        %3319 = vst [vmem:[#allocation3 + $0x58] sm:$0xff] %v3303
        %3320 = vst [vmem:[#allocation3 + $0x60] sm:$0xff] %v3304
        %3321 = vst [vmem:[#allocation3 + $0x68] sm:$0xff] %v3305
        %3322 = vst [vmem:[#allocation3 + $0x70] sm:$0xff] %v3306
        %3323 = vst [vmem:[#allocation3 + $0x78] sm:$0xff] %v3307
        %v3324 = vld [vmem:[#allocation3] sm:$0xff]
        %v3325 = vld [vmem:[#allocation3 + $0x8] sm:$0xff]
        %v3326 = vld [vmem:[#allocation3 + $0x10] sm:$0xff]
        %v3327 = vld [vmem:[#allocation3 + $0x18] sm:$0xff]
        %v3328 = vld [vmem:[#allocation3 + $0x20] sm:$0xff]
        %v3329 = vld [vmem:[#allocation3 + $0x28] sm:$0xff]
        %v3330 = vld [vmem:[#allocation3 + $0x30] sm:$0xff]
        %v3331 = vld [vmem:[#allocation3 + $0x38] sm:$0xff]
        %v3332 = vld [vmem:[#allocation3 + $0x40] sm:$0xff]
        %v3333 = vld [vmem:[#allocation3 + $0x48] sm:$0xff]
        %v3334 = vld [vmem:[#allocation3 + $0x50] sm:$0xff]
        %v3335 = vld [vmem:[#allocation3 + $0x58] sm:$0xff]
        %v3336 = vld [vmem:[#allocation3 + $0x60] sm:$0xff]
        %v3337 = vld [vmem:[#allocation3 + $0x68] sm:$0xff]
        %v3338 = vld [vmem:[#allocation3 + $0x70] sm:$0xff]
        %v3339 = vld [vmem:[#allocation3 + $0x78] sm:$0xff]
        %v3340 = vld [vmem:[%s352] sm:$0x1]
        %v3342 = vlaneseq
        %v3343 = vshrl.u32 %v3342, 7
        %v3344 = vsub.s32 0, %v3343
        %v3345 = vrot.slane %v3340, %v3344
        %v3347 = vmul.f32 %v3324, %v3345
        %v3348 = vmul.f32 %v3325, %v3345
        %v3349 = vmul.f32 %v3326, %v3345
        %v3350 = vmul.f32 %v3327, %v3345
        %v3351 = vmul.f32 %v3328, %v3345
        %v3352 = vmul.f32 %v3329, %v3345
        %v3353 = vmul.f32 %v3330, %v3345
        %v3354 = vmul.f32 %v3331, %v3345
        %v3355 = vmul.f32 %v3332, %v3345
        %v3356 = vmul.f32 %v3333, %v3345
        %v3357 = vmul.f32 %v3334, %v3345
        %v3358 = vmul.f32 %v3335, %v3345
        %v3359 = vmul.f32 %v3336, %v3345
        %v3360 = vmul.f32 %v3337, %v3345
        %v3361 = vmul.f32 %v3338, %v3345
        %v3362 = vmul.f32 %v3339, %v3345
        %v3363 = vld [vmem:[%s355] sm:$0x1]
        %v3365 = vlaneseq
        %v3366 = vshrl.u32 %v3365, 7
        %v3367 = vsub.s32 0, %v3366
        %v3368 = vrot.slane %v3363, %v3367
        %v3370 = vadd.f32 %v3347, %v3368
        %v3371 = vadd.f32 %v3348, %v3368
        %v3372 = vadd.f32 %v3349, %v3368
        %v3373 = vadd.f32 %v3350, %v3368
        %v3374 = vadd.f32 %v3351, %v3368
        %v3375 = vadd.f32 %v3352, %v3368
        %v3376 = vadd.f32 %v3353, %v3368
        %v3377 = vadd.f32 %v3354, %v3368
        %v3378 = vadd.f32 %v3355, %v3368
        %v3379 = vadd.f32 %v3356, %v3368
        %v3380 = vadd.f32 %v3357, %v3368
        %v3381 = vadd.f32 %v3358, %v3368
        %v3382 = vadd.f32 %v3359, %v3368
        %v3383 = vadd.f32 %v3360, %v3368
        %v3384 = vadd.f32 %v3361, %v3368
        %v3385 = vadd.f32 %v3362, %v3368
        %vm3386 = vcmp.gt.f32.partialorder %v3370, 0.0
        %vm3387 = vcmp.gt.f32.partialorder %v3371, 0.0
        %vm3388 = vcmp.gt.f32.partialorder %v3372, 0.0
        %vm3389 = vcmp.gt.f32.partialorder %v3373, 0.0
        %vm3390 = vcmp.gt.f32.partialorder %v3374, 0.0
        %vm3391 = vcmp.gt.f32.partialorder %v3375, 0.0
        %vm3392 = vcmp.gt.f32.partialorder %v3376, 0.0
        %vm3393 = vcmp.gt.f32.partialorder %v3377, 0.0
        %vm3394 = vcmp.gt.f32.partialorder %v3378, 0.0
        %vm3395 = vcmp.gt.f32.partialorder %v3379, 0.0
        %vm3396 = vcmp.gt.f32.partialorder %v3380, 0.0
        %vm3397 = vcmp.gt.f32.partialorder %v3381, 0.0
        %vm3398 = vcmp.gt.f32.partialorder %v3382, 0.0
        %vm3399 = vcmp.gt.f32.partialorder %v3383, 0.0
        %vm3400 = vcmp.gt.f32.partialorder %v3384, 0.0
        %vm3401 = vcmp.gt.f32.partialorder %v3385, 0.0
        %v3402 = vmul.f32 %v3370, 0.01
        %v3403 = vmul.f32 %v3371, 0.01
        %v3404 = vmul.f32 %v3372, 0.01
        %v3405 = vmul.f32 %v3373, 0.01
        %v3406 = vmul.f32 %v3374, 0.01
        %v3407 = vmul.f32 %v3375, 0.01
        %v3408 = vmul.f32 %v3376, 0.01
        %v3409 = vmul.f32 %v3377, 0.01
        %v3410 = vmul.f32 %v3378, 0.01
        %v3411 = vmul.f32 %v3379, 0.01
        %v3412 = vmul.f32 %v3380, 0.01
        %v3413 = vmul.f32 %v3381, 0.01
        %v3414 = vmul.f32 %v3382, 0.01
        %v3415 = vmul.f32 %v3383, 0.01
        %v3416 = vmul.f32 %v3384, 0.01
        %v3417 = vmul.f32 %v3385, 0.01
        %v3418 = vsel %vm3386, %v3370, %v3402
        %v3419 = vsel %vm3387, %v3371, %v3403
        %v3420 = vsel %vm3388, %v3372, %v3404
        %v3421 = vsel %vm3389, %v3373, %v3405
        %v3422 = vsel %vm3390, %v3374, %v3406
        %v3423 = vsel %vm3391, %v3375, %v3407
        %v3424 = vsel %vm3392, %v3376, %v3408
        %v3425 = vsel %vm3393, %v3377, %v3409
        %v3426 = vsel %vm3394, %v3378, %v3410
        %v3427 = vsel %vm3395, %v3379, %v3411
        %v3428 = vsel %vm3396, %v3380, %v3412
        %v3429 = vsel %vm3397, %v3381, %v3413
        %v3430 = vsel %vm3398, %v3382, %v3414
        %v3431 = vsel %vm3399, %v3383, %v3415
        %v3432 = vsel %vm3400, %v3384, %v3416
        %v3433 = vsel %vm3401, %v3385, %v3417
        %3434 = vst [vmem:[%s321] sm:$0xff] %v3418
        %3435 = vst [vmem:[%s321 + $0x8] sm:$0xff] %v3419
        %3436 = vst [vmem:[%s321 + $0x10] sm:$0xff] %v3420
        %3437 = vst [vmem:[%s321 + $0x18] sm:$0xff] %v3421
        %3438 = vst [vmem:[%s321 + $0x20] sm:$0xff] %v3422
        %3439 = vst [vmem:[%s321 + $0x28] sm:$0xff] %v3423
        %3440 = vst [vmem:[%s321 + $0x30] sm:$0xff] %v3424
        %3441 = vst [vmem:[%s321 + $0x38] sm:$0xff] %v3425
        %3442 = vst [vmem:[%s321 + $0x40] sm:$0xff] %v3426
        %3443 = vst [vmem:[%s321 + $0x48] sm:$0xff] %v3427
        %3444 = vst [vmem:[%s321 + $0x50] sm:$0xff] %v3428
        %3445 = vst [vmem:[%s321 + $0x58] sm:$0xff] %v3429
        %3446 = vst [vmem:[%s321 + $0x60] sm:$0xff] %v3430
        %3447 = vst [vmem:[%s321 + $0x68] sm:$0xff] %v3431
        %3448 = vst [vmem:[%s321 + $0x70] sm:$0xff] %v3432
        %3449 = vst [vmem:[%s321 + $0x78] sm:$0xff] %v3433
        %s3450 = sand.u32 %s186, 1
        %s3451 = scalar_lea.sflag [#allocation5], %s3450
        %s3452 = sand.u32 %s186, 1
        %s3453 = smul.addr %s3452, 128
        %s3454 = scalar_lea.vmem [#allocation4], %s3453
        // Predicated region
        $region45: #{tpu_custom_call.1} parent=39 // pred_check
          %p3455 = pneg %p196
        $region46: #{tpu_custom_call.1} parent=39 // pred_check_branch
          %3457 = sbr.rel (%p3455) target = $region48
        $region47: #{tpu_custom_call.1} parent=39 // pred_region
          %s3458 = smul.u32 8, %s25
          %s3460 = ssub.s32 2048, 2048
          %3461 = vsyncadd %s3451, %s3460
          %s3462 = smul.addr %s3458, 2
          %s3463 = sadd.s32 %s26, %s3462
          %s3464 = smul.addr %s24, 32
          %s3465 = sadd.s32 %s3463, %s3464
          %s3466 = smul.addr %s3465, 128
          %s3467 = scalar_lea.hbm %s5, %s3466
          %s3468 = sshll.u32 %s3454, 4
          %s3469 = int_to_ptr.vmem [resolvable:$true] %s3468
          %3474 = dma.vmem_to_hbm [thread:$0]  %s3469, 2048, %s3467, %s3451, 128, 128, 8
        $region48: #{tpu_custom_call.1} parent=39 // pred_fallthru
          _
      $region40: #{tpu_custom_call.1} parent=5 // pred_fallthru
        _
      %p3475 = scmp.le.s32.totalorder 2, %s14
      // Predicated region
      $region49: #{tpu_custom_call.1} parent=5 // pred_check
        %p3476 = pneg %p3475
      $region50: #{tpu_custom_call.1} parent=5 // pred_check_branch
        %3478 = sbr.rel (%p3476) target = $region52
      $region51: #{tpu_custom_call.1} parent=5 // pred_region
        %s3479 = ssub.s32 %s14, 2
        // Predicated region
        $region53: #{tpu_custom_call.1} parent=51 // pred_check
          %p3480 = pneg %p202
        $region54: #{tpu_custom_call.1} parent=51 // pred_check_branch
          %3482 = sbr.rel (%p3480) target = $region56
        $region55: #{tpu_custom_call.1} parent=51 // pred_region
          %s3483 = sand.u32 %s187, 1
          %s3484 = scalar_lea.sflag [#allocation5], %s3483
          %s3485 = sand.u32 %s187, 1
          %s3486 = smul.addr %s3485, 128
          %s3487 = scalar_lea.vmem [#allocation4], %s3486
          %3488 = dma.done %s3484, 2048
        $region56: #{tpu_custom_call.1} parent=51 // pred_fallthru
          _
      $region52: #{tpu_custom_call.1} parent=5 // pred_fallthru
        _
    $region6: #{tpu_custom_call.1} parent=1 // loop_footer
      %s18 = sadd.s32 1, %s14
    $region7: #{tpu_custom_call.1} parent=1 // loop_footer_branch
      %13 = sbr.rel target = $region3
    $region8: #{tpu_custom_call.1} parent=1 // loop_exit
      _
    %3489 = vsyncpa [#allocation5], 1
    %s3490 = scalar_lea.sflag [#allocation5], 1
    %3491 = vsyncpa %s3490, 1

</llo_original>
